<compile_context>
chip_gen: v7x
topology: tpu7x:2x2x1
jax: 0.10.0
libtpu: 0.0.40
codegen_flags: <defaults>
</compile_context>

<pallas_src>
import functools
import math

import numpy as np

import jax
import jax.numpy as jnp
from jax.experimental import pallas as pl
from jax.experimental.pallas import tpu as pltpu

FREQ_EMB_SIZE = 256          # frequency_embedding_size (even -> no zero-pad branch)
HIDDEN_SIZE = 32             # hidden_size used in the demo below
MAX_PERIOD = 10000.0
HALF = FREQ_EMB_SIZE // 2    # 128: each split dot is exactly one K=128 MXU pass

BLOCK_N_CAP = 4096           # max timesteps per grid step (VMEM-safe on v5e/v6e/v7x)

# Compile-time constant frequencies exp(-ln(max_period) * i / half), feature-major.
_FREQS_NP = np.exp(
    -math.log(MAX_PERIOD) * np.arange(HALF, dtype=np.float32) / HALF
).reshape(HALF, 1).astype(np.float32)


def _round_up(x, m):
    return ((x + m - 1) // m) * m


def _timestep_embedder_kernel(t_ref, freqs_ref, w1c_ref, w1s_ref, b1_ref,
                              w2_ref, b2_ref, out_ref):
    # Feature-major layout: (feature, batch) everywhere, so the t load and the
    # output store are lane-dense (batch lives on the 128-lane axis).
    t = t_ref[...]                               # (1, BN) f32
    freqs = freqs_ref[...]                       # (HALF, 1) f32 constant
    args = freqs * t                             # (HALF, BN)

    # Split first matmul: h = W1_cos^T @ cos(args) + W1_sin^T @ sin(args) + b1.
    # Sequenced so cos(args) is consumed by its dot before sin(args) exists,
    # keeping peak temporaries to ~2 * (HALF, BN) instead of 3.
    c = jnp.cos(args)
    h = jnp.dot(w1c_ref[...], c, preferred_element_type=jnp.float32)
    s = jnp.sin(args)
    h = h + jnp.dot(w1s_ref[...], s, preferred_element_type=jnp.float32)
    h = h + b1_ref[...]                          # (H, BN) + (H, 1)

    h = h * jax.nn.sigmoid(h)                    # SiLU (f32: v5e has no bf16 VPU/EUP)

    y = jnp.dot(w2_ref[...], h, preferred_element_type=jnp.float32) + b2_ref[...]
    out_ref[...] = y.astype(out_ref.dtype)       # lane-dense (H, BN) store


@functools.partial(jax.jit, static_argnames=("block_n_cap",))
def timestep_embedder(t, w1, b1, w2, b2, *, block_n_cap=BLOCK_N_CAP):
    """t: (N,) f32. w1: (256, H), b1: (H,), w2: (H, H), b2: (H,) with weights
    stored as (in_features, out_features). Returns (N, H) f32."""
    n = t.shape[0]
    hidden = w1.shape[1]

    # Adaptive lane-dense block: typical DiT batches (N <= cap) run in exactly
    # one grid step; larger N uses a few fat steps (>= 2, so v7x's "parallel"
    # batch axis can be sharded across both TensorCores).
    n128 = max(128, _round_up(n, 128))
    if n128 <= block_n_cap:
        block_n = n128
        n_pad = n128
    else:
        block_n = block_n_cap
        n_pad = _round_up(n, block_n_cap)

    t32 = t.astype(jnp.float32)
    if n_pad != n:
        # Padding timesteps are zeros; their (harmless) outputs are sliced off.
        t32 = jnp.pad(t32, (0, n_pad - n))
    t_row = t32.reshape(1, n_pad)                # lane-dense batch row

    # Feature-major (transposed) parameters so the kernel computes W^T @ x.
    w1c = w1[:HALF, :].T                          # (H, 128)  cos half of W1
    w1s = w1[HALF:, :].T                          # (H, 128)  sin half of W1
    w2t = w2.T                                    # (H, H)
    b1c = b1.reshape(hidden, 1)
    b2c = b2.reshape(hidden, 1)
    freqs = jnp.asarray(_FREQS_NP)                # constant-folded under jit

    const = lambda i: (0, 0)                      # resident params across the grid
    # (Single-step grids dominate; for long grids the constant index_map lets
    #  Mosaic elide re-fetches of these <40 KB residents.)

    out_t = pl.pallas_call(
        _timestep_embedder_kernel,
        out_shape=jax.ShapeDtypeStruct((hidden, n_pad), jnp.float32),
        grid=(n_pad // block_n,),
        in_specs=[
            pl.BlockSpec((1, block_n), lambda i: (0, i)),   # t row, lane-dense
            pl.BlockSpec((HALF, 1), const),                 # freqs
            pl.BlockSpec((hidden, HALF), const),            # W1 cos half^T
            pl.BlockSpec((hidden, HALF), const),            # W1 sin half^T
            pl.BlockSpec((hidden, 1), const),               # b1
            pl.BlockSpec((hidden, hidden), const),          # W2^T
            pl.BlockSpec((hidden, 1), const),               # b2
        ],
        out_specs=pl.BlockSpec((hidden, block_n), lambda i: (0, i)),
        compiler_params=pltpu.CompilerParams(
            dimension_semantics=("parallel",)),
    )(t_row, freqs, w1c, w1s, b1c, w2t, b2c)

    # TODO(synk): have the DiT consumer accept the (H, N) feature-major layout
    # (or absorb this transpose into its next matmul); storing (N, H) in-kernel
    # would make the last dim 32 (<128) and force masked lane-sparse stores.
    return out_t[:, :n].T                         # back to the module's (N, H)


def _reference(t, w1, b1, w2, b2):
    """Pure-JAX reference mirroring the PyTorch forward."""
    half = FREQ_EMB_SIZE // 2
    freqs = jnp.exp(
        -math.log(MAX_PERIOD) * jnp.arange(half, dtype=jnp.float32) / half
    )
    args = t[:, None].astype(jnp.float32) * freqs[None]
    emb = jnp.concatenate([jnp.cos(args), jnp.sin(args)], axis=-1)
    h = emb @ w1 + b1
    h = h * jax.nn.sigmoid(h)
    return h @ w2 + b2


if __name__ == "__main__":
    key = jax.random.PRNGKey(0)
    k_t, k_w1, k_b1, k_w2, k_b2 = jax.random.split(key, 5)

    n = 8
    # Fractional timesteps, roughly in [0, 1000) like diffusion timesteps.
    t = jax.random.uniform(k_t, (n,), jnp.float32, minval=0.0, maxval=1000.0)

    # Deterministic synthetic parameters, stored as (in_features, out_features).
    w1 = jax.random.normal(k_w1, (FREQ_EMB_SIZE, HIDDEN_SIZE), jnp.float32) * 0.02
    b1 = jax.random.normal(k_b1, (HIDDEN_SIZE,), jnp.float32) * 0.02
    w2 = jax.random.normal(k_w2, (HIDDEN_SIZE, HIDDEN_SIZE), jnp.float32) * 0.02
    b2 = jax.random.normal(k_b2, (HIDDEN_SIZE,), jnp.float32) * 0.02

    out = timestep_embedder(t, w1, b1, w2, b2)
    out = jax.block_until_ready(out)

    ref = _reference(t, w1, b1, w2, b2)
    assert out.shape == (n, HIDDEN_SIZE)
    assert jnp.allclose(out, ref, atol=1e-4, rtol=1e-4)

    print("KERNEL_OK")
</pallas_src>

<mosaic_0001>
module attributes {stable_mosaic.version = 11 : i64} {
  func.func @_timestep_embedder_kernel(%arg0: i32, %arg1: memref<1x128xf32, #tpu.memory_space<vmem>>, %arg2: memref<128x1xf32, #tpu.memory_space<vmem>>, %arg3: memref<32x128xf32, #tpu.memory_space<vmem>>, %arg4: memref<32x128xf32, #tpu.memory_space<vmem>>, %arg5: memref<32x1xf32, #tpu.memory_space<vmem>>, %arg6: memref<32x32xf32, #tpu.memory_space<vmem>>, %arg7: memref<32x1xf32, #tpu.memory_space<vmem>>, %arg8: memref<32x128xf32, #tpu.memory_space<vmem>>) attributes {dimension_semantics = [#tpu.dimension_semantics<parallel>], iteration_bounds = array<i64: 1>, scalar_prefetch = 0 : i64, scratch_operands = 0 : i64, tpu.core_type = #tpu.core_type<tc>, window_params = [{transform_indices = @transform_0, window_bounds = array<i64: 1, 128>}, {pipeline_mode = #tpu.pipeline_mode<synchronous>, transform_indices = @transform_1, window_bounds = array<i64: 128, 1>}, {pipeline_mode = #tpu.pipeline_mode<synchronous>, transform_indices = @transform_2, window_bounds = array<i64: 32, 128>}, {pipeline_mode = #tpu.pipeline_mode<synchronous>, transform_indices = @transform_3, window_bounds = array<i64: 32, 128>}, {pipeline_mode = #tpu.pipeline_mode<synchronous>, transform_indices = @transform_4, window_bounds = array<i64: 32, 1>}, {pipeline_mode = #tpu.pipeline_mode<synchronous>, transform_indices = @transform_5, window_bounds = array<i64: 32, 32>}, {pipeline_mode = #tpu.pipeline_mode<synchronous>, transform_indices = @transform_6, window_bounds = array<i64: 32, 1>}, {transform_indices = @transform_7, window_bounds = array<i64: 32, 128>}]} {
    %c0 = arith.constant 0 : index
    %c0_0 = arith.constant 0 : index
    %0 = vector.load %arg1[%c0, %c0_0] : memref<1x128xf32, #tpu.memory_space<vmem>>, vector<1x128xf32>
    %c0_1 = arith.constant 0 : index
    %c0_2 = arith.constant 0 : index
    %1 = vector.load %arg2[%c0_1, %c0_2] : memref<128x1xf32, #tpu.memory_space<vmem>>, vector<128x1xf32>
    %2 = vector.broadcast %1 : vector<128x1xf32> to vector<128x128xf32>
    %3 = vector.broadcast %0 : vector<1x128xf32> to vector<128x128xf32>
    %4 = arith.mulf %2, %3 : vector<128x128xf32>
    %5 = math.cos %4 : vector<128x128xf32>
    %c0_3 = arith.constant 0 : index
    %c0_4 = arith.constant 0 : index
    %6 = vector.load %arg3[%c0_3, %c0_4] : memref<32x128xf32, #tpu.memory_space<vmem>>, vector<32x128xf32>
    %cst = arith.constant dense<0.000000e+00> : vector<32x128xf32>
    %7 = tpu.matmul %6, %5, %cst {dimension_numbers = #tpu.dot_dimension_numbers<[1], [0], [0], [1], [0, 0, 1, 1], [], []>} : vector<32x128xf32>, vector<128x128xf32>, vector<32x128xf32> -> vector<32x128xf32>
    %8 = math.sin %4 : vector<128x128xf32>
    %c0_5 = arith.constant 0 : index
    %c0_6 = arith.constant 0 : index
    %9 = vector.load %arg4[%c0_5, %c0_6] : memref<32x128xf32, #tpu.memory_space<vmem>>, vector<32x128xf32>
    %cst_7 = arith.constant dense<0.000000e+00> : vector<32x128xf32>
    %10 = tpu.matmul %9, %8, %cst_7 {dimension_numbers = #tpu.dot_dimension_numbers<[1], [0], [0], [1], [0, 0, 1, 1], [], []>} : vector<32x128xf32>, vector<128x128xf32>, vector<32x128xf32> -> vector<32x128xf32>
    %11 = arith.addf %7, %10 : vector<32x128xf32>
    %c0_8 = arith.constant 0 : index
    %c0_9 = arith.constant 0 : index
    %12 = vector.load %arg5[%c0_8, %c0_9] : memref<32x1xf32, #tpu.memory_space<vmem>>, vector<32x1xf32>
    %13 = vector.broadcast %12 : vector<32x1xf32> to vector<32x128xf32>
    %14 = arith.addf %11, %13 : vector<32x128xf32>
    %15 = arith.negf %14 : vector<32x128xf32>
    %16 = math.exp %15 : vector<32x128xf32>
    %cst_10 = arith.constant 1.000000e+00 : f32
    %17 = vector.broadcast %cst_10 : f32 to vector<32x128xf32>
    %18 = arith.addf %17, %16 : vector<32x128xf32>
    %19 = arith.divf %17, %18 : vector<32x128xf32>
    %20 = arith.mulf %14, %19 : vector<32x128xf32>
    %c0_11 = arith.constant 0 : index
    %c0_12 = arith.constant 0 : index
    %21 = vector.load %arg6[%c0_11, %c0_12] : memref<32x32xf32, #tpu.memory_space<vmem>>, vector<32x32xf32>
    %cst_13 = arith.constant dense<0.000000e+00> : vector<32x128xf32>
    %22 = tpu.matmul %21, %20, %cst_13 {dimension_numbers = #tpu.dot_dimension_numbers<[1], [0], [0], [1], [0, 0, 1, 1], [], []>} : vector<32x32xf32>, vector<32x128xf32>, vector<32x128xf32> -> vector<32x128xf32>
    %c0_14 = arith.constant 0 : index
    %c0_15 = arith.constant 0 : index
    %23 = vector.load %arg7[%c0_14, %c0_15] : memref<32x1xf32, #tpu.memory_space<vmem>>, vector<32x1xf32>
    %24 = vector.broadcast %23 : vector<32x1xf32> to vector<32x128xf32>
    %25 = arith.addf %22, %24 : vector<32x128xf32>
    %c0_16 = arith.constant 0 : index
    %c0_17 = arith.constant 0 : index
    %26 = vector.load %arg8[%c0_16, %c0_17] : memref<32x128xf32, #tpu.memory_space<vmem>>, vector<32x128xf32>
    tpu.vector_store %arg8[%c0_16, %c0_17], %25 {strides = array<i32>} : memref<32x128xf32, #tpu.memory_space<vmem>>, vector<32x128xf32>,
    return
  }
  func.func @transform_0(%arg0: i32) -> (i32, i32) {
    %c0_i32 = arith.constant 0 : i32
    %c0_i32_0 = arith.constant 0 : i32
    return %c0_i32, %arg0 : i32, i32
  }
  func.func @transform_1(%arg0: i32) -> (i32, i32) {
    %c0_i32 = arith.constant 0 : i32
    %c0_i32_0 = arith.constant 0 : i32
    %c0_i32_1 = arith.constant 0 : i32
    return %c0_i32, %c0_i32_0 : i32, i32
  }
  func.func @transform_2(%arg0: i32) -> (i32, i32) {
    %c0_i32 = arith.constant 0 : i32
    %c0_i32_0 = arith.constant 0 : i32
    %c0_i32_1 = arith.constant 0 : i32
    return %c0_i32, %c0_i32_0 : i32, i32
  }
  func.func @transform_3(%arg0: i32) -> (i32, i32) {
    %c0_i32 = arith.constant 0 : i32
    %c0_i32_0 = arith.constant 0 : i32
    %c0_i32_1 = arith.constant 0 : i32
    return %c0_i32, %c0_i32_0 : i32, i32
  }
  func.func @transform_4(%arg0: i32) -> (i32, i32) {
    %c0_i32 = arith.constant 0 : i32
    %c0_i32_0 = arith.constant 0 : i32
    %c0_i32_1 = arith.constant 0 : i32
    return %c0_i32, %c0_i32_0 : i32, i32
  }
  func.func @transform_5(%arg0: i32) -> (i32, i32) {
    %c0_i32 = arith.constant 0 : i32
    %c0_i32_0 = arith.constant 0 : i32
    %c0_i32_1 = arith.constant 0 : i32
    return %c0_i32, %c0_i32_0 : i32, i32
  }
  func.func @transform_6(%arg0: i32) -> (i32, i32) {
    %c0_i32 = arith.constant 0 : i32
    %c0_i32_0 = arith.constant 0 : i32
    %c0_i32_1 = arith.constant 0 : i32
    return %c0_i32, %c0_i32_0 : i32, i32
  }
  func.func @transform_7(%arg0: i32) -> (i32, i32) {
    %c0_i32 = arith.constant 0 : i32
    %c0_i32_0 = arith.constant 0 : i32
    return %c0_i32, %arg0 : i32, i32
  }
}

</mosaic_0001>

<llo_original>
// kernel: timestep_embedder.1
$region0: #{timestep_embedder.1}
  #allocation0 [shape = 'u32[]', space=smem, size = 0x4, offset = 0x4, fixed_abs, tag = 'smem constant byte address 0x4 - core index']
  #allocation1 [shape = 'u32[144,128]{1,0:T(1,128)}', space=vmem, size = 0x12000, scoped, tag = 'internal scratch']
  %s0 = inlined_call_operand.vmem [shape: f32[1,128], index: 0, kind: input, shape index: {}]
  %s1 = inlined_call_operand.vmem [shape: f32[128,1], index: 1, kind: input, shape index: {}]
  %s2 = inlined_call_operand.vmem [shape: f32[32,128], index: 2, kind: input, shape index: {}]
  %s3 = inlined_call_operand.vmem [shape: f32[32,128], index: 3, kind: input, shape index: {}]
  %s4 = inlined_call_operand.vmem [shape: f32[32,1], index: 4, kind: input, shape index: {}]
  %s5 = inlined_call_operand.vmem [shape: f32[32,32], index: 5, kind: input, shape index: {}]
  %s6 = inlined_call_operand.vmem [shape: f32[32,1], index: 6, kind: input, shape index: {}]
  %s7 = inlined_call_operand.vmem [shape: f32[32,128], index: 7, kind: output, shape index: {}]
  %s8 = sld [smem:[#allocation0]]
  $region38: #{timestep_embedder.1} parent=0
    _
  %s10 = ssub.s32 1, %s8
  %s11 = scalar_select 0, %s10, %s8
  // Predicated region
  $region2: #{timestep_embedder.1} parent=0 // pred_check
    _
  $region3: #{timestep_embedder.1} parent=0 // pred_check_branch
    %13 = sbr.rel (0) target = $region5
  $region4: #{timestep_embedder.1} parent=0 // pred_region
    _
  $region5: #{timestep_embedder.1} parent=0 // pred_fallthru
    _
  // Predicated region
  $region6: #{timestep_embedder.1} parent=0 // pred_check
    _
  $region7: #{timestep_embedder.1} parent=0 // pred_check_branch
    %15 = sbr.rel (0) target = $region9
  $region8: #{timestep_embedder.1} parent=0 // pred_region
    _
  $region9: #{timestep_embedder.1} parent=0 // pred_fallthru
    _
  // Predicated region
  $region10: #{timestep_embedder.1} parent=0 // pred_check
    _
  $region11: #{timestep_embedder.1} parent=0 // pred_check_branch
    %17 = sbr.rel (0) target = $region13
  $region12: #{timestep_embedder.1} parent=0 // pred_region
    _
  $region13: #{timestep_embedder.1} parent=0 // pred_fallthru
    _
  // Predicated region
  $region14: #{timestep_embedder.1} parent=0 // pred_check
    _
  $region15: #{timestep_embedder.1} parent=0 // pred_check_branch
    %19 = sbr.rel (0) target = $region17
  $region16: #{timestep_embedder.1} parent=0 // pred_region
    _
  $region17: #{timestep_embedder.1} parent=0 // pred_fallthru
    _
  // Predicated region
  $region18: #{timestep_embedder.1} parent=0 // pred_check
    _
  $region19: #{timestep_embedder.1} parent=0 // pred_check_branch
    %21 = sbr.rel (0) target = $region21
  $region20: #{timestep_embedder.1} parent=0 // pred_region
    _
  $region21: #{timestep_embedder.1} parent=0 // pred_fallthru
    _
  // Predicated region
  $region22: #{timestep_embedder.1} parent=0 // pred_check
    _
  $region23: #{timestep_embedder.1} parent=0 // pred_check_branch
    %23 = sbr.rel (0) target = $region25
  $region24: #{timestep_embedder.1} parent=0 // pred_region
    _
  $region25: #{timestep_embedder.1} parent=0 // pred_fallthru
    _
  // Predicated region
  $region26: #{timestep_embedder.1} parent=0 // pred_check
    _
  $region27: #{timestep_embedder.1} parent=0 // pred_check_branch
    %25 = sbr.rel (0) target = $region29
  $region28: #{timestep_embedder.1} parent=0 // pred_region
    _
  $region29: #{timestep_embedder.1} parent=0 // pred_fallthru
    _
  %v26 = vld [vmem:[%s0] sm:$0x1]
  %v27 = vld [vmem:[%s1] sm:$0xff]
  %v28 = vld [vmem:[%s1 + $0x8] sm:$0xff]
  %v29 = vld [vmem:[%s1 + $0x10] sm:$0xff]
  %v30 = vld [vmem:[%s1 + $0x18] sm:$0xff]
  %v31 = vld [vmem:[%s1 + $0x20] sm:$0xff]
  %v32 = vld [vmem:[%s1 + $0x28] sm:$0xff]
  %v33 = vld [vmem:[%s1 + $0x30] sm:$0xff]
  %v34 = vld [vmem:[%s1 + $0x38] sm:$0xff]
  %v35 = vld [vmem:[%s1 + $0x40] sm:$0xff]
  %v36 = vld [vmem:[%s1 + $0x48] sm:$0xff]
  %v37 = vld [vmem:[%s1 + $0x50] sm:$0xff]
  %v38 = vld [vmem:[%s1 + $0x58] sm:$0xff]
  %v39 = vld [vmem:[%s1 + $0x60] sm:$0xff]
  %v40 = vld [vmem:[%s1 + $0x68] sm:$0xff]
  %v41 = vld [vmem:[%s1 + $0x70] sm:$0xff]
  %v42 = vld [vmem:[%s1 + $0x78] sm:$0xff]
  %44 = vset.pattern.permute.xlu0 0
  %45 = vperm.xlu0 %44, %v27
  %v46 = vpop.permute.xlu0 %45
  %49 = vset.pattern.permute.xlu0 0
  %50 = vperm.xlu0 %49, %v28
  %v51 = vpop.permute.xlu0 %50
  %54 = vset.pattern.permute.xlu0 0
  %55 = vperm.xlu0 %54, %v29
  %v56 = vpop.permute.xlu0 %55
  %59 = vset.pattern.permute.xlu0 0
  %60 = vperm.xlu0 %59, %v30
  %v61 = vpop.permute.xlu0 %60
  %64 = vset.pattern.permute.xlu0 0
  %65 = vperm.xlu0 %64, %v31
  %v66 = vpop.permute.xlu0 %65
  %69 = vset.pattern.permute.xlu0 0
  %70 = vperm.xlu0 %69, %v32
  %v71 = vpop.permute.xlu0 %70
  %74 = vset.pattern.permute.xlu0 0
  %75 = vperm.xlu0 %74, %v33
  %v76 = vpop.permute.xlu0 %75
  %79 = vset.pattern.permute.xlu0 0
  %80 = vperm.xlu0 %79, %v34
  %v81 = vpop.permute.xlu0 %80
  %84 = vset.pattern.permute.xlu0 0
  %85 = vperm.xlu0 %84, %v35
  %v86 = vpop.permute.xlu0 %85
  %89 = vset.pattern.permute.xlu0 0
  %90 = vperm.xlu0 %89, %v36
  %v91 = vpop.permute.xlu0 %90
  %94 = vset.pattern.permute.xlu0 0
  %95 = vperm.xlu0 %94, %v37
  %v96 = vpop.permute.xlu0 %95
  %99 = vset.pattern.permute.xlu0 0
  %100 = vperm.xlu0 %99, %v38
  %v101 = vpop.permute.xlu0 %100
  %104 = vset.pattern.permute.xlu0 0
  %105 = vperm.xlu0 %104, %v39
  %v106 = vpop.permute.xlu0 %105
  %109 = vset.pattern.permute.xlu0 0
  %110 = vperm.xlu0 %109, %v40
  %v111 = vpop.permute.xlu0 %110
  %114 = vset.pattern.permute.xlu0 0
  %115 = vperm.xlu0 %114, %v41
  %v116 = vpop.permute.xlu0 %115
  %119 = vset.pattern.permute.xlu0 0
  %120 = vperm.xlu0 %119, %v42
  %v121 = vpop.permute.xlu0 %120
  %v124 = vlaneseq
  %v125 = vshrl.u32 %v124, 7
  %v126 = vsub.s32 0, %v125
  %v127 = vrot.slane %v26, %v126
  %v129 = vmul.f32 %v46, %v127
  %v130 = vmul.f32 %v51, %v127
  %v131 = vmul.f32 %v56, %v127
  %v132 = vmul.f32 %v61, %v127
  %v133 = vmul.f32 %v66, %v127
  %v134 = vmul.f32 %v71, %v127
  %v135 = vmul.f32 %v76, %v127
  %v136 = vmul.f32 %v81, %v127
  %v137 = vmul.f32 %v86, %v127
  %v138 = vmul.f32 %v91, %v127
  %v139 = vmul.f32 %v96, %v127
  %v140 = vmul.f32 %v101, %v127
  %v141 = vmul.f32 %v106, %v127
  %v142 = vmul.f32 %v111, %v127
  %v143 = vmul.f32 %v116, %v127
  %v144 = vmul.f32 %v121, %v127
  %v145 = vand.u32 2147483647, %v129
  %vm146 = vcmp.le.f32.partialorder %v145, 0.7853982
  %vm147 = vcmp.lt.s32.totalorder %v129, 0
  %v148 = vand.u32 %v129, 2139095040
  %v149 = vshrl.u32 %v148, 23
  %v150 = vsub.s32 %v149, 127
  %v151 = vand.u32 2147483647, %v129
  %v152 = vand.u32 %v151, 8388607
  %v153 = vor.u32 %v152, 8388608
  %v154 = vsub.s32 0, %v153
  %v155 = vadd.s32 %v150, 1
  %vm156 = vcmp.gt.s32.totalorder %v155, 0
  %v157 = vsel %vm156, %v155, 0
  %v158 = vshrl.u32 %v157, 5
  %v159 = vand.u32 %v157, 31
  %v160 = vsub.s32 32, %v159
  %v161 = vshrl.u32 683565275, %v160
  %v162 = vshll.u32 683565275, %v159
  %v163 = vshrl.u32 2475754826, %v160
  %v164 = vor.u32 %v162, %v163
  %v165 = vshll.u32 2475754826, %v159
  %v166 = vshrl.u32 2131351028, %v160
  %v167 = vor.u32 %v165, %v166
  %v168 = vshll.u32 2131351028, %v159
  %v169 = vshrl.u32 2102212464, %v160
  %v170 = vor.u32 %v168, %v169
  %v171 = vshll.u32 2102212464, %v159
  %v172 = vshrl.u32 920167782, %v160
  %v173 = vor.u32 %v171, %v172
  %v174 = vshll.u32 920167782, %v159
  %v175 = vshrl.u32 1326507024, %v160
  %v176 = vor.u32 %v174, %v175
  %vm177 = vcmp.lt.s32.totalorder %v158, 1
  %vm178 = vcmp.lt.s32.totalorder %v158, 2
  %vm179 = vcmp.lt.s32.totalorder %v158, 3
  %vm180 = vcmp.lt.s32.totalorder %v158, 4
  %v181 = vsel %vm177, %v161, %v164
  %v182 = vsel %vm180, %v170, 2102212464
  %v183 = vsel %vm179, %v167, %v182
  %v184 = vsel %vm178, %v181, %v183
  %v185 = vsel %vm177, %v164, %v167
  %v186 = vsel %vm180, %v173, 920167782
  %v187 = vsel %vm179, %v170, %v186
  %v188 = vsel %vm178, %v185, %v187
  %v189 = vsel %vm177, %v167, %v170
  %v190 = vsel %vm180, %v176, 1326507024
  %v191 = vsel %vm179, %v173, %v190
  %v192 = vsel %vm178, %v189, %v191
  %v193 = vshll.u32 %v153, 8
  %v194 = vmul.u32.u64.compose %v193, %v192
  %v195 = vextract.low.u32 %v194
  %v196 = vextract.high.u32 %v194
  %v197 = vmul.u32.u64.compose %v193, %v188
  %v198 = vextract.low.u32 %v197
  %v199 = vextract.high.u32 %v197
  %v200 = vmul.u32 %v193, %v184
  %v201 = vadd.s32 %v196, %v198
  %vm202 = vc.u32 %v196, %v198
  %v203 = vadd.s32 %v199, 1
  %v204 = vsel %vm202, %v203, %v199
  %v205 = vadd.s32 %v200, %v204
  %v206 = vadd.s32 %v205, 536870912
  %v207 = vshrl.u32 %v206, 30
  %v208 = vshll.u32 %v207, 30
  %v209 = vsub.s32 %v205, %v208
  %vm210 = vcmp.lt.s32.totalorder %v209, 0
  %v211 = vsub.s32 0, %v209
  %v212 = vsel %vm210, %v211, %v209
  %v213 = vclz %v212
  %v214 = vsub.s32 %v213, 2
  %vm215 = vcmp.gt.s32.totalorder 0, %v214
  %v216 = vsel %vm215, 0, %v214
  %v217 = vsub.s32 32, %v216
  %v218 = vshll.u32 %v209, %v216
  %v219 = vshrl.u32 %v201, %v217
  %v220 = vor.u32 %v218, %v219
  %v221 = vsub.s32 4294967266, %v216
  %v222 = vadd.s32 %v221, 127
  %v223 = vshll.u32 %v222, 23
  %v224 = vor.u32 4788187, %v223
  %v225 = vand.u32 2147483647, %v224
  %v227 = vcvt.s32.f32 %v220
  %v228 = vmul.f32 %v227, %v225
  %v229 = vxor.u32 %v228, 2147483648
  %v230 = vsel %vm147, %v229, %v228
  %v231 = vsub.s32 4, %v207
  %v232 = vsel %vm147, %v231, %v207
  %v233 = vsel %vm146, %v129, %v230
  %v234 = vsel %vm146, 0, %v232
  %v235 = vcosq.f32.pop %v233
  %v236 = vsinq.f32.pop %v233
  %vm237 = vweird.f32 %v129
  %v238 = vand.u32 %v234, 3
  %vm239 = vcmp.lt.s32.totalorder %v238, 2
  %vm240 = vcmp.eq.s32.totalorder %v238, 0
  %v241 = vxor.u32 %v236, 2147483648
  %v242 = vsel %vm240, %v235, %v241
  %vm243 = vcmp.eq.s32.totalorder %v238, 2
  %v244 = vxor.u32 %v235, 2147483648
  %v245 = vsel %vm243, %v244, %v236
  %v246 = vsel %vm239, %v242, %v245
  %v247 = vsel %vm237, nan, %v246
  %v248 = vand.u32 2147483647, %v130
  %vm249 = vcmp.le.f32.partialorder %v248, 0.7853982
  %vm250 = vcmp.lt.s32.totalorder %v130, 0
  %v251 = vand.u32 %v130, 2139095040
  %v252 = vshrl.u32 %v251, 23
  %v253 = vsub.s32 %v252, 127
  %v254 = vand.u32 2147483647, %v130
  %v255 = vand.u32 %v254, 8388607
  %v256 = vor.u32 %v255, 8388608
  %v257 = vsub.s32 0, %v256
  %v258 = vadd.s32 %v253, 1
  %vm259 = vcmp.gt.s32.totalorder %v258, 0
  %v260 = vsel %vm259, %v258, 0
  %v261 = vshrl.u32 %v260, 5
  %v262 = vand.u32 %v260, 31
  %v263 = vsub.s32 32, %v262
  %v264 = vshrl.u32 683565275, %v263
  %v265 = vshll.u32 683565275, %v262
  %v266 = vshrl.u32 2475754826, %v263
  %v267 = vor.u32 %v265, %v266
  %v268 = vshll.u32 2475754826, %v262
  %v269 = vshrl.u32 2131351028, %v263
  %v270 = vor.u32 %v268, %v269
  %v271 = vshll.u32 2131351028, %v262
  %v272 = vshrl.u32 2102212464, %v263
  %v273 = vor.u32 %v271, %v272
  %v274 = vshll.u32 2102212464, %v262
  %v275 = vshrl.u32 920167782, %v263
  %v276 = vor.u32 %v274, %v275
  %v277 = vshll.u32 920167782, %v262
  %v278 = vshrl.u32 1326507024, %v263
  %v279 = vor.u32 %v277, %v278
  %vm280 = vcmp.lt.s32.totalorder %v261, 1
  %vm281 = vcmp.lt.s32.totalorder %v261, 2
  %vm282 = vcmp.lt.s32.totalorder %v261, 3
  %vm283 = vcmp.lt.s32.totalorder %v261, 4
  %v284 = vsel %vm280, %v264, %v267
  %v285 = vsel %vm283, %v273, 2102212464
  %v286 = vsel %vm282, %v270, %v285
  %v287 = vsel %vm281, %v284, %v286
  %v288 = vsel %vm280, %v267, %v270
  %v289 = vsel %vm283, %v276, 920167782
  %v290 = vsel %vm282, %v273, %v289
  %v291 = vsel %vm281, %v288, %v290
  %v292 = vsel %vm280, %v270, %v273
  %v293 = vsel %vm283, %v279, 1326507024
  %v294 = vsel %vm282, %v276, %v293
  %v295 = vsel %vm281, %v292, %v294
  %v296 = vshll.u32 %v256, 8
  %v297 = vmul.u32.u64.compose %v296, %v295
  %v298 = vextract.low.u32 %v297
  %v299 = vextract.high.u32 %v297
  %v300 = vmul.u32.u64.compose %v296, %v291
  %v301 = vextract.low.u32 %v300
  %v302 = vextract.high.u32 %v300
  %v303 = vmul.u32 %v296, %v287
  %v304 = vadd.s32 %v299, %v301
  %vm305 = vc.u32 %v299, %v301
  %v306 = vadd.s32 %v302, 1
  %v307 = vsel %vm305, %v306, %v302
  %v308 = vadd.s32 %v303, %v307
  %v309 = vadd.s32 %v308, 536870912
  %v310 = vshrl.u32 %v309, 30
  %v311 = vshll.u32 %v310, 30
  %v312 = vsub.s32 %v308, %v311
  %vm313 = vcmp.lt.s32.totalorder %v312, 0
  %v314 = vsub.s32 0, %v312
  %v315 = vsel %vm313, %v314, %v312
  %v316 = vclz %v315
  %v317 = vsub.s32 %v316, 2
  %vm318 = vcmp.gt.s32.totalorder 0, %v317
  %v319 = vsel %vm318, 0, %v317
  %v320 = vsub.s32 32, %v319
  %v321 = vshll.u32 %v312, %v319
  %v322 = vshrl.u32 %v304, %v320
  %v323 = vor.u32 %v321, %v322
  %v324 = vsub.s32 4294967266, %v319
  %v325 = vadd.s32 %v324, 127
  %v326 = vshll.u32 %v325, 23
  %v327 = vor.u32 4788187, %v326
  %v328 = vand.u32 2147483647, %v327
  %v330 = vcvt.s32.f32 %v323
  %v331 = vmul.f32 %v330, %v328
  %v332 = vxor.u32 %v331, 2147483648
  %v333 = vsel %vm250, %v332, %v331
  %v334 = vsub.s32 4, %v310
  %v335 = vsel %vm250, %v334, %v310
  %v336 = vsel %vm249, %v130, %v333
  %v337 = vsel %vm249, 0, %v335
  %v338 = vcosq.f32.pop %v336
  %v339 = vsinq.f32.pop %v336
  %vm340 = vweird.f32 %v130
  %v341 = vand.u32 %v337, 3
  %vm342 = vcmp.lt.s32.totalorder %v341, 2
  %vm343 = vcmp.eq.s32.totalorder %v341, 0
  %v344 = vxor.u32 %v339, 2147483648
  %v345 = vsel %vm343, %v338, %v344
  %vm346 = vcmp.eq.s32.totalorder %v341, 2
  %v347 = vxor.u32 %v338, 2147483648
  %v348 = vsel %vm346, %v347, %v339
  %v349 = vsel %vm342, %v345, %v348
  %v350 = vsel %vm340, nan, %v349
  %v351 = vand.u32 2147483647, %v131
  %vm352 = vcmp.le.f32.partialorder %v351, 0.7853982
  %vm353 = vcmp.lt.s32.totalorder %v131, 0
  %v354 = vand.u32 %v131, 2139095040
  %v355 = vshrl.u32 %v354, 23
  %v356 = vsub.s32 %v355, 127
  %v357 = vand.u32 2147483647, %v131
  %v358 = vand.u32 %v357, 8388607
  %v359 = vor.u32 %v358, 8388608
  %v360 = vsub.s32 0, %v359
  %v361 = vadd.s32 %v356, 1
  %vm362 = vcmp.gt.s32.totalorder %v361, 0
  %v363 = vsel %vm362, %v361, 0
  %v364 = vshrl.u32 %v363, 5
  %v365 = vand.u32 %v363, 31
  %v366 = vsub.s32 32, %v365
  %v367 = vshrl.u32 683565275, %v366
  %v368 = vshll.u32 683565275, %v365
  %v369 = vshrl.u32 2475754826, %v366
  %v370 = vor.u32 %v368, %v369
  %v371 = vshll.u32 2475754826, %v365
  %v372 = vshrl.u32 2131351028, %v366
  %v373 = vor.u32 %v371, %v372
  %v374 = vshll.u32 2131351028, %v365
  %v375 = vshrl.u32 2102212464, %v366
  %v376 = vor.u32 %v374, %v375
  %v377 = vshll.u32 2102212464, %v365
  %v378 = vshrl.u32 920167782, %v366
  %v379 = vor.u32 %v377, %v378
  %v380 = vshll.u32 920167782, %v365
  %v381 = vshrl.u32 1326507024, %v366
  %v382 = vor.u32 %v380, %v381
  %vm383 = vcmp.lt.s32.totalorder %v364, 1
  %vm384 = vcmp.lt.s32.totalorder %v364, 2
  %vm385 = vcmp.lt.s32.totalorder %v364, 3
  %vm386 = vcmp.lt.s32.totalorder %v364, 4
  %v387 = vsel %vm383, %v367, %v370
  %v388 = vsel %vm386, %v376, 2102212464
  %v389 = vsel %vm385, %v373, %v388
  %v390 = vsel %vm384, %v387, %v389
  %v391 = vsel %vm383, %v370, %v373
  %v392 = vsel %vm386, %v379, 920167782
  %v393 = vsel %vm385, %v376, %v392
  %v394 = vsel %vm384, %v391, %v393
  %v395 = vsel %vm383, %v373, %v376
  %v396 = vsel %vm386, %v382, 1326507024
  %v397 = vsel %vm385, %v379, %v396
  %v398 = vsel %vm384, %v395, %v397
  %v399 = vshll.u32 %v359, 8
  %v400 = vmul.u32.u64.compose %v399, %v398
  %v401 = vextract.low.u32 %v400
  %v402 = vextract.high.u32 %v400
  %v403 = vmul.u32.u64.compose %v399, %v394
  %v404 = vextract.low.u32 %v403
  %v405 = vextract.high.u32 %v403
  %v406 = vmul.u32 %v399, %v390
  %v407 = vadd.s32 %v402, %v404
  %vm408 = vc.u32 %v402, %v404
  %v409 = vadd.s32 %v405, 1
  %v410 = vsel %vm408, %v409, %v405
  %v411 = vadd.s32 %v406, %v410
  %v412 = vadd.s32 %v411, 536870912
  %v413 = vshrl.u32 %v412, 30
  %v414 = vshll.u32 %v413, 30
  %v415 = vsub.s32 %v411, %v414
  %vm416 = vcmp.lt.s32.totalorder %v415, 0
  %v417 = vsub.s32 0, %v415
  %v418 = vsel %vm416, %v417, %v415
  %v419 = vclz %v418
  %v420 = vsub.s32 %v419, 2
  %vm421 = vcmp.gt.s32.totalorder 0, %v420
  %v422 = vsel %vm421, 0, %v420
  %v423 = vsub.s32 32, %v422
  %v424 = vshll.u32 %v415, %v422
  %v425 = vshrl.u32 %v407, %v423
  %v426 = vor.u32 %v424, %v425
  %v427 = vsub.s32 4294967266, %v422
  %v428 = vadd.s32 %v427, 127
  %v429 = vshll.u32 %v428, 23
  %v430 = vor.u32 4788187, %v429
  %v431 = vand.u32 2147483647, %v430
  %v433 = vcvt.s32.f32 %v426
  %v434 = vmul.f32 %v433, %v431
  %v435 = vxor.u32 %v434, 2147483648
  %v436 = vsel %vm353, %v435, %v434
  %v437 = vsub.s32 4, %v413
  %v438 = vsel %vm353, %v437, %v413
  %v439 = vsel %vm352, %v131, %v436
  %v440 = vsel %vm352, 0, %v438
  %v441 = vcosq.f32.pop %v439
  %v442 = vsinq.f32.pop %v439
  %vm443 = vweird.f32 %v131
  %v444 = vand.u32 %v440, 3
  %vm445 = vcmp.lt.s32.totalorder %v444, 2
  %vm446 = vcmp.eq.s32.totalorder %v444, 0
  %v447 = vxor.u32 %v442, 2147483648
  %v448 = vsel %vm446, %v441, %v447
  %vm449 = vcmp.eq.s32.totalorder %v444, 2
  %v450 = vxor.u32 %v441, 2147483648
  %v451 = vsel %vm449, %v450, %v442
  %v452 = vsel %vm445, %v448, %v451
  %v453 = vsel %vm443, nan, %v452
  %v454 = vand.u32 2147483647, %v132
  %vm455 = vcmp.le.f32.partialorder %v454, 0.7853982
  %vm456 = vcmp.lt.s32.totalorder %v132, 0
  %v457 = vand.u32 %v132, 2139095040
  %v458 = vshrl.u32 %v457, 23
  %v459 = vsub.s32 %v458, 127
  %v460 = vand.u32 2147483647, %v132
  %v461 = vand.u32 %v460, 8388607
  %v462 = vor.u32 %v461, 8388608
  %v463 = vsub.s32 0, %v462
  %v464 = vadd.s32 %v459, 1
  %vm465 = vcmp.gt.s32.totalorder %v464, 0
  %v466 = vsel %vm465, %v464, 0
  %v467 = vshrl.u32 %v466, 5
  %v468 = vand.u32 %v466, 31
  %v469 = vsub.s32 32, %v468
  %v470 = vshrl.u32 683565275, %v469
  %v471 = vshll.u32 683565275, %v468
  %v472 = vshrl.u32 2475754826, %v469
  %v473 = vor.u32 %v471, %v472
  %v474 = vshll.u32 2475754826, %v468
  %v475 = vshrl.u32 2131351028, %v469
  %v476 = vor.u32 %v474, %v475
  %v477 = vshll.u32 2131351028, %v468
  %v478 = vshrl.u32 2102212464, %v469
  %v479 = vor.u32 %v477, %v478
  %v480 = vshll.u32 2102212464, %v468
  %v481 = vshrl.u32 920167782, %v469
  %v482 = vor.u32 %v480, %v481
  %v483 = vshll.u32 920167782, %v468
  %v484 = vshrl.u32 1326507024, %v469
  %v485 = vor.u32 %v483, %v484
  %vm486 = vcmp.lt.s32.totalorder %v467, 1
  %vm487 = vcmp.lt.s32.totalorder %v467, 2
  %vm488 = vcmp.lt.s32.totalorder %v467, 3
  %vm489 = vcmp.lt.s32.totalorder %v467, 4
  %v490 = vsel %vm486, %v470, %v473
  %v491 = vsel %vm489, %v479, 2102212464
  %v492 = vsel %vm488, %v476, %v491
  %v493 = vsel %vm487, %v490, %v492
  %v494 = vsel %vm486, %v473, %v476
  %v495 = vsel %vm489, %v482, 920167782
  %v496 = vsel %vm488, %v479, %v495
  %v497 = vsel %vm487, %v494, %v496
  %v498 = vsel %vm486, %v476, %v479
  %v499 = vsel %vm489, %v485, 1326507024
  %v500 = vsel %vm488, %v482, %v499
  %v501 = vsel %vm487, %v498, %v500
  %v502 = vshll.u32 %v462, 8
  %v503 = vmul.u32.u64.compose %v502, %v501
  %v504 = vextract.low.u32 %v503
  %v505 = vextract.high.u32 %v503
  %v506 = vmul.u32.u64.compose %v502, %v497
  %v507 = vextract.low.u32 %v506
  %v508 = vextract.high.u32 %v506
  %v509 = vmul.u32 %v502, %v493
  %v510 = vadd.s32 %v505, %v507
  %vm511 = vc.u32 %v505, %v507
  %v512 = vadd.s32 %v508, 1
  %v513 = vsel %vm511, %v512, %v508
  %v514 = vadd.s32 %v509, %v513
  %v515 = vadd.s32 %v514, 536870912
  %v516 = vshrl.u32 %v515, 30
  %v517 = vshll.u32 %v516, 30
  %v518 = vsub.s32 %v514, %v517
  %vm519 = vcmp.lt.s32.totalorder %v518, 0
  %v520 = vsub.s32 0, %v518
  %v521 = vsel %vm519, %v520, %v518
  %v522 = vclz %v521
  %v523 = vsub.s32 %v522, 2
  %vm524 = vcmp.gt.s32.totalorder 0, %v523
  %v525 = vsel %vm524, 0, %v523
  %v526 = vsub.s32 32, %v525
  %v527 = vshll.u32 %v518, %v525
  %v528 = vshrl.u32 %v510, %v526
  %v529 = vor.u32 %v527, %v528
  %v530 = vsub.s32 4294967266, %v525
  %v531 = vadd.s32 %v530, 127
  %v532 = vshll.u32 %v531, 23
  %v533 = vor.u32 4788187, %v532
  %v534 = vand.u32 2147483647, %v533
  %v536 = vcvt.s32.f32 %v529
  %v537 = vmul.f32 %v536, %v534
  %v538 = vxor.u32 %v537, 2147483648
  %v539 = vsel %vm456, %v538, %v537
  %v540 = vsub.s32 4, %v516
  %v541 = vsel %vm456, %v540, %v516
  %v542 = vsel %vm455, %v132, %v539
  %v543 = vsel %vm455, 0, %v541
  %v544 = vcosq.f32.pop %v542
  %v545 = vsinq.f32.pop %v542
  %vm546 = vweird.f32 %v132
  %v547 = vand.u32 %v543, 3
  %vm548 = vcmp.lt.s32.totalorder %v547, 2
  %vm549 = vcmp.eq.s32.totalorder %v547, 0
  %v550 = vxor.u32 %v545, 2147483648
  %v551 = vsel %vm549, %v544, %v550
  %vm552 = vcmp.eq.s32.totalorder %v547, 2
  %v553 = vxor.u32 %v544, 2147483648
  %v554 = vsel %vm552, %v553, %v545
  %v555 = vsel %vm548, %v551, %v554
  %v556 = vsel %vm546, nan, %v555
  %v557 = vand.u32 2147483647, %v133
  %vm558 = vcmp.le.f32.partialorder %v557, 0.7853982
  %vm559 = vcmp.lt.s32.totalorder %v133, 0
  %v560 = vand.u32 %v133, 2139095040
  %v561 = vshrl.u32 %v560, 23
  %v562 = vsub.s32 %v561, 127
  %v563 = vand.u32 2147483647, %v133
  %v564 = vand.u32 %v563, 8388607
  %v565 = vor.u32 %v564, 8388608
  %v566 = vsub.s32 0, %v565
  %v567 = vadd.s32 %v562, 1
  %vm568 = vcmp.gt.s32.totalorder %v567, 0
  %v569 = vsel %vm568, %v567, 0
  %v570 = vshrl.u32 %v569, 5
  %v571 = vand.u32 %v569, 31
  %v572 = vsub.s32 32, %v571
  %v573 = vshrl.u32 683565275, %v572
  %v574 = vshll.u32 683565275, %v571
  %v575 = vshrl.u32 2475754826, %v572
  %v576 = vor.u32 %v574, %v575
  %v577 = vshll.u32 2475754826, %v571
  %v578 = vshrl.u32 2131351028, %v572
  %v579 = vor.u32 %v577, %v578
  %v580 = vshll.u32 2131351028, %v571
  %v581 = vshrl.u32 2102212464, %v572
  %v582 = vor.u32 %v580, %v581
  %v583 = vshll.u32 2102212464, %v571
  %v584 = vshrl.u32 920167782, %v572
  %v585 = vor.u32 %v583, %v584
  %v586 = vshll.u32 920167782, %v571
  %v587 = vshrl.u32 1326507024, %v572
  %v588 = vor.u32 %v586, %v587
  %vm589 = vcmp.lt.s32.totalorder %v570, 1
  %vm590 = vcmp.lt.s32.totalorder %v570, 2
  %vm591 = vcmp.lt.s32.totalorder %v570, 3
  %vm592 = vcmp.lt.s32.totalorder %v570, 4
  %v593 = vsel %vm589, %v573, %v576
  %v594 = vsel %vm592, %v582, 2102212464
  %v595 = vsel %vm591, %v579, %v594
  %v596 = vsel %vm590, %v593, %v595
  %v597 = vsel %vm589, %v576, %v579
  %v598 = vsel %vm592, %v585, 920167782
  %v599 = vsel %vm591, %v582, %v598
  %v600 = vsel %vm590, %v597, %v599
  %v601 = vsel %vm589, %v579, %v582
  %v602 = vsel %vm592, %v588, 1326507024
  %v603 = vsel %vm591, %v585, %v602
  %v604 = vsel %vm590, %v601, %v603
  %v605 = vshll.u32 %v565, 8
  %v606 = vmul.u32.u64.compose %v605, %v604
  %v607 = vextract.low.u32 %v606
  %v608 = vextract.high.u32 %v606
  %v609 = vmul.u32.u64.compose %v605, %v600
  %v610 = vextract.low.u32 %v609
  %v611 = vextract.high.u32 %v609
  %v612 = vmul.u32 %v605, %v596
  %v613 = vadd.s32 %v608, %v610
  %vm614 = vc.u32 %v608, %v610
  %v615 = vadd.s32 %v611, 1
  %v616 = vsel %vm614, %v615, %v611
  %v617 = vadd.s32 %v612, %v616
  %v618 = vadd.s32 %v617, 536870912
  %v619 = vshrl.u32 %v618, 30
  %v620 = vshll.u32 %v619, 30
  %v621 = vsub.s32 %v617, %v620
  %vm622 = vcmp.lt.s32.totalorder %v621, 0
  %v623 = vsub.s32 0, %v621
  %v624 = vsel %vm622, %v623, %v621
  %v625 = vclz %v624
  %v626 = vsub.s32 %v625, 2
  %vm627 = vcmp.gt.s32.totalorder 0, %v626
  %v628 = vsel %vm627, 0, %v626
  %v629 = vsub.s32 32, %v628
  %v630 = vshll.u32 %v621, %v628
  %v631 = vshrl.u32 %v613, %v629
  %v632 = vor.u32 %v630, %v631
  %v633 = vsub.s32 4294967266, %v628
  %v634 = vadd.s32 %v633, 127
  %v635 = vshll.u32 %v634, 23
  %v636 = vor.u32 4788187, %v635
  %v637 = vand.u32 2147483647, %v636
  %v639 = vcvt.s32.f32 %v632
  %v640 = vmul.f32 %v639, %v637
  %v641 = vxor.u32 %v640, 2147483648
  %v642 = vsel %vm559, %v641, %v640
  %v643 = vsub.s32 4, %v619
  %v644 = vsel %vm559, %v643, %v619
  %v645 = vsel %vm558, %v133, %v642
  %v646 = vsel %vm558, 0, %v644
  %v647 = vcosq.f32.pop %v645
  %v648 = vsinq.f32.pop %v645
  %vm649 = vweird.f32 %v133
  %v650 = vand.u32 %v646, 3
  %vm651 = vcmp.lt.s32.totalorder %v650, 2
  %vm652 = vcmp.eq.s32.totalorder %v650, 0
  %v653 = vxor.u32 %v648, 2147483648
  %v654 = vsel %vm652, %v647, %v653
  %vm655 = vcmp.eq.s32.totalorder %v650, 2
  %v656 = vxor.u32 %v647, 2147483648
  %v657 = vsel %vm655, %v656, %v648
  %v658 = vsel %vm651, %v654, %v657
  %v659 = vsel %vm649, nan, %v658
  %v660 = vand.u32 2147483647, %v134
  %vm661 = vcmp.le.f32.partialorder %v660, 0.7853982
  %vm662 = vcmp.lt.s32.totalorder %v134, 0
  %v663 = vand.u32 %v134, 2139095040
  %v664 = vshrl.u32 %v663, 23
  %v665 = vsub.s32 %v664, 127
  %v666 = vand.u32 2147483647, %v134
  %v667 = vand.u32 %v666, 8388607
  %v668 = vor.u32 %v667, 8388608
  %v669 = vsub.s32 0, %v668
  %v670 = vadd.s32 %v665, 1
  %vm671 = vcmp.gt.s32.totalorder %v670, 0
  %v672 = vsel %vm671, %v670, 0
  %v673 = vshrl.u32 %v672, 5
  %v674 = vand.u32 %v672, 31
  %v675 = vsub.s32 32, %v674
  %v676 = vshrl.u32 683565275, %v675
  %v677 = vshll.u32 683565275, %v674
  %v678 = vshrl.u32 2475754826, %v675
  %v679 = vor.u32 %v677, %v678
  %v680 = vshll.u32 2475754826, %v674
  %v681 = vshrl.u32 2131351028, %v675
  %v682 = vor.u32 %v680, %v681
  %v683 = vshll.u32 2131351028, %v674
  %v684 = vshrl.u32 2102212464, %v675
  %v685 = vor.u32 %v683, %v684
  %v686 = vshll.u32 2102212464, %v674
  %v687 = vshrl.u32 920167782, %v675
  %v688 = vor.u32 %v686, %v687
  %v689 = vshll.u32 920167782, %v674
  %v690 = vshrl.u32 1326507024, %v675
  %v691 = vor.u32 %v689, %v690
  %vm692 = vcmp.lt.s32.totalorder %v673, 1
  %vm693 = vcmp.lt.s32.totalorder %v673, 2
  %vm694 = vcmp.lt.s32.totalorder %v673, 3
  %vm695 = vcmp.lt.s32.totalorder %v673, 4
  %v696 = vsel %vm692, %v676, %v679
  %v697 = vsel %vm695, %v685, 2102212464
  %v698 = vsel %vm694, %v682, %v697
  %v699 = vsel %vm693, %v696, %v698
  %v700 = vsel %vm692, %v679, %v682
  %v701 = vsel %vm695, %v688, 920167782
  %v702 = vsel %vm694, %v685, %v701
  %v703 = vsel %vm693, %v700, %v702
  %v704 = vsel %vm692, %v682, %v685
  %v705 = vsel %vm695, %v691, 1326507024
  %v706 = vsel %vm694, %v688, %v705
  %v707 = vsel %vm693, %v704, %v706
  %v708 = vshll.u32 %v668, 8
  %v709 = vmul.u32.u64.compose %v708, %v707
  %v710 = vextract.low.u32 %v709
  %v711 = vextract.high.u32 %v709
  %v712 = vmul.u32.u64.compose %v708, %v703
  %v713 = vextract.low.u32 %v712
  %v714 = vextract.high.u32 %v712
  %v715 = vmul.u32 %v708, %v699
  %v716 = vadd.s32 %v711, %v713
  %vm717 = vc.u32 %v711, %v713
  %v718 = vadd.s32 %v714, 1
  %v719 = vsel %vm717, %v718, %v714
  %v720 = vadd.s32 %v715, %v719
  %v721 = vadd.s32 %v720, 536870912
  %v722 = vshrl.u32 %v721, 30
  %v723 = vshll.u32 %v722, 30
  %v724 = vsub.s32 %v720, %v723
  %vm725 = vcmp.lt.s32.totalorder %v724, 0
  %v726 = vsub.s32 0, %v724
  %v727 = vsel %vm725, %v726, %v724
  %v728 = vclz %v727
  %v729 = vsub.s32 %v728, 2
  %vm730 = vcmp.gt.s32.totalorder 0, %v729
  %v731 = vsel %vm730, 0, %v729
  %v732 = vsub.s32 32, %v731
  %v733 = vshll.u32 %v724, %v731
  %v734 = vshrl.u32 %v716, %v732
  %v735 = vor.u32 %v733, %v734
  %v736 = vsub.s32 4294967266, %v731
  %v737 = vadd.s32 %v736, 127
  %v738 = vshll.u32 %v737, 23
  %v739 = vor.u32 4788187, %v738
  %v740 = vand.u32 2147483647, %v739
  %v742 = vcvt.s32.f32 %v735
  %v743 = vmul.f32 %v742, %v740
  %v744 = vxor.u32 %v743, 2147483648
  %v745 = vsel %vm662, %v744, %v743
  %v746 = vsub.s32 4, %v722
  %v747 = vsel %vm662, %v746, %v722
  %v748 = vsel %vm661, %v134, %v745
  %v749 = vsel %vm661, 0, %v747
  %v750 = vcosq.f32.pop %v748
  %v751 = vsinq.f32.pop %v748
  %vm752 = vweird.f32 %v134
  %v753 = vand.u32 %v749, 3
  %vm754 = vcmp.lt.s32.totalorder %v753, 2
  %vm755 = vcmp.eq.s32.totalorder %v753, 0
  %v756 = vxor.u32 %v751, 2147483648
  %v757 = vsel %vm755, %v750, %v756
  %vm758 = vcmp.eq.s32.totalorder %v753, 2
  %v759 = vxor.u32 %v750, 2147483648
  %v760 = vsel %vm758, %v759, %v751
  %v761 = vsel %vm754, %v757, %v760
  %v762 = vsel %vm752, nan, %v761
  %v763 = vand.u32 2147483647, %v135
  %vm764 = vcmp.le.f32.partialorder %v763, 0.7853982
  %vm765 = vcmp.lt.s32.totalorder %v135, 0
  %v766 = vand.u32 %v135, 2139095040
  %v767 = vshrl.u32 %v766, 23
  %v768 = vsub.s32 %v767, 127
  %v769 = vand.u32 2147483647, %v135
  %v770 = vand.u32 %v769, 8388607
  %v771 = vor.u32 %v770, 8388608
  %v772 = vsub.s32 0, %v771
  %v773 = vadd.s32 %v768, 1
  %vm774 = vcmp.gt.s32.totalorder %v773, 0
  %v775 = vsel %vm774, %v773, 0
  %v776 = vshrl.u32 %v775, 5
  %v777 = vand.u32 %v775, 31
  %v778 = vsub.s32 32, %v777
  %v779 = vshrl.u32 683565275, %v778
  %v780 = vshll.u32 683565275, %v777
  %v781 = vshrl.u32 2475754826, %v778
  %v782 = vor.u32 %v780, %v781
  %v783 = vshll.u32 2475754826, %v777
  %v784 = vshrl.u32 2131351028, %v778
  %v785 = vor.u32 %v783, %v784
  %v786 = vshll.u32 2131351028, %v777
  %v787 = vshrl.u32 2102212464, %v778
  %v788 = vor.u32 %v786, %v787
  %v789 = vshll.u32 2102212464, %v777
  %v790 = vshrl.u32 920167782, %v778
  %v791 = vor.u32 %v789, %v790
  %v792 = vshll.u32 920167782, %v777
  %v793 = vshrl.u32 1326507024, %v778
  %v794 = vor.u32 %v792, %v793
  %vm795 = vcmp.lt.s32.totalorder %v776, 1
  %vm796 = vcmp.lt.s32.totalorder %v776, 2
  %vm797 = vcmp.lt.s32.totalorder %v776, 3
  %vm798 = vcmp.lt.s32.totalorder %v776, 4
  %v799 = vsel %vm795, %v779, %v782
  %v800 = vsel %vm798, %v788, 2102212464
  %v801 = vsel %vm797, %v785, %v800
  %v802 = vsel %vm796, %v799, %v801
  %v803 = vsel %vm795, %v782, %v785
  %v804 = vsel %vm798, %v791, 920167782
  %v805 = vsel %vm797, %v788, %v804
  %v806 = vsel %vm796, %v803, %v805
  %v807 = vsel %vm795, %v785, %v788
  %v808 = vsel %vm798, %v794, 1326507024
  %v809 = vsel %vm797, %v791, %v808
  %v810 = vsel %vm796, %v807, %v809
  %v811 = vshll.u32 %v771, 8
  %v812 = vmul.u32.u64.compose %v811, %v810
  %v813 = vextract.low.u32 %v812
  %v814 = vextract.high.u32 %v812
  %v815 = vmul.u32.u64.compose %v811, %v806
  %v816 = vextract.low.u32 %v815
  %v817 = vextract.high.u32 %v815
  %v818 = vmul.u32 %v811, %v802
  %v819 = vadd.s32 %v814, %v816
  %vm820 = vc.u32 %v814, %v816
  %v821 = vadd.s32 %v817, 1
  %v822 = vsel %vm820, %v821, %v817
  %v823 = vadd.s32 %v818, %v822
  %v824 = vadd.s32 %v823, 536870912
  %v825 = vshrl.u32 %v824, 30
  %v826 = vshll.u32 %v825, 30
  %v827 = vsub.s32 %v823, %v826
  %vm828 = vcmp.lt.s32.totalorder %v827, 0
  %v829 = vsub.s32 0, %v827
  %v830 = vsel %vm828, %v829, %v827
  %v831 = vclz %v830
  %v832 = vsub.s32 %v831, 2
  %vm833 = vcmp.gt.s32.totalorder 0, %v832
  %v834 = vsel %vm833, 0, %v832
  %v835 = vsub.s32 32, %v834
  %v836 = vshll.u32 %v827, %v834
  %v837 = vshrl.u32 %v819, %v835
  %v838 = vor.u32 %v836, %v837
  %v839 = vsub.s32 4294967266, %v834
  %v840 = vadd.s32 %v839, 127
  %v841 = vshll.u32 %v840, 23
  %v842 = vor.u32 4788187, %v841
  %v843 = vand.u32 2147483647, %v842
  %v845 = vcvt.s32.f32 %v838
  %v846 = vmul.f32 %v845, %v843
  %v847 = vxor.u32 %v846, 2147483648
  %v848 = vsel %vm765, %v847, %v846
  %v849 = vsub.s32 4, %v825
  %v850 = vsel %vm765, %v849, %v825
  %v851 = vsel %vm764, %v135, %v848
  %v852 = vsel %vm764, 0, %v850
  %v853 = vcosq.f32.pop %v851
  %v854 = vsinq.f32.pop %v851
  %vm855 = vweird.f32 %v135
  %v856 = vand.u32 %v852, 3
  %vm857 = vcmp.lt.s32.totalorder %v856, 2
  %vm858 = vcmp.eq.s32.totalorder %v856, 0
  %v859 = vxor.u32 %v854, 2147483648
  %v860 = vsel %vm858, %v853, %v859
  %vm861 = vcmp.eq.s32.totalorder %v856, 2
  %v862 = vxor.u32 %v853, 2147483648
  %v863 = vsel %vm861, %v862, %v854
  %v864 = vsel %vm857, %v860, %v863
  %v865 = vsel %vm855, nan, %v864
  %v866 = vand.u32 2147483647, %v136
  %vm867 = vcmp.le.f32.partialorder %v866, 0.7853982
  %vm868 = vcmp.lt.s32.totalorder %v136, 0
  %v869 = vand.u32 %v136, 2139095040
  %v870 = vshrl.u32 %v869, 23
  %v871 = vsub.s32 %v870, 127
  %v872 = vand.u32 2147483647, %v136
  %v873 = vand.u32 %v872, 8388607
  %v874 = vor.u32 %v873, 8388608
  %v875 = vsub.s32 0, %v874
  %v876 = vadd.s32 %v871, 1
  %vm877 = vcmp.gt.s32.totalorder %v876, 0
  %v878 = vsel %vm877, %v876, 0
  %v879 = vshrl.u32 %v878, 5
  %v880 = vand.u32 %v878, 31
  %v881 = vsub.s32 32, %v880
  %v882 = vshrl.u32 683565275, %v881
  %v883 = vshll.u32 683565275, %v880
  %v884 = vshrl.u32 2475754826, %v881
  %v885 = vor.u32 %v883, %v884
  %v886 = vshll.u32 2475754826, %v880
  %v887 = vshrl.u32 2131351028, %v881
  %v888 = vor.u32 %v886, %v887
  %v889 = vshll.u32 2131351028, %v880
  %v890 = vshrl.u32 2102212464, %v881
  %v891 = vor.u32 %v889, %v890
  %v892 = vshll.u32 2102212464, %v880
  %v893 = vshrl.u32 920167782, %v881
  %v894 = vor.u32 %v892, %v893
  %v895 = vshll.u32 920167782, %v880
  %v896 = vshrl.u32 1326507024, %v881
  %v897 = vor.u32 %v895, %v896
  %vm898 = vcmp.lt.s32.totalorder %v879, 1
  %vm899 = vcmp.lt.s32.totalorder %v879, 2
  %vm900 = vcmp.lt.s32.totalorder %v879, 3
  %vm901 = vcmp.lt.s32.totalorder %v879, 4
  %v902 = vsel %vm898, %v882, %v885
  %v903 = vsel %vm901, %v891, 2102212464
  %v904 = vsel %vm900, %v888, %v903
  %v905 = vsel %vm899, %v902, %v904
  %v906 = vsel %vm898, %v885, %v888
  %v907 = vsel %vm901, %v894, 920167782
  %v908 = vsel %vm900, %v891, %v907
  %v909 = vsel %vm899, %v906, %v908
  %v910 = vsel %vm898, %v888, %v891
  %v911 = vsel %vm901, %v897, 1326507024
  %v912 = vsel %vm900, %v894, %v911
  %v913 = vsel %vm899, %v910, %v912
  %v914 = vshll.u32 %v874, 8
  %v915 = vmul.u32.u64.compose %v914, %v913
  %v916 = vextract.low.u32 %v915
  %v917 = vextract.high.u32 %v915
  %v918 = vmul.u32.u64.compose %v914, %v909
  %v919 = vextract.low.u32 %v918
  %v920 = vextract.high.u32 %v918
  %v921 = vmul.u32 %v914, %v905
  %v922 = vadd.s32 %v917, %v919
  %vm923 = vc.u32 %v917, %v919
  %v924 = vadd.s32 %v920, 1
  %v925 = vsel %vm923, %v924, %v920
  %v926 = vadd.s32 %v921, %v925
  %v927 = vadd.s32 %v926, 536870912
  %v928 = vshrl.u32 %v927, 30
  %v929 = vshll.u32 %v928, 30
  %v930 = vsub.s32 %v926, %v929
  %vm931 = vcmp.lt.s32.totalorder %v930, 0
  %v932 = vsub.s32 0, %v930
  %v933 = vsel %vm931, %v932, %v930
  %v934 = vclz %v933
  %v935 = vsub.s32 %v934, 2
  %vm936 = vcmp.gt.s32.totalorder 0, %v935
  %v937 = vsel %vm936, 0, %v935
  %v938 = vsub.s32 32, %v937
  %v939 = vshll.u32 %v930, %v937
  %v940 = vshrl.u32 %v922, %v938
  %v941 = vor.u32 %v939, %v940
  %v942 = vsub.s32 4294967266, %v937
  %v943 = vadd.s32 %v942, 127
  %v944 = vshll.u32 %v943, 23
  %v945 = vor.u32 4788187, %v944
  %v946 = vand.u32 2147483647, %v945
  %v948 = vcvt.s32.f32 %v941
  %v949 = vmul.f32 %v948, %v946
  %v950 = vxor.u32 %v949, 2147483648
  %v951 = vsel %vm868, %v950, %v949
  %v952 = vsub.s32 4, %v928
  %v953 = vsel %vm868, %v952, %v928
  %v954 = vsel %vm867, %v136, %v951
  %v955 = vsel %vm867, 0, %v953
  %v956 = vcosq.f32.pop %v954
  %v957 = vsinq.f32.pop %v954
  %vm958 = vweird.f32 %v136
  %v959 = vand.u32 %v955, 3
  %vm960 = vcmp.lt.s32.totalorder %v959, 2
  %vm961 = vcmp.eq.s32.totalorder %v959, 0
  %v962 = vxor.u32 %v957, 2147483648
  %v963 = vsel %vm961, %v956, %v962
  %vm964 = vcmp.eq.s32.totalorder %v959, 2
  %v965 = vxor.u32 %v956, 2147483648
  %v966 = vsel %vm964, %v965, %v957
  %v967 = vsel %vm960, %v963, %v966
  %v968 = vsel %vm958, nan, %v967
  %v969 = vand.u32 2147483647, %v137
  %vm970 = vcmp.le.f32.partialorder %v969, 0.7853982
  %vm971 = vcmp.lt.s32.totalorder %v137, 0
  %v972 = vand.u32 %v137, 2139095040
  %v973 = vshrl.u32 %v972, 23
  %v974 = vsub.s32 %v973, 127
  %v975 = vand.u32 2147483647, %v137
  %v976 = vand.u32 %v975, 8388607
  %v977 = vor.u32 %v976, 8388608
  %v978 = vsub.s32 0, %v977
  %v979 = vadd.s32 %v974, 1
  %vm980 = vcmp.gt.s32.totalorder %v979, 0
  %v981 = vsel %vm980, %v979, 0
  %v982 = vshrl.u32 %v981, 5
  %v983 = vand.u32 %v981, 31
  %v984 = vsub.s32 32, %v983
  %v985 = vshrl.u32 683565275, %v984
  %v986 = vshll.u32 683565275, %v983
  %v987 = vshrl.u32 2475754826, %v984
  %v988 = vor.u32 %v986, %v987
  %v989 = vshll.u32 2475754826, %v983
  %v990 = vshrl.u32 2131351028, %v984
  %v991 = vor.u32 %v989, %v990
  %v992 = vshll.u32 2131351028, %v983
  %v993 = vshrl.u32 2102212464, %v984
  %v994 = vor.u32 %v992, %v993
  %v995 = vshll.u32 2102212464, %v983
  %v996 = vshrl.u32 920167782, %v984
  %v997 = vor.u32 %v995, %v996
  %v998 = vshll.u32 920167782, %v983
  %v999 = vshrl.u32 1326507024, %v984
  %v1000 = vor.u32 %v998, %v999
  %vm1001 = vcmp.lt.s32.totalorder %v982, 1
  %vm1002 = vcmp.lt.s32.totalorder %v982, 2
  %vm1003 = vcmp.lt.s32.totalorder %v982, 3
  %vm1004 = vcmp.lt.s32.totalorder %v982, 4
  %v1005 = vsel %vm1001, %v985, %v988
  %v1006 = vsel %vm1004, %v994, 2102212464
  %v1007 = vsel %vm1003, %v991, %v1006
  %v1008 = vsel %vm1002, %v1005, %v1007
  %v1009 = vsel %vm1001, %v988, %v991
  %v1010 = vsel %vm1004, %v997, 920167782
  %v1011 = vsel %vm1003, %v994, %v1010
  %v1012 = vsel %vm1002, %v1009, %v1011
  %v1013 = vsel %vm1001, %v991, %v994
  %v1014 = vsel %vm1004, %v1000, 1326507024
  %v1015 = vsel %vm1003, %v997, %v1014
  %v1016 = vsel %vm1002, %v1013, %v1015
  %v1017 = vshll.u32 %v977, 8
  %v1018 = vmul.u32.u64.compose %v1017, %v1016
  %v1019 = vextract.low.u32 %v1018
  %v1020 = vextract.high.u32 %v1018
  %v1021 = vmul.u32.u64.compose %v1017, %v1012
  %v1022 = vextract.low.u32 %v1021
  %v1023 = vextract.high.u32 %v1021
  %v1024 = vmul.u32 %v1017, %v1008
  %v1025 = vadd.s32 %v1020, %v1022
  %vm1026 = vc.u32 %v1020, %v1022
  %v1027 = vadd.s32 %v1023, 1
  %v1028 = vsel %vm1026, %v1027, %v1023
  %v1029 = vadd.s32 %v1024, %v1028
  %v1030 = vadd.s32 %v1029, 536870912
  %v1031 = vshrl.u32 %v1030, 30
  %v1032 = vshll.u32 %v1031, 30
  %v1033 = vsub.s32 %v1029, %v1032
  %vm1034 = vcmp.lt.s32.totalorder %v1033, 0
  %v1035 = vsub.s32 0, %v1033
  %v1036 = vsel %vm1034, %v1035, %v1033
  %v1037 = vclz %v1036
  %v1038 = vsub.s32 %v1037, 2
  %vm1039 = vcmp.gt.s32.totalorder 0, %v1038
  %v1040 = vsel %vm1039, 0, %v1038
  %v1041 = vsub.s32 32, %v1040
  %v1042 = vshll.u32 %v1033, %v1040
  %v1043 = vshrl.u32 %v1025, %v1041
  %v1044 = vor.u32 %v1042, %v1043
  %v1045 = vsub.s32 4294967266, %v1040
  %v1046 = vadd.s32 %v1045, 127
  %v1047 = vshll.u32 %v1046, 23
  %v1048 = vor.u32 4788187, %v1047
  %v1049 = vand.u32 2147483647, %v1048
  %v1051 = vcvt.s32.f32 %v1044
  %v1052 = vmul.f32 %v1051, %v1049
  %v1053 = vxor.u32 %v1052, 2147483648
  %v1054 = vsel %vm971, %v1053, %v1052
  %v1055 = vsub.s32 4, %v1031
  %v1056 = vsel %vm971, %v1055, %v1031
  %v1057 = vsel %vm970, %v137, %v1054
  %v1058 = vsel %vm970, 0, %v1056
  %v1059 = vcosq.f32.pop %v1057
  %v1060 = vsinq.f32.pop %v1057
  %vm1061 = vweird.f32 %v137
  %v1062 = vand.u32 %v1058, 3
  %vm1063 = vcmp.lt.s32.totalorder %v1062, 2
  %vm1064 = vcmp.eq.s32.totalorder %v1062, 0
  %v1065 = vxor.u32 %v1060, 2147483648
  %v1066 = vsel %vm1064, %v1059, %v1065
  %vm1067 = vcmp.eq.s32.totalorder %v1062, 2
  %v1068 = vxor.u32 %v1059, 2147483648
  %v1069 = vsel %vm1067, %v1068, %v1060
  %v1070 = vsel %vm1063, %v1066, %v1069
  %v1071 = vsel %vm1061, nan, %v1070
  %v1072 = vand.u32 2147483647, %v138
  %vm1073 = vcmp.le.f32.partialorder %v1072, 0.7853982
  %vm1074 = vcmp.lt.s32.totalorder %v138, 0
  %v1075 = vand.u32 %v138, 2139095040
  %v1076 = vshrl.u32 %v1075, 23
  %v1077 = vsub.s32 %v1076, 127
  %v1078 = vand.u32 2147483647, %v138
  %v1079 = vand.u32 %v1078, 8388607
  %v1080 = vor.u32 %v1079, 8388608
  %v1081 = vsub.s32 0, %v1080
  %v1082 = vadd.s32 %v1077, 1
  %vm1083 = vcmp.gt.s32.totalorder %v1082, 0
  %v1084 = vsel %vm1083, %v1082, 0
  %v1085 = vshrl.u32 %v1084, 5
  %v1086 = vand.u32 %v1084, 31
  %v1087 = vsub.s32 32, %v1086
  %v1088 = vshrl.u32 683565275, %v1087
  %v1089 = vshll.u32 683565275, %v1086
  %v1090 = vshrl.u32 2475754826, %v1087
  %v1091 = vor.u32 %v1089, %v1090
  %v1092 = vshll.u32 2475754826, %v1086
  %v1093 = vshrl.u32 2131351028, %v1087
  %v1094 = vor.u32 %v1092, %v1093
  %v1095 = vshll.u32 2131351028, %v1086
  %v1096 = vshrl.u32 2102212464, %v1087
  %v1097 = vor.u32 %v1095, %v1096
  %v1098 = vshll.u32 2102212464, %v1086
  %v1099 = vshrl.u32 920167782, %v1087
  %v1100 = vor.u32 %v1098, %v1099
  %v1101 = vshll.u32 920167782, %v1086
  %v1102 = vshrl.u32 1326507024, %v1087
  %v1103 = vor.u32 %v1101, %v1102
  %vm1104 = vcmp.lt.s32.totalorder %v1085, 1
  %vm1105 = vcmp.lt.s32.totalorder %v1085, 2
  %vm1106 = vcmp.lt.s32.totalorder %v1085, 3
  %vm1107 = vcmp.lt.s32.totalorder %v1085, 4
  %v1108 = vsel %vm1104, %v1088, %v1091
  %v1109 = vsel %vm1107, %v1097, 2102212464
  %v1110 = vsel %vm1106, %v1094, %v1109
  %v1111 = vsel %vm1105, %v1108, %v1110
  %v1112 = vsel %vm1104, %v1091, %v1094
  %v1113 = vsel %vm1107, %v1100, 920167782
  %v1114 = vsel %vm1106, %v1097, %v1113
  %v1115 = vsel %vm1105, %v1112, %v1114
  %v1116 = vsel %vm1104, %v1094, %v1097
  %v1117 = vsel %vm1107, %v1103, 1326507024
  %v1118 = vsel %vm1106, %v1100, %v1117
  %v1119 = vsel %vm1105, %v1116, %v1118
  %v1120 = vshll.u32 %v1080, 8
  %v1121 = vmul.u32.u64.compose %v1120, %v1119
  %v1122 = vextract.low.u32 %v1121
  %v1123 = vextract.high.u32 %v1121
  %v1124 = vmul.u32.u64.compose %v1120, %v1115
  %v1125 = vextract.low.u32 %v1124
  %v1126 = vextract.high.u32 %v1124
  %v1127 = vmul.u32 %v1120, %v1111
  %v1128 = vadd.s32 %v1123, %v1125
  %vm1129 = vc.u32 %v1123, %v1125
  %v1130 = vadd.s32 %v1126, 1
  %v1131 = vsel %vm1129, %v1130, %v1126
  %v1132 = vadd.s32 %v1127, %v1131
  %v1133 = vadd.s32 %v1132, 536870912
  %v1134 = vshrl.u32 %v1133, 30
  %v1135 = vshll.u32 %v1134, 30
  %v1136 = vsub.s32 %v1132, %v1135
  %vm1137 = vcmp.lt.s32.totalorder %v1136, 0
  %v1138 = vsub.s32 0, %v1136
  %v1139 = vsel %vm1137, %v1138, %v1136
  %v1140 = vclz %v1139
  %v1141 = vsub.s32 %v1140, 2
  %vm1142 = vcmp.gt.s32.totalorder 0, %v1141
  %v1143 = vsel %vm1142, 0, %v1141
  %v1144 = vsub.s32 32, %v1143
  %v1145 = vshll.u32 %v1136, %v1143
  %v1146 = vshrl.u32 %v1128, %v1144
  %v1147 = vor.u32 %v1145, %v1146
  %v1148 = vsub.s32 4294967266, %v1143
  %v1149 = vadd.s32 %v1148, 127
  %v1150 = vshll.u32 %v1149, 23
  %v1151 = vor.u32 4788187, %v1150
  %v1152 = vand.u32 2147483647, %v1151
  %v1154 = vcvt.s32.f32 %v1147
  %v1155 = vmul.f32 %v1154, %v1152
  %v1156 = vxor.u32 %v1155, 2147483648
  %v1157 = vsel %vm1074, %v1156, %v1155
  %v1158 = vsub.s32 4, %v1134
  %v1159 = vsel %vm1074, %v1158, %v1134
  %v1160 = vsel %vm1073, %v138, %v1157
  %v1161 = vsel %vm1073, 0, %v1159
  %v1162 = vcosq.f32.pop %v1160
  %v1163 = vsinq.f32.pop %v1160
  %vm1164 = vweird.f32 %v138
  %v1165 = vand.u32 %v1161, 3
  %vm1166 = vcmp.lt.s32.totalorder %v1165, 2
  %vm1167 = vcmp.eq.s32.totalorder %v1165, 0
  %v1168 = vxor.u32 %v1163, 2147483648
  %v1169 = vsel %vm1167, %v1162, %v1168
  %vm1170 = vcmp.eq.s32.totalorder %v1165, 2
  %v1171 = vxor.u32 %v1162, 2147483648
  %v1172 = vsel %vm1170, %v1171, %v1163
  %v1173 = vsel %vm1166, %v1169, %v1172
  %v1174 = vsel %vm1164, nan, %v1173
  %v1175 = vand.u32 2147483647, %v139
  %vm1176 = vcmp.le.f32.partialorder %v1175, 0.7853982
  %vm1177 = vcmp.lt.s32.totalorder %v139, 0
  %v1178 = vand.u32 %v139, 2139095040
  %v1179 = vshrl.u32 %v1178, 23
  %v1180 = vsub.s32 %v1179, 127
  %v1181 = vand.u32 2147483647, %v139
  %v1182 = vand.u32 %v1181, 8388607
  %v1183 = vor.u32 %v1182, 8388608
  %v1184 = vsub.s32 0, %v1183
  %v1185 = vadd.s32 %v1180, 1
  %vm1186 = vcmp.gt.s32.totalorder %v1185, 0
  %v1187 = vsel %vm1186, %v1185, 0
  %v1188 = vshrl.u32 %v1187, 5
  %v1189 = vand.u32 %v1187, 31
  %v1190 = vsub.s32 32, %v1189
  %v1191 = vshrl.u32 683565275, %v1190
  %v1192 = vshll.u32 683565275, %v1189
  %v1193 = vshrl.u32 2475754826, %v1190
  %v1194 = vor.u32 %v1192, %v1193
  %v1195 = vshll.u32 2475754826, %v1189
  %v1196 = vshrl.u32 2131351028, %v1190
  %v1197 = vor.u32 %v1195, %v1196
  %v1198 = vshll.u32 2131351028, %v1189
  %v1199 = vshrl.u32 2102212464, %v1190
  %v1200 = vor.u32 %v1198, %v1199
  %v1201 = vshll.u32 2102212464, %v1189
  %v1202 = vshrl.u32 920167782, %v1190
  %v1203 = vor.u32 %v1201, %v1202
  %v1204 = vshll.u32 920167782, %v1189
  %v1205 = vshrl.u32 1326507024, %v1190
  %v1206 = vor.u32 %v1204, %v1205
  %vm1207 = vcmp.lt.s32.totalorder %v1188, 1
  %vm1208 = vcmp.lt.s32.totalorder %v1188, 2
  %vm1209 = vcmp.lt.s32.totalorder %v1188, 3
  %vm1210 = vcmp.lt.s32.totalorder %v1188, 4
  %v1211 = vsel %vm1207, %v1191, %v1194
  %v1212 = vsel %vm1210, %v1200, 2102212464
  %v1213 = vsel %vm1209, %v1197, %v1212
  %v1214 = vsel %vm1208, %v1211, %v1213
  %v1215 = vsel %vm1207, %v1194, %v1197
  %v1216 = vsel %vm1210, %v1203, 920167782
  %v1217 = vsel %vm1209, %v1200, %v1216
  %v1218 = vsel %vm1208, %v1215, %v1217
  %v1219 = vsel %vm1207, %v1197, %v1200
  %v1220 = vsel %vm1210, %v1206, 1326507024
  %v1221 = vsel %vm1209, %v1203, %v1220
  %v1222 = vsel %vm1208, %v1219, %v1221
  %v1223 = vshll.u32 %v1183, 8
  %v1224 = vmul.u32.u64.compose %v1223, %v1222
  %v1225 = vextract.low.u32 %v1224
  %v1226 = vextract.high.u32 %v1224
  %v1227 = vmul.u32.u64.compose %v1223, %v1218
  %v1228 = vextract.low.u32 %v1227
  %v1229 = vextract.high.u32 %v1227
  %v1230 = vmul.u32 %v1223, %v1214
  %v1231 = vadd.s32 %v1226, %v1228
  %vm1232 = vc.u32 %v1226, %v1228
  %v1233 = vadd.s32 %v1229, 1
  %v1234 = vsel %vm1232, %v1233, %v1229
  %v1235 = vadd.s32 %v1230, %v1234
  %v1236 = vadd.s32 %v1235, 536870912
  %v1237 = vshrl.u32 %v1236, 30
  %v1238 = vshll.u32 %v1237, 30
  %v1239 = vsub.s32 %v1235, %v1238
  %vm1240 = vcmp.lt.s32.totalorder %v1239, 0
  %v1241 = vsub.s32 0, %v1239
  %v1242 = vsel %vm1240, %v1241, %v1239
  %v1243 = vclz %v1242
  %v1244 = vsub.s32 %v1243, 2
  %vm1245 = vcmp.gt.s32.totalorder 0, %v1244
  %v1246 = vsel %vm1245, 0, %v1244
  %v1247 = vsub.s32 32, %v1246
  %v1248 = vshll.u32 %v1239, %v1246
  %v1249 = vshrl.u32 %v1231, %v1247
  %v1250 = vor.u32 %v1248, %v1249
  %v1251 = vsub.s32 4294967266, %v1246
  %v1252 = vadd.s32 %v1251, 127
  %v1253 = vshll.u32 %v1252, 23
  %v1254 = vor.u32 4788187, %v1253
  %v1255 = vand.u32 2147483647, %v1254
  %v1257 = vcvt.s32.f32 %v1250
  %v1258 = vmul.f32 %v1257, %v1255
  %v1259 = vxor.u32 %v1258, 2147483648
  %v1260 = vsel %vm1177, %v1259, %v1258
  %v1261 = vsub.s32 4, %v1237
  %v1262 = vsel %vm1177, %v1261, %v1237
  %v1263 = vsel %vm1176, %v139, %v1260
  %v1264 = vsel %vm1176, 0, %v1262
  %v1265 = vcosq.f32.pop %v1263
  %v1266 = vsinq.f32.pop %v1263
  %vm1267 = vweird.f32 %v139
  %v1268 = vand.u32 %v1264, 3
  %vm1269 = vcmp.lt.s32.totalorder %v1268, 2
  %vm1270 = vcmp.eq.s32.totalorder %v1268, 0
  %v1271 = vxor.u32 %v1266, 2147483648
  %v1272 = vsel %vm1270, %v1265, %v1271
  %vm1273 = vcmp.eq.s32.totalorder %v1268, 2
  %v1274 = vxor.u32 %v1265, 2147483648
  %v1275 = vsel %vm1273, %v1274, %v1266
  %v1276 = vsel %vm1269, %v1272, %v1275
  %v1277 = vsel %vm1267, nan, %v1276
  %v1278 = vand.u32 2147483647, %v140
  %vm1279 = vcmp.le.f32.partialorder %v1278, 0.7853982
  %vm1280 = vcmp.lt.s32.totalorder %v140, 0
  %v1281 = vand.u32 %v140, 2139095040
  %v1282 = vshrl.u32 %v1281, 23
  %v1283 = vsub.s32 %v1282, 127
  %v1284 = vand.u32 2147483647, %v140
  %v1285 = vand.u32 %v1284, 8388607
  %v1286 = vor.u32 %v1285, 8388608
  %v1287 = vsub.s32 0, %v1286
  %v1288 = vadd.s32 %v1283, 1
  %vm1289 = vcmp.gt.s32.totalorder %v1288, 0
  %v1290 = vsel %vm1289, %v1288, 0
  %v1291 = vshrl.u32 %v1290, 5
  %v1292 = vand.u32 %v1290, 31
  %v1293 = vsub.s32 32, %v1292
  %v1294 = vshrl.u32 683565275, %v1293
  %v1295 = vshll.u32 683565275, %v1292
  %v1296 = vshrl.u32 2475754826, %v1293
  %v1297 = vor.u32 %v1295, %v1296
  %v1298 = vshll.u32 2475754826, %v1292
  %v1299 = vshrl.u32 2131351028, %v1293
  %v1300 = vor.u32 %v1298, %v1299
  %v1301 = vshll.u32 2131351028, %v1292
  %v1302 = vshrl.u32 2102212464, %v1293
  %v1303 = vor.u32 %v1301, %v1302
  %v1304 = vshll.u32 2102212464, %v1292
  %v1305 = vshrl.u32 920167782, %v1293
  %v1306 = vor.u32 %v1304, %v1305
  %v1307 = vshll.u32 920167782, %v1292
  %v1308 = vshrl.u32 1326507024, %v1293
  %v1309 = vor.u32 %v1307, %v1308
  %vm1310 = vcmp.lt.s32.totalorder %v1291, 1
  %vm1311 = vcmp.lt.s32.totalorder %v1291, 2
  %vm1312 = vcmp.lt.s32.totalorder %v1291, 3
  %vm1313 = vcmp.lt.s32.totalorder %v1291, 4
  %v1314 = vsel %vm1310, %v1294, %v1297
  %v1315 = vsel %vm1313, %v1303, 2102212464
  %v1316 = vsel %vm1312, %v1300, %v1315
  %v1317 = vsel %vm1311, %v1314, %v1316
  %v1318 = vsel %vm1310, %v1297, %v1300
  %v1319 = vsel %vm1313, %v1306, 920167782
  %v1320 = vsel %vm1312, %v1303, %v1319
  %v1321 = vsel %vm1311, %v1318, %v1320
  %v1322 = vsel %vm1310, %v1300, %v1303
  %v1323 = vsel %vm1313, %v1309, 1326507024
  %v1324 = vsel %vm1312, %v1306, %v1323
  %v1325 = vsel %vm1311, %v1322, %v1324
  %v1326 = vshll.u32 %v1286, 8
  %v1327 = vmul.u32.u64.compose %v1326, %v1325
  %v1328 = vextract.low.u32 %v1327
  %v1329 = vextract.high.u32 %v1327
  %v1330 = vmul.u32.u64.compose %v1326, %v1321
  %v1331 = vextract.low.u32 %v1330
  %v1332 = vextract.high.u32 %v1330
  %v1333 = vmul.u32 %v1326, %v1317
  %v1334 = vadd.s32 %v1329, %v1331
  %vm1335 = vc.u32 %v1329, %v1331
  %v1336 = vadd.s32 %v1332, 1
  %v1337 = vsel %vm1335, %v1336, %v1332
  %v1338 = vadd.s32 %v1333, %v1337
  %v1339 = vadd.s32 %v1338, 536870912
  %v1340 = vshrl.u32 %v1339, 30
  %v1341 = vshll.u32 %v1340, 30
  %v1342 = vsub.s32 %v1338, %v1341
  %vm1343 = vcmp.lt.s32.totalorder %v1342, 0
  %v1344 = vsub.s32 0, %v1342
  %v1345 = vsel %vm1343, %v1344, %v1342
  %v1346 = vclz %v1345
  %v1347 = vsub.s32 %v1346, 2
  %vm1348 = vcmp.gt.s32.totalorder 0, %v1347
  %v1349 = vsel %vm1348, 0, %v1347
  %v1350 = vsub.s32 32, %v1349
  %v1351 = vshll.u32 %v1342, %v1349
  %v1352 = vshrl.u32 %v1334, %v1350
  %v1353 = vor.u32 %v1351, %v1352
  %v1354 = vsub.s32 4294967266, %v1349
  %v1355 = vadd.s32 %v1354, 127
  %v1356 = vshll.u32 %v1355, 23
  %v1357 = vor.u32 4788187, %v1356
  %v1358 = vand.u32 2147483647, %v1357
  %v1360 = vcvt.s32.f32 %v1353
  %v1361 = vmul.f32 %v1360, %v1358
  %v1362 = vxor.u32 %v1361, 2147483648
  %v1363 = vsel %vm1280, %v1362, %v1361
  %v1364 = vsub.s32 4, %v1340
  %v1365 = vsel %vm1280, %v1364, %v1340
  %v1366 = vsel %vm1279, %v140, %v1363
  %v1367 = vsel %vm1279, 0, %v1365
  %v1368 = vcosq.f32.pop %v1366
  %v1369 = vsinq.f32.pop %v1366
  %vm1370 = vweird.f32 %v140
  %v1371 = vand.u32 %v1367, 3
  %vm1372 = vcmp.lt.s32.totalorder %v1371, 2
  %vm1373 = vcmp.eq.s32.totalorder %v1371, 0
  %v1374 = vxor.u32 %v1369, 2147483648
  %v1375 = vsel %vm1373, %v1368, %v1374
  %vm1376 = vcmp.eq.s32.totalorder %v1371, 2
  %v1377 = vxor.u32 %v1368, 2147483648
  %v1378 = vsel %vm1376, %v1377, %v1369
  %v1379 = vsel %vm1372, %v1375, %v1378
  %v1380 = vsel %vm1370, nan, %v1379
  %v1381 = vand.u32 2147483647, %v141
  %vm1382 = vcmp.le.f32.partialorder %v1381, 0.7853982
  %vm1383 = vcmp.lt.s32.totalorder %v141, 0
  %v1384 = vand.u32 %v141, 2139095040
  %v1385 = vshrl.u32 %v1384, 23
  %v1386 = vsub.s32 %v1385, 127
  %v1387 = vand.u32 2147483647, %v141
  %v1388 = vand.u32 %v1387, 8388607
  %v1389 = vor.u32 %v1388, 8388608
  %v1390 = vsub.s32 0, %v1389
  %v1391 = vadd.s32 %v1386, 1
  %vm1392 = vcmp.gt.s32.totalorder %v1391, 0
  %v1393 = vsel %vm1392, %v1391, 0
  %v1394 = vshrl.u32 %v1393, 5
  %v1395 = vand.u32 %v1393, 31
  %v1396 = vsub.s32 32, %v1395
  %v1397 = vshrl.u32 683565275, %v1396
  %v1398 = vshll.u32 683565275, %v1395
  %v1399 = vshrl.u32 2475754826, %v1396
  %v1400 = vor.u32 %v1398, %v1399
  %v1401 = vshll.u32 2475754826, %v1395
  %v1402 = vshrl.u32 2131351028, %v1396
  %v1403 = vor.u32 %v1401, %v1402
  %v1404 = vshll.u32 2131351028, %v1395
  %v1405 = vshrl.u32 2102212464, %v1396
  %v1406 = vor.u32 %v1404, %v1405
  %v1407 = vshll.u32 2102212464, %v1395
  %v1408 = vshrl.u32 920167782, %v1396
  %v1409 = vor.u32 %v1407, %v1408
  %v1410 = vshll.u32 920167782, %v1395
  %v1411 = vshrl.u32 1326507024, %v1396
  %v1412 = vor.u32 %v1410, %v1411
  %vm1413 = vcmp.lt.s32.totalorder %v1394, 1
  %vm1414 = vcmp.lt.s32.totalorder %v1394, 2
  %vm1415 = vcmp.lt.s32.totalorder %v1394, 3
  %vm1416 = vcmp.lt.s32.totalorder %v1394, 4
  %v1417 = vsel %vm1413, %v1397, %v1400
  %v1418 = vsel %vm1416, %v1406, 2102212464
  %v1419 = vsel %vm1415, %v1403, %v1418
  %v1420 = vsel %vm1414, %v1417, %v1419
  %v1421 = vsel %vm1413, %v1400, %v1403
  %v1422 = vsel %vm1416, %v1409, 920167782
  %v1423 = vsel %vm1415, %v1406, %v1422
  %v1424 = vsel %vm1414, %v1421, %v1423
  %v1425 = vsel %vm1413, %v1403, %v1406
  %v1426 = vsel %vm1416, %v1412, 1326507024
  %v1427 = vsel %vm1415, %v1409, %v1426
  %v1428 = vsel %vm1414, %v1425, %v1427
  %v1429 = vshll.u32 %v1389, 8
  %v1430 = vmul.u32.u64.compose %v1429, %v1428
  %v1431 = vextract.low.u32 %v1430
  %v1432 = vextract.high.u32 %v1430
  %v1433 = vmul.u32.u64.compose %v1429, %v1424
  %v1434 = vextract.low.u32 %v1433
  %v1435 = vextract.high.u32 %v1433
  %v1436 = vmul.u32 %v1429, %v1420
  %v1437 = vadd.s32 %v1432, %v1434
  %vm1438 = vc.u32 %v1432, %v1434
  %v1439 = vadd.s32 %v1435, 1
  %v1440 = vsel %vm1438, %v1439, %v1435
  %v1441 = vadd.s32 %v1436, %v1440
  %v1442 = vadd.s32 %v1441, 536870912
  %v1443 = vshrl.u32 %v1442, 30
  %v1444 = vshll.u32 %v1443, 30
  %v1445 = vsub.s32 %v1441, %v1444
  %vm1446 = vcmp.lt.s32.totalorder %v1445, 0
  %v1447 = vsub.s32 0, %v1445
  %v1448 = vsel %vm1446, %v1447, %v1445
  %v1449 = vclz %v1448
  %v1450 = vsub.s32 %v1449, 2
  %vm1451 = vcmp.gt.s32.totalorder 0, %v1450
  %v1452 = vsel %vm1451, 0, %v1450
  %v1453 = vsub.s32 32, %v1452
  %v1454 = vshll.u32 %v1445, %v1452
  %v1455 = vshrl.u32 %v1437, %v1453
  %v1456 = vor.u32 %v1454, %v1455
  %v1457 = vsub.s32 4294967266, %v1452
  %v1458 = vadd.s32 %v1457, 127
  %v1459 = vshll.u32 %v1458, 23
  %v1460 = vor.u32 4788187, %v1459
  %v1461 = vand.u32 2147483647, %v1460
  %v1463 = vcvt.s32.f32 %v1456
  %v1464 = vmul.f32 %v1463, %v1461
  %v1465 = vxor.u32 %v1464, 2147483648
  %v1466 = vsel %vm1383, %v1465, %v1464
  %v1467 = vsub.s32 4, %v1443
  %v1468 = vsel %vm1383, %v1467, %v1443
  %v1469 = vsel %vm1382, %v141, %v1466
  %v1470 = vsel %vm1382, 0, %v1468
  %v1471 = vcosq.f32.pop %v1469
  %v1472 = vsinq.f32.pop %v1469
  %vm1473 = vweird.f32 %v141
  %v1474 = vand.u32 %v1470, 3
  %vm1475 = vcmp.lt.s32.totalorder %v1474, 2
  %vm1476 = vcmp.eq.s32.totalorder %v1474, 0
  %v1477 = vxor.u32 %v1472, 2147483648
  %v1478 = vsel %vm1476, %v1471, %v1477
  %vm1479 = vcmp.eq.s32.totalorder %v1474, 2
  %v1480 = vxor.u32 %v1471, 2147483648
  %v1481 = vsel %vm1479, %v1480, %v1472
  %v1482 = vsel %vm1475, %v1478, %v1481
  %v1483 = vsel %vm1473, nan, %v1482
  %v1484 = vand.u32 2147483647, %v142
  %vm1485 = vcmp.le.f32.partialorder %v1484, 0.7853982
  %vm1486 = vcmp.lt.s32.totalorder %v142, 0
  %v1487 = vand.u32 %v142, 2139095040
  %v1488 = vshrl.u32 %v1487, 23
  %v1489 = vsub.s32 %v1488, 127
  %v1490 = vand.u32 2147483647, %v142
  %v1491 = vand.u32 %v1490, 8388607
  %v1492 = vor.u32 %v1491, 8388608
  %v1493 = vsub.s32 0, %v1492
  %v1494 = vadd.s32 %v1489, 1
  %vm1495 = vcmp.gt.s32.totalorder %v1494, 0
  %v1496 = vsel %vm1495, %v1494, 0
  %v1497 = vshrl.u32 %v1496, 5
  %v1498 = vand.u32 %v1496, 31
  %v1499 = vsub.s32 32, %v1498
  %v1500 = vshrl.u32 683565275, %v1499
  %v1501 = vshll.u32 683565275, %v1498
  %v1502 = vshrl.u32 2475754826, %v1499
  %v1503 = vor.u32 %v1501, %v1502
  %v1504 = vshll.u32 2475754826, %v1498
  %v1505 = vshrl.u32 2131351028, %v1499
  %v1506 = vor.u32 %v1504, %v1505
  %v1507 = vshll.u32 2131351028, %v1498
  %v1508 = vshrl.u32 2102212464, %v1499
  %v1509 = vor.u32 %v1507, %v1508
  %v1510 = vshll.u32 2102212464, %v1498
  %v1511 = vshrl.u32 920167782, %v1499
  %v1512 = vor.u32 %v1510, %v1511
  %v1513 = vshll.u32 920167782, %v1498
  %v1514 = vshrl.u32 1326507024, %v1499
  %v1515 = vor.u32 %v1513, %v1514
  %vm1516 = vcmp.lt.s32.totalorder %v1497, 1
  %vm1517 = vcmp.lt.s32.totalorder %v1497, 2
  %vm1518 = vcmp.lt.s32.totalorder %v1497, 3
  %vm1519 = vcmp.lt.s32.totalorder %v1497, 4
  %v1520 = vsel %vm1516, %v1500, %v1503
  %v1521 = vsel %vm1519, %v1509, 2102212464
  %v1522 = vsel %vm1518, %v1506, %v1521
  %v1523 = vsel %vm1517, %v1520, %v1522
  %v1524 = vsel %vm1516, %v1503, %v1506
  %v1525 = vsel %vm1519, %v1512, 920167782
  %v1526 = vsel %vm1518, %v1509, %v1525
  %v1527 = vsel %vm1517, %v1524, %v1526
  %v1528 = vsel %vm1516, %v1506, %v1509
  %v1529 = vsel %vm1519, %v1515, 1326507024
  %v1530 = vsel %vm1518, %v1512, %v1529
  %v1531 = vsel %vm1517, %v1528, %v1530
  %v1532 = vshll.u32 %v1492, 8
  %v1533 = vmul.u32.u64.compose %v1532, %v1531
  %v1534 = vextract.low.u32 %v1533
  %v1535 = vextract.high.u32 %v1533
  %v1536 = vmul.u32.u64.compose %v1532, %v1527
  %v1537 = vextract.low.u32 %v1536
  %v1538 = vextract.high.u32 %v1536
  %v1539 = vmul.u32 %v1532, %v1523
  %v1540 = vadd.s32 %v1535, %v1537
  %vm1541 = vc.u32 %v1535, %v1537
  %v1542 = vadd.s32 %v1538, 1
  %v1543 = vsel %vm1541, %v1542, %v1538
  %v1544 = vadd.s32 %v1539, %v1543
  %v1545 = vadd.s32 %v1544, 536870912
  %v1546 = vshrl.u32 %v1545, 30
  %v1547 = vshll.u32 %v1546, 30
  %v1548 = vsub.s32 %v1544, %v1547
  %vm1549 = vcmp.lt.s32.totalorder %v1548, 0
  %v1550 = vsub.s32 0, %v1548
  %v1551 = vsel %vm1549, %v1550, %v1548
  %v1552 = vclz %v1551
  %v1553 = vsub.s32 %v1552, 2
  %vm1554 = vcmp.gt.s32.totalorder 0, %v1553
  %v1555 = vsel %vm1554, 0, %v1553
  %v1556 = vsub.s32 32, %v1555
  %v1557 = vshll.u32 %v1548, %v1555
  %v1558 = vshrl.u32 %v1540, %v1556
  %v1559 = vor.u32 %v1557, %v1558
  %v1560 = vsub.s32 4294967266, %v1555
  %v1561 = vadd.s32 %v1560, 127
  %v1562 = vshll.u32 %v1561, 23
  %v1563 = vor.u32 4788187, %v1562
  %v1564 = vand.u32 2147483647, %v1563
  %v1566 = vcvt.s32.f32 %v1559
  %v1567 = vmul.f32 %v1566, %v1564
  %v1568 = vxor.u32 %v1567, 2147483648
  %v1569 = vsel %vm1486, %v1568, %v1567
  %v1570 = vsub.s32 4, %v1546
  %v1571 = vsel %vm1486, %v1570, %v1546
  %v1572 = vsel %vm1485, %v142, %v1569
  %v1573 = vsel %vm1485, 0, %v1571
  %v1574 = vcosq.f32.pop %v1572
  %v1575 = vsinq.f32.pop %v1572
  %vm1576 = vweird.f32 %v142
  %v1577 = vand.u32 %v1573, 3
  %vm1578 = vcmp.lt.s32.totalorder %v1577, 2
  %vm1579 = vcmp.eq.s32.totalorder %v1577, 0
  %v1580 = vxor.u32 %v1575, 2147483648
  %v1581 = vsel %vm1579, %v1574, %v1580
  %vm1582 = vcmp.eq.s32.totalorder %v1577, 2
  %v1583 = vxor.u32 %v1574, 2147483648
  %v1584 = vsel %vm1582, %v1583, %v1575
  %v1585 = vsel %vm1578, %v1581, %v1584
  %v1586 = vsel %vm1576, nan, %v1585
  %v1587 = vand.u32 2147483647, %v143
  %vm1588 = vcmp.le.f32.partialorder %v1587, 0.7853982
  %vm1589 = vcmp.lt.s32.totalorder %v143, 0
  %v1590 = vand.u32 %v143, 2139095040
  %v1591 = vshrl.u32 %v1590, 23
  %v1592 = vsub.s32 %v1591, 127
  %v1593 = vand.u32 2147483647, %v143
  %v1594 = vand.u32 %v1593, 8388607
  %v1595 = vor.u32 %v1594, 8388608
  %v1596 = vsub.s32 0, %v1595
  %v1597 = vadd.s32 %v1592, 1
  %vm1598 = vcmp.gt.s32.totalorder %v1597, 0
  %v1599 = vsel %vm1598, %v1597, 0
  %v1600 = vshrl.u32 %v1599, 5
  %v1601 = vand.u32 %v1599, 31
  %v1602 = vsub.s32 32, %v1601
  %v1603 = vshrl.u32 683565275, %v1602
  %v1604 = vshll.u32 683565275, %v1601
  %v1605 = vshrl.u32 2475754826, %v1602
  %v1606 = vor.u32 %v1604, %v1605
  %v1607 = vshll.u32 2475754826, %v1601
  %v1608 = vshrl.u32 2131351028, %v1602
  %v1609 = vor.u32 %v1607, %v1608
  %v1610 = vshll.u32 2131351028, %v1601
  %v1611 = vshrl.u32 2102212464, %v1602
  %v1612 = vor.u32 %v1610, %v1611
  %v1613 = vshll.u32 2102212464, %v1601
  %v1614 = vshrl.u32 920167782, %v1602
  %v1615 = vor.u32 %v1613, %v1614
  %v1616 = vshll.u32 920167782, %v1601
  %v1617 = vshrl.u32 1326507024, %v1602
  %v1618 = vor.u32 %v1616, %v1617
  %vm1619 = vcmp.lt.s32.totalorder %v1600, 1
  %vm1620 = vcmp.lt.s32.totalorder %v1600, 2
  %vm1621 = vcmp.lt.s32.totalorder %v1600, 3
  %vm1622 = vcmp.lt.s32.totalorder %v1600, 4
  %v1623 = vsel %vm1619, %v1603, %v1606
  %v1624 = vsel %vm1622, %v1612, 2102212464
  %v1625 = vsel %vm1621, %v1609, %v1624
  %v1626 = vsel %vm1620, %v1623, %v1625
  %v1627 = vsel %vm1619, %v1606, %v1609
  %v1628 = vsel %vm1622, %v1615, 920167782
  %v1629 = vsel %vm1621, %v1612, %v1628
  %v1630 = vsel %vm1620, %v1627, %v1629
  %v1631 = vsel %vm1619, %v1609, %v1612
  %v1632 = vsel %vm1622, %v1618, 1326507024
  %v1633 = vsel %vm1621, %v1615, %v1632
  %v1634 = vsel %vm1620, %v1631, %v1633
  %v1635 = vshll.u32 %v1595, 8
  %v1636 = vmul.u32.u64.compose %v1635, %v1634
  %v1637 = vextract.low.u32 %v1636
  %v1638 = vextract.high.u32 %v1636
  %v1639 = vmul.u32.u64.compose %v1635, %v1630
  %v1640 = vextract.low.u32 %v1639
  %v1641 = vextract.high.u32 %v1639
  %v1642 = vmul.u32 %v1635, %v1626
  %v1643 = vadd.s32 %v1638, %v1640
  %vm1644 = vc.u32 %v1638, %v1640
  %v1645 = vadd.s32 %v1641, 1
  %v1646 = vsel %vm1644, %v1645, %v1641
  %v1647 = vadd.s32 %v1642, %v1646
  %v1648 = vadd.s32 %v1647, 536870912
  %v1649 = vshrl.u32 %v1648, 30
  %v1650 = vshll.u32 %v1649, 30
  %v1651 = vsub.s32 %v1647, %v1650
  %vm1652 = vcmp.lt.s32.totalorder %v1651, 0
  %v1653 = vsub.s32 0, %v1651
  %v1654 = vsel %vm1652, %v1653, %v1651
  %v1655 = vclz %v1654
  %v1656 = vsub.s32 %v1655, 2
  %vm1657 = vcmp.gt.s32.totalorder 0, %v1656
  %v1658 = vsel %vm1657, 0, %v1656
  %v1659 = vsub.s32 32, %v1658
  %v1660 = vshll.u32 %v1651, %v1658
  %v1661 = vshrl.u32 %v1643, %v1659
  %v1662 = vor.u32 %v1660, %v1661
  %v1663 = vsub.s32 4294967266, %v1658
  %v1664 = vadd.s32 %v1663, 127
  %v1665 = vshll.u32 %v1664, 23
  %v1666 = vor.u32 4788187, %v1665
  %v1667 = vand.u32 2147483647, %v1666
  %v1669 = vcvt.s32.f32 %v1662
  %v1670 = vmul.f32 %v1669, %v1667
  %v1671 = vxor.u32 %v1670, 2147483648
  %v1672 = vsel %vm1589, %v1671, %v1670
  %v1673 = vsub.s32 4, %v1649
  %v1674 = vsel %vm1589, %v1673, %v1649
  %v1675 = vsel %vm1588, %v143, %v1672
  %v1676 = vsel %vm1588, 0, %v1674
  %v1677 = vcosq.f32.pop %v1675
  %v1678 = vsinq.f32.pop %v1675
  %vm1679 = vweird.f32 %v143
  %v1680 = vand.u32 %v1676, 3
  %vm1681 = vcmp.lt.s32.totalorder %v1680, 2
  %vm1682 = vcmp.eq.s32.totalorder %v1680, 0
  %v1683 = vxor.u32 %v1678, 2147483648
  %v1684 = vsel %vm1682, %v1677, %v1683
  %vm1685 = vcmp.eq.s32.totalorder %v1680, 2
  %v1686 = vxor.u32 %v1677, 2147483648
  %v1687 = vsel %vm1685, %v1686, %v1678
  %v1688 = vsel %vm1681, %v1684, %v1687
  %v1689 = vsel %vm1679, nan, %v1688
  %v1690 = vand.u32 2147483647, %v144
  %vm1691 = vcmp.le.f32.partialorder %v1690, 0.7853982
  %vm1692 = vcmp.lt.s32.totalorder %v144, 0
  %v1693 = vand.u32 %v144, 2139095040
  %v1694 = vshrl.u32 %v1693, 23
  %v1695 = vsub.s32 %v1694, 127
  %v1696 = vand.u32 2147483647, %v144
  %v1697 = vand.u32 %v1696, 8388607
  %v1698 = vor.u32 %v1697, 8388608
  %v1699 = vsub.s32 0, %v1698
  %v1700 = vadd.s32 %v1695, 1
  %vm1701 = vcmp.gt.s32.totalorder %v1700, 0
  %v1702 = vsel %vm1701, %v1700, 0
  %v1703 = vshrl.u32 %v1702, 5
  %v1704 = vand.u32 %v1702, 31
  %v1705 = vsub.s32 32, %v1704
  %v1706 = vshrl.u32 683565275, %v1705
  %v1707 = vshll.u32 683565275, %v1704
  %v1708 = vshrl.u32 2475754826, %v1705
  %v1709 = vor.u32 %v1707, %v1708
  %v1710 = vshll.u32 2475754826, %v1704
  %v1711 = vshrl.u32 2131351028, %v1705
  %v1712 = vor.u32 %v1710, %v1711
  %v1713 = vshll.u32 2131351028, %v1704
  %v1714 = vshrl.u32 2102212464, %v1705
  %v1715 = vor.u32 %v1713, %v1714
  %v1716 = vshll.u32 2102212464, %v1704
  %v1717 = vshrl.u32 920167782, %v1705
  %v1718 = vor.u32 %v1716, %v1717
  %v1719 = vshll.u32 920167782, %v1704
  %v1720 = vshrl.u32 1326507024, %v1705
  %v1721 = vor.u32 %v1719, %v1720
  %vm1722 = vcmp.lt.s32.totalorder %v1703, 1
  %vm1723 = vcmp.lt.s32.totalorder %v1703, 2
  %vm1724 = vcmp.lt.s32.totalorder %v1703, 3
  %vm1725 = vcmp.lt.s32.totalorder %v1703, 4
  %v1726 = vsel %vm1722, %v1706, %v1709
  %v1727 = vsel %vm1725, %v1715, 2102212464
  %v1728 = vsel %vm1724, %v1712, %v1727
  %v1729 = vsel %vm1723, %v1726, %v1728
  %v1730 = vsel %vm1722, %v1709, %v1712
  %v1731 = vsel %vm1725, %v1718, 920167782
  %v1732 = vsel %vm1724, %v1715, %v1731
  %v1733 = vsel %vm1723, %v1730, %v1732
  %v1734 = vsel %vm1722, %v1712, %v1715
  %v1735 = vsel %vm1725, %v1721, 1326507024
  %v1736 = vsel %vm1724, %v1718, %v1735
  %v1737 = vsel %vm1723, %v1734, %v1736
  %v1738 = vshll.u32 %v1698, 8
  %v1739 = vmul.u32.u64.compose %v1738, %v1737
  %v1740 = vextract.low.u32 %v1739
  %v1741 = vextract.high.u32 %v1739
  %v1742 = vmul.u32.u64.compose %v1738, %v1733
  %v1743 = vextract.low.u32 %v1742
  %v1744 = vextract.high.u32 %v1742
  %v1745 = vmul.u32 %v1738, %v1729
  %v1746 = vadd.s32 %v1741, %v1743
  %vm1747 = vc.u32 %v1741, %v1743
  %v1748 = vadd.s32 %v1744, 1
  %v1749 = vsel %vm1747, %v1748, %v1744
  %v1750 = vadd.s32 %v1745, %v1749
  %v1751 = vadd.s32 %v1750, 536870912
  %v1752 = vshrl.u32 %v1751, 30
  %v1753 = vshll.u32 %v1752, 30
  %v1754 = vsub.s32 %v1750, %v1753
  %vm1755 = vcmp.lt.s32.totalorder %v1754, 0
  %v1756 = vsub.s32 0, %v1754
  %v1757 = vsel %vm1755, %v1756, %v1754
  %v1758 = vclz %v1757
  %v1759 = vsub.s32 %v1758, 2
  %vm1760 = vcmp.gt.s32.totalorder 0, %v1759
  %v1761 = vsel %vm1760, 0, %v1759
  %v1762 = vsub.s32 32, %v1761
  %v1763 = vshll.u32 %v1754, %v1761
  %v1764 = vshrl.u32 %v1746, %v1762
  %v1765 = vor.u32 %v1763, %v1764
  %v1766 = vsub.s32 4294967266, %v1761
  %v1767 = vadd.s32 %v1766, 127
  %v1768 = vshll.u32 %v1767, 23
  %v1769 = vor.u32 4788187, %v1768
  %v1770 = vand.u32 2147483647, %v1769
  %v1772 = vcvt.s32.f32 %v1765
  %v1773 = vmul.f32 %v1772, %v1770
  %v1774 = vxor.u32 %v1773, 2147483648
  %v1775 = vsel %vm1692, %v1774, %v1773
  %v1776 = vsub.s32 4, %v1752
  %v1777 = vsel %vm1692, %v1776, %v1752
  %v1778 = vsel %vm1691, %v144, %v1775
  %v1779 = vsel %vm1691, 0, %v1777
  %v1780 = vcosq.f32.pop %v1778
  %v1781 = vsinq.f32.pop %v1778
  %vm1782 = vweird.f32 %v144
  %v1783 = vand.u32 %v1779, 3
  %vm1784 = vcmp.lt.s32.totalorder %v1783, 2
  %vm1785 = vcmp.eq.s32.totalorder %v1783, 0
  %v1786 = vxor.u32 %v1781, 2147483648
  %v1787 = vsel %vm1785, %v1780, %v1786
  %vm1788 = vcmp.eq.s32.totalorder %v1783, 2
  %v1789 = vxor.u32 %v1780, 2147483648
  %v1790 = vsel %vm1788, %v1789, %v1781
  %v1791 = vsel %vm1784, %v1787, %v1790
  %v1792 = vsel %vm1782, nan, %v1791
  %v1793 = vld [vmem:[%s2] sm:$0xff]
  %v1794 = vld [vmem:[%s2 + $0x8] sm:$0xff]
  %v1795 = vld [vmem:[%s2 + $0x10] sm:$0xff]
  %v1796 = vld [vmem:[%s2 + $0x18] sm:$0xff]
  %v1797 = vand.u32 2147483647, %v129
  %vm1798 = vcmp.le.f32.partialorder %v1797, 0.7853982
  %vm1799 = vcmp.lt.s32.totalorder %v129, 0
  %v1800 = vand.u32 %v129, 2139095040
  %v1801 = vshrl.u32 %v1800, 23
  %v1802 = vsub.s32 %v1801, 127
  %v1803 = vand.u32 2147483647, %v129
  %v1804 = vand.u32 %v1803, 8388607
  %v1805 = vor.u32 %v1804, 8388608
  %v1806 = vsub.s32 0, %v1805
  %v1807 = vadd.s32 %v1802, 1
  %vm1808 = vcmp.gt.s32.totalorder %v1807, 0
  %v1809 = vsel %vm1808, %v1807, 0
  %v1810 = vshrl.u32 %v1809, 5
  %v1811 = vand.u32 %v1809, 31
  %v1812 = vsub.s32 32, %v1811
  %v1813 = vshrl.u32 683565275, %v1812
  %v1814 = vshll.u32 683565275, %v1811
  %v1815 = vshrl.u32 2475754826, %v1812
  %v1816 = vor.u32 %v1814, %v1815
  %v1817 = vshll.u32 2475754826, %v1811
  %v1818 = vshrl.u32 2131351028, %v1812
  %v1819 = vor.u32 %v1817, %v1818
  %v1820 = vshll.u32 2131351028, %v1811
  %v1821 = vshrl.u32 2102212464, %v1812
  %v1822 = vor.u32 %v1820, %v1821
  %v1823 = vshll.u32 2102212464, %v1811
  %v1824 = vshrl.u32 920167782, %v1812
  %v1825 = vor.u32 %v1823, %v1824
  %v1826 = vshll.u32 920167782, %v1811
  %v1827 = vshrl.u32 1326507024, %v1812
  %v1828 = vor.u32 %v1826, %v1827
  %vm1829 = vcmp.lt.s32.totalorder %v1810, 1
  %vm1830 = vcmp.lt.s32.totalorder %v1810, 2
  %vm1831 = vcmp.lt.s32.totalorder %v1810, 3
  %vm1832 = vcmp.lt.s32.totalorder %v1810, 4
  %v1833 = vsel %vm1829, %v1813, %v1816
  %v1834 = vsel %vm1832, %v1822, 2102212464
  %v1835 = vsel %vm1831, %v1819, %v1834
  %v1836 = vsel %vm1830, %v1833, %v1835
  %v1837 = vsel %vm1829, %v1816, %v1819
  %v1838 = vsel %vm1832, %v1825, 920167782
  %v1839 = vsel %vm1831, %v1822, %v1838
  %v1840 = vsel %vm1830, %v1837, %v1839
  %v1841 = vsel %vm1829, %v1819, %v1822
  %v1842 = vsel %vm1832, %v1828, 1326507024
  %v1843 = vsel %vm1831, %v1825, %v1842
  %v1844 = vsel %vm1830, %v1841, %v1843
  %v1845 = vshll.u32 %v1805, 8
  %v1846 = vmul.u32.u64.compose %v1845, %v1844
  %v1847 = vextract.low.u32 %v1846
  %v1848 = vextract.high.u32 %v1846
  %v1849 = vmul.u32.u64.compose %v1845, %v1840
  %v1850 = vextract.low.u32 %v1849
  %v1851 = vextract.high.u32 %v1849
  %v1852 = vmul.u32 %v1845, %v1836
  %v1853 = vadd.s32 %v1848, %v1850
  %vm1854 = vc.u32 %v1848, %v1850
  %v1855 = vadd.s32 %v1851, 1
  %v1856 = vsel %vm1854, %v1855, %v1851
  %v1857 = vadd.s32 %v1852, %v1856
  %v1858 = vadd.s32 %v1857, 536870912
  %v1859 = vshrl.u32 %v1858, 30
  %v1860 = vshll.u32 %v1859, 30
  %v1861 = vsub.s32 %v1857, %v1860
  %vm1862 = vcmp.lt.s32.totalorder %v1861, 0
  %v1863 = vsub.s32 0, %v1861
  %v1864 = vsel %vm1862, %v1863, %v1861
  %v1865 = vclz %v1864
  %v1866 = vsub.s32 %v1865, 2
  %vm1867 = vcmp.gt.s32.totalorder 0, %v1866
  %v1868 = vsel %vm1867, 0, %v1866
  %v1869 = vsub.s32 32, %v1868
  %v1870 = vshll.u32 %v1861, %v1868
  %v1871 = vshrl.u32 %v1853, %v1869
  %v1872 = vor.u32 %v1870, %v1871
  %v1873 = vsub.s32 4294967266, %v1868
  %v1874 = vadd.s32 %v1873, 127
  %v1875 = vshll.u32 %v1874, 23
  %v1876 = vor.u32 4788187, %v1875
  %v1877 = vand.u32 2147483647, %v1876
  %v1879 = vcvt.s32.f32 %v1872
  %v1880 = vmul.f32 %v1879, %v1877
  %v1881 = vxor.u32 %v1880, 2147483648
  %v1882 = vsel %vm1799, %v1881, %v1880
  %v1883 = vsub.s32 4, %v1859
  %v1884 = vsel %vm1799, %v1883, %v1859
  %v1885 = vsel %vm1798, %v129, %v1882
  %v1886 = vsel %vm1798, 0, %v1884
  %v1887 = vcosq.f32.pop %v1885
  %v1888 = vsinq.f32.pop %v1885
  %vm1889 = vweird.f32 %v129
  %v1890 = vadd.s32 %v1886, 3
  %v1891 = vand.u32 %v1890, 3
  %vm1892 = vcmp.lt.s32.totalorder %v1891, 2
  %vm1893 = vcmp.eq.s32.totalorder %v1891, 0
  %v1894 = vxor.u32 %v1888, 2147483648
  %v1895 = vsel %vm1893, %v1887, %v1894
  %vm1896 = vcmp.eq.s32.totalorder %v1891, 2
  %v1897 = vxor.u32 %v1887, 2147483648
  %v1898 = vsel %vm1896, %v1897, %v1888
  %v1899 = vsel %vm1892, %v1895, %v1898
  %v1900 = vsel %vm1889, nan, %v1899
  %v1901 = vand.u32 2147483647, %v130
  %vm1902 = vcmp.le.f32.partialorder %v1901, 0.7853982
  %vm1903 = vcmp.lt.s32.totalorder %v130, 0
  %v1904 = vand.u32 %v130, 2139095040
  %v1905 = vshrl.u32 %v1904, 23
  %v1906 = vsub.s32 %v1905, 127
  %v1907 = vand.u32 2147483647, %v130
  %v1908 = vand.u32 %v1907, 8388607
  %v1909 = vor.u32 %v1908, 8388608
  %v1910 = vsub.s32 0, %v1909
  %v1911 = vadd.s32 %v1906, 1
  %vm1912 = vcmp.gt.s32.totalorder %v1911, 0
  %v1913 = vsel %vm1912, %v1911, 0
  %v1914 = vshrl.u32 %v1913, 5
  %v1915 = vand.u32 %v1913, 31
  %v1916 = vsub.s32 32, %v1915
  %v1917 = vshrl.u32 683565275, %v1916
  %v1918 = vshll.u32 683565275, %v1915
  %v1919 = vshrl.u32 2475754826, %v1916
  %v1920 = vor.u32 %v1918, %v1919
  %v1921 = vshll.u32 2475754826, %v1915
  %v1922 = vshrl.u32 2131351028, %v1916
  %v1923 = vor.u32 %v1921, %v1922
  %v1924 = vshll.u32 2131351028, %v1915
  %v1925 = vshrl.u32 2102212464, %v1916
  %v1926 = vor.u32 %v1924, %v1925
  %v1927 = vshll.u32 2102212464, %v1915
  %v1928 = vshrl.u32 920167782, %v1916
  %v1929 = vor.u32 %v1927, %v1928
  %v1930 = vshll.u32 920167782, %v1915
  %v1931 = vshrl.u32 1326507024, %v1916
  %v1932 = vor.u32 %v1930, %v1931
  %vm1933 = vcmp.lt.s32.totalorder %v1914, 1
  %vm1934 = vcmp.lt.s32.totalorder %v1914, 2
  %vm1935 = vcmp.lt.s32.totalorder %v1914, 3
  %vm1936 = vcmp.lt.s32.totalorder %v1914, 4
  %v1937 = vsel %vm1933, %v1917, %v1920
  %v1938 = vsel %vm1936, %v1926, 2102212464
  %v1939 = vsel %vm1935, %v1923, %v1938
  %v1940 = vsel %vm1934, %v1937, %v1939
  %v1941 = vsel %vm1933, %v1920, %v1923
  %v1942 = vsel %vm1936, %v1929, 920167782
  %v1943 = vsel %vm1935, %v1926, %v1942
  %v1944 = vsel %vm1934, %v1941, %v1943
  %v1945 = vsel %vm1933, %v1923, %v1926
  %v1946 = vsel %vm1936, %v1932, 1326507024
  %v1947 = vsel %vm1935, %v1929, %v1946
  %v1948 = vsel %vm1934, %v1945, %v1947
  %v1949 = vshll.u32 %v1909, 8
  %v1950 = vmul.u32.u64.compose %v1949, %v1948
  %v1951 = vextract.low.u32 %v1950
  %v1952 = vextract.high.u32 %v1950
  %v1953 = vmul.u32.u64.compose %v1949, %v1944
  %v1954 = vextract.low.u32 %v1953
  %v1955 = vextract.high.u32 %v1953
  %v1956 = vmul.u32 %v1949, %v1940
  %v1957 = vadd.s32 %v1952, %v1954
  %vm1958 = vc.u32 %v1952, %v1954
  %v1959 = vadd.s32 %v1955, 1
  %v1960 = vsel %vm1958, %v1959, %v1955
  %v1961 = vadd.s32 %v1956, %v1960
  %v1962 = vadd.s32 %v1961, 536870912
  %v1963 = vshrl.u32 %v1962, 30
  %v1964 = vshll.u32 %v1963, 30
  %v1965 = vsub.s32 %v1961, %v1964
  %vm1966 = vcmp.lt.s32.totalorder %v1965, 0
  %v1967 = vsub.s32 0, %v1965
  %v1968 = vsel %vm1966, %v1967, %v1965
  %v1969 = vclz %v1968
  %v1970 = vsub.s32 %v1969, 2
  %vm1971 = vcmp.gt.s32.totalorder 0, %v1970
  %v1972 = vsel %vm1971, 0, %v1970
  %v1973 = vsub.s32 32, %v1972
  %v1974 = vshll.u32 %v1965, %v1972
  %v1975 = vshrl.u32 %v1957, %v1973
  %v1976 = vor.u32 %v1974, %v1975
  %v1977 = vsub.s32 4294967266, %v1972
  %v1978 = vadd.s32 %v1977, 127
  %v1979 = vshll.u32 %v1978, 23
  %v1980 = vor.u32 4788187, %v1979
  %v1981 = vand.u32 2147483647, %v1980
  %v1983 = vcvt.s32.f32 %v1976
  %v1984 = vmul.f32 %v1983, %v1981
  %v1985 = vxor.u32 %v1984, 2147483648
  %v1986 = vsel %vm1903, %v1985, %v1984
  %v1987 = vsub.s32 4, %v1963
  %v1988 = vsel %vm1903, %v1987, %v1963
  %v1989 = vsel %vm1902, %v130, %v1986
  %v1990 = vsel %vm1902, 0, %v1988
  %v1991 = vcosq.f32.pop %v1989
  %v1992 = vsinq.f32.pop %v1989
  %vm1993 = vweird.f32 %v130
  %v1994 = vadd.s32 %v1990, 3
  %v1995 = vand.u32 %v1994, 3
  %vm1996 = vcmp.lt.s32.totalorder %v1995, 2
  %vm1997 = vcmp.eq.s32.totalorder %v1995, 0
  %v1998 = vxor.u32 %v1992, 2147483648
  %v1999 = vsel %vm1997, %v1991, %v1998
  %vm2000 = vcmp.eq.s32.totalorder %v1995, 2
  %v2001 = vxor.u32 %v1991, 2147483648
  %v2002 = vsel %vm2000, %v2001, %v1992
  %v2003 = vsel %vm1996, %v1999, %v2002
  %v2004 = vsel %vm1993, nan, %v2003
  %v2005 = vand.u32 2147483647, %v131
  %vm2006 = vcmp.le.f32.partialorder %v2005, 0.7853982
  %vm2007 = vcmp.lt.s32.totalorder %v131, 0
  %v2008 = vand.u32 %v131, 2139095040
  %v2009 = vshrl.u32 %v2008, 23
  %v2010 = vsub.s32 %v2009, 127
  %v2011 = vand.u32 2147483647, %v131
  %v2012 = vand.u32 %v2011, 8388607
  %v2013 = vor.u32 %v2012, 8388608
  %v2014 = vsub.s32 0, %v2013
  %v2015 = vadd.s32 %v2010, 1
  %vm2016 = vcmp.gt.s32.totalorder %v2015, 0
  %v2017 = vsel %vm2016, %v2015, 0
  %v2018 = vshrl.u32 %v2017, 5
  %v2019 = vand.u32 %v2017, 31
  %v2020 = vsub.s32 32, %v2019
  %v2021 = vshrl.u32 683565275, %v2020
  %v2022 = vshll.u32 683565275, %v2019
  %v2023 = vshrl.u32 2475754826, %v2020
  %v2024 = vor.u32 %v2022, %v2023
  %v2025 = vshll.u32 2475754826, %v2019
  %v2026 = vshrl.u32 2131351028, %v2020
  %v2027 = vor.u32 %v2025, %v2026
  %v2028 = vshll.u32 2131351028, %v2019
  %v2029 = vshrl.u32 2102212464, %v2020
  %v2030 = vor.u32 %v2028, %v2029
  %v2031 = vshll.u32 2102212464, %v2019
  %v2032 = vshrl.u32 920167782, %v2020
  %v2033 = vor.u32 %v2031, %v2032
  %v2034 = vshll.u32 920167782, %v2019
  %v2035 = vshrl.u32 1326507024, %v2020
  %v2036 = vor.u32 %v2034, %v2035
  %vm2037 = vcmp.lt.s32.totalorder %v2018, 1
  %vm2038 = vcmp.lt.s32.totalorder %v2018, 2
  %vm2039 = vcmp.lt.s32.totalorder %v2018, 3
  %vm2040 = vcmp.lt.s32.totalorder %v2018, 4
  %v2041 = vsel %vm2037, %v2021, %v2024
  %v2042 = vsel %vm2040, %v2030, 2102212464
  %v2043 = vsel %vm2039, %v2027, %v2042
  %v2044 = vsel %vm2038, %v2041, %v2043
  %v2045 = vsel %vm2037, %v2024, %v2027
  %v2046 = vsel %vm2040, %v2033, 920167782
  %v2047 = vsel %vm2039, %v2030, %v2046
  %v2048 = vsel %vm2038, %v2045, %v2047
  %v2049 = vsel %vm2037, %v2027, %v2030
  %v2050 = vsel %vm2040, %v2036, 1326507024
  %v2051 = vsel %vm2039, %v2033, %v2050
  %v2052 = vsel %vm2038, %v2049, %v2051
  %v2053 = vshll.u32 %v2013, 8
  %v2054 = vmul.u32.u64.compose %v2053, %v2052
  %v2055 = vextract.low.u32 %v2054
  %v2056 = vextract.high.u32 %v2054
  %v2057 = vmul.u32.u64.compose %v2053, %v2048
  %v2058 = vextract.low.u32 %v2057
  %v2059 = vextract.high.u32 %v2057
  %v2060 = vmul.u32 %v2053, %v2044
  %v2061 = vadd.s32 %v2056, %v2058
  %vm2062 = vc.u32 %v2056, %v2058
  %v2063 = vadd.s32 %v2059, 1
  %v2064 = vsel %vm2062, %v2063, %v2059
  %v2065 = vadd.s32 %v2060, %v2064
  %v2066 = vadd.s32 %v2065, 536870912
  %v2067 = vshrl.u32 %v2066, 30
  %v2068 = vshll.u32 %v2067, 30
  %v2069 = vsub.s32 %v2065, %v2068
  %vm2070 = vcmp.lt.s32.totalorder %v2069, 0
  %v2071 = vsub.s32 0, %v2069
  %v2072 = vsel %vm2070, %v2071, %v2069
  %v2073 = vclz %v2072
  %v2074 = vsub.s32 %v2073, 2
  %vm2075 = vcmp.gt.s32.totalorder 0, %v2074
  %v2076 = vsel %vm2075, 0, %v2074
  %v2077 = vsub.s32 32, %v2076
  %v2078 = vshll.u32 %v2069, %v2076
  %v2079 = vshrl.u32 %v2061, %v2077
  %v2080 = vor.u32 %v2078, %v2079
  %v2081 = vsub.s32 4294967266, %v2076
  %v2082 = vadd.s32 %v2081, 127
  %v2083 = vshll.u32 %v2082, 23
  %v2084 = vor.u32 4788187, %v2083
  %v2085 = vand.u32 2147483647, %v2084
  %v2087 = vcvt.s32.f32 %v2080
  %v2088 = vmul.f32 %v2087, %v2085
  %v2089 = vxor.u32 %v2088, 2147483648
  %v2090 = vsel %vm2007, %v2089, %v2088
  %v2091 = vsub.s32 4, %v2067
  %v2092 = vsel %vm2007, %v2091, %v2067
  %v2093 = vsel %vm2006, %v131, %v2090
  %v2094 = vsel %vm2006, 0, %v2092
  %v2095 = vcosq.f32.pop %v2093
  %v2096 = vsinq.f32.pop %v2093
  %vm2097 = vweird.f32 %v131
  %v2098 = vadd.s32 %v2094, 3
  %v2099 = vand.u32 %v2098, 3
  %vm2100 = vcmp.lt.s32.totalorder %v2099, 2
  %vm2101 = vcmp.eq.s32.totalorder %v2099, 0
  %v2102 = vxor.u32 %v2096, 2147483648
  %v2103 = vsel %vm2101, %v2095, %v2102
  %vm2104 = vcmp.eq.s32.totalorder %v2099, 2
  %v2105 = vxor.u32 %v2095, 2147483648
  %v2106 = vsel %vm2104, %v2105, %v2096
  %v2107 = vsel %vm2100, %v2103, %v2106
  %v2108 = vsel %vm2097, nan, %v2107
  %v2109 = vand.u32 2147483647, %v132
  %vm2110 = vcmp.le.f32.partialorder %v2109, 0.7853982
  %vm2111 = vcmp.lt.s32.totalorder %v132, 0
  %v2112 = vand.u32 %v132, 2139095040
  %v2113 = vshrl.u32 %v2112, 23
  %v2114 = vsub.s32 %v2113, 127
  %v2115 = vand.u32 2147483647, %v132
  %v2116 = vand.u32 %v2115, 8388607
  %v2117 = vor.u32 %v2116, 8388608
  %v2118 = vsub.s32 0, %v2117
  %v2119 = vadd.s32 %v2114, 1
  %vm2120 = vcmp.gt.s32.totalorder %v2119, 0
  %v2121 = vsel %vm2120, %v2119, 0
  %v2122 = vshrl.u32 %v2121, 5
  %v2123 = vand.u32 %v2121, 31
  %v2124 = vsub.s32 32, %v2123
  %v2125 = vshrl.u32 683565275, %v2124
  %v2126 = vshll.u32 683565275, %v2123
  %v2127 = vshrl.u32 2475754826, %v2124
  %v2128 = vor.u32 %v2126, %v2127
  %v2129 = vshll.u32 2475754826, %v2123
  %v2130 = vshrl.u32 2131351028, %v2124
  %v2131 = vor.u32 %v2129, %v2130
  %v2132 = vshll.u32 2131351028, %v2123
  %v2133 = vshrl.u32 2102212464, %v2124
  %v2134 = vor.u32 %v2132, %v2133
  %v2135 = vshll.u32 2102212464, %v2123
  %v2136 = vshrl.u32 920167782, %v2124
  %v2137 = vor.u32 %v2135, %v2136
  %v2138 = vshll.u32 920167782, %v2123
  %v2139 = vshrl.u32 1326507024, %v2124
  %v2140 = vor.u32 %v2138, %v2139
  %vm2141 = vcmp.lt.s32.totalorder %v2122, 1
  %vm2142 = vcmp.lt.s32.totalorder %v2122, 2
  %vm2143 = vcmp.lt.s32.totalorder %v2122, 3
  %vm2144 = vcmp.lt.s32.totalorder %v2122, 4
  %v2145 = vsel %vm2141, %v2125, %v2128
  %v2146 = vsel %vm2144, %v2134, 2102212464
  %v2147 = vsel %vm2143, %v2131, %v2146
  %v2148 = vsel %vm2142, %v2145, %v2147
  %v2149 = vsel %vm2141, %v2128, %v2131
  %v2150 = vsel %vm2144, %v2137, 920167782
  %v2151 = vsel %vm2143, %v2134, %v2150
  %v2152 = vsel %vm2142, %v2149, %v2151
  %v2153 = vsel %vm2141, %v2131, %v2134
  %v2154 = vsel %vm2144, %v2140, 1326507024
  %v2155 = vsel %vm2143, %v2137, %v2154
  %v2156 = vsel %vm2142, %v2153, %v2155
  %v2157 = vshll.u32 %v2117, 8
  %v2158 = vmul.u32.u64.compose %v2157, %v2156
  %v2159 = vextract.low.u32 %v2158
  %v2160 = vextract.high.u32 %v2158
  %v2161 = vmul.u32.u64.compose %v2157, %v2152
  %v2162 = vextract.low.u32 %v2161
  %v2163 = vextract.high.u32 %v2161
  %v2164 = vmul.u32 %v2157, %v2148
  %v2165 = vadd.s32 %v2160, %v2162
  %vm2166 = vc.u32 %v2160, %v2162
  %v2167 = vadd.s32 %v2163, 1
  %v2168 = vsel %vm2166, %v2167, %v2163
  %v2169 = vadd.s32 %v2164, %v2168
  %v2170 = vadd.s32 %v2169, 536870912
  %v2171 = vshrl.u32 %v2170, 30
  %v2172 = vshll.u32 %v2171, 30
  %v2173 = vsub.s32 %v2169, %v2172
  %vm2174 = vcmp.lt.s32.totalorder %v2173, 0
  %v2175 = vsub.s32 0, %v2173
  %v2176 = vsel %vm2174, %v2175, %v2173
  %v2177 = vclz %v2176
  %v2178 = vsub.s32 %v2177, 2
  %vm2179 = vcmp.gt.s32.totalorder 0, %v2178
  %v2180 = vsel %vm2179, 0, %v2178
  %v2181 = vsub.s32 32, %v2180
  %v2182 = vshll.u32 %v2173, %v2180
  %v2183 = vshrl.u32 %v2165, %v2181
  %v2184 = vor.u32 %v2182, %v2183
  %v2185 = vsub.s32 4294967266, %v2180
  %v2186 = vadd.s32 %v2185, 127
  %v2187 = vshll.u32 %v2186, 23
  %v2188 = vor.u32 4788187, %v2187
  %v2189 = vand.u32 2147483647, %v2188
  %v2191 = vcvt.s32.f32 %v2184
  %v2192 = vmul.f32 %v2191, %v2189
  %v2193 = vxor.u32 %v2192, 2147483648
  %v2194 = vsel %vm2111, %v2193, %v2192
  %v2195 = vsub.s32 4, %v2171
  %v2196 = vsel %vm2111, %v2195, %v2171
  %v2197 = vsel %vm2110, %v132, %v2194
  %v2198 = vsel %vm2110, 0, %v2196
  %v2199 = vcosq.f32.pop %v2197
  %v2200 = vsinq.f32.pop %v2197
  %vm2201 = vweird.f32 %v132
  %v2202 = vadd.s32 %v2198, 3
  %v2203 = vand.u32 %v2202, 3
  %vm2204 = vcmp.lt.s32.totalorder %v2203, 2
  %vm2205 = vcmp.eq.s32.totalorder %v2203, 0
  %v2206 = vxor.u32 %v2200, 2147483648
  %v2207 = vsel %vm2205, %v2199, %v2206
  %vm2208 = vcmp.eq.s32.totalorder %v2203, 2
  %v2209 = vxor.u32 %v2199, 2147483648
  %v2210 = vsel %vm2208, %v2209, %v2200
  %v2211 = vsel %vm2204, %v2207, %v2210
  %v2212 = vsel %vm2201, nan, %v2211
  %v2213 = vand.u32 2147483647, %v133
  %vm2214 = vcmp.le.f32.partialorder %v2213, 0.7853982
  %vm2215 = vcmp.lt.s32.totalorder %v133, 0
  %v2216 = vand.u32 %v133, 2139095040
  %v2217 = vshrl.u32 %v2216, 23
  %v2218 = vsub.s32 %v2217, 127
  %v2219 = vand.u32 2147483647, %v133
  %v2220 = vand.u32 %v2219, 8388607
  %v2221 = vor.u32 %v2220, 8388608
  %v2222 = vsub.s32 0, %v2221
  %v2223 = vadd.s32 %v2218, 1
  %vm2224 = vcmp.gt.s32.totalorder %v2223, 0
  %v2225 = vsel %vm2224, %v2223, 0
  %v2226 = vshrl.u32 %v2225, 5
  %v2227 = vand.u32 %v2225, 31
  %v2228 = vsub.s32 32, %v2227
  %v2229 = vshrl.u32 683565275, %v2228
  %v2230 = vshll.u32 683565275, %v2227
  %v2231 = vshrl.u32 2475754826, %v2228
  %v2232 = vor.u32 %v2230, %v2231
  %v2233 = vshll.u32 2475754826, %v2227
  %v2234 = vshrl.u32 2131351028, %v2228
  %v2235 = vor.u32 %v2233, %v2234
  %v2236 = vshll.u32 2131351028, %v2227
  %v2237 = vshrl.u32 2102212464, %v2228
  %v2238 = vor.u32 %v2236, %v2237
  %v2239 = vshll.u32 2102212464, %v2227
  %v2240 = vshrl.u32 920167782, %v2228
  %v2241 = vor.u32 %v2239, %v2240
  %v2242 = vshll.u32 920167782, %v2227
  %v2243 = vshrl.u32 1326507024, %v2228
  %v2244 = vor.u32 %v2242, %v2243
  %vm2245 = vcmp.lt.s32.totalorder %v2226, 1
  %vm2246 = vcmp.lt.s32.totalorder %v2226, 2
  %vm2247 = vcmp.lt.s32.totalorder %v2226, 3
  %vm2248 = vcmp.lt.s32.totalorder %v2226, 4
  %v2249 = vsel %vm2245, %v2229, %v2232
  %v2250 = vsel %vm2248, %v2238, 2102212464
  %v2251 = vsel %vm2247, %v2235, %v2250
  %v2252 = vsel %vm2246, %v2249, %v2251
  %v2253 = vsel %vm2245, %v2232, %v2235
  %v2254 = vsel %vm2248, %v2241, 920167782
  %v2255 = vsel %vm2247, %v2238, %v2254
  %v2256 = vsel %vm2246, %v2253, %v2255
  %v2257 = vsel %vm2245, %v2235, %v2238
  %v2258 = vsel %vm2248, %v2244, 1326507024
  %v2259 = vsel %vm2247, %v2241, %v2258
  %v2260 = vsel %vm2246, %v2257, %v2259
  %v2261 = vshll.u32 %v2221, 8
  %v2262 = vmul.u32.u64.compose %v2261, %v2260
  %v2263 = vextract.low.u32 %v2262
  %v2264 = vextract.high.u32 %v2262
  %v2265 = vmul.u32.u64.compose %v2261, %v2256
  %v2266 = vextract.low.u32 %v2265
  %v2267 = vextract.high.u32 %v2265
  %v2268 = vmul.u32 %v2261, %v2252
  %v2269 = vadd.s32 %v2264, %v2266
  %vm2270 = vc.u32 %v2264, %v2266
  %v2271 = vadd.s32 %v2267, 1
  %v2272 = vsel %vm2270, %v2271, %v2267
  %v2273 = vadd.s32 %v2268, %v2272
  %v2274 = vadd.s32 %v2273, 536870912
  %v2275 = vshrl.u32 %v2274, 30
  %v2276 = vshll.u32 %v2275, 30
  %v2277 = vsub.s32 %v2273, %v2276
  %vm2278 = vcmp.lt.s32.totalorder %v2277, 0
  %v2279 = vsub.s32 0, %v2277
  %v2280 = vsel %vm2278, %v2279, %v2277
  %v2281 = vclz %v2280
  %v2282 = vsub.s32 %v2281, 2
  %vm2283 = vcmp.gt.s32.totalorder 0, %v2282
  %v2284 = vsel %vm2283, 0, %v2282
  %v2285 = vsub.s32 32, %v2284
  %v2286 = vshll.u32 %v2277, %v2284
  %v2287 = vshrl.u32 %v2269, %v2285
  %v2288 = vor.u32 %v2286, %v2287
  %v2289 = vsub.s32 4294967266, %v2284
  %v2290 = vadd.s32 %v2289, 127
  %v2291 = vshll.u32 %v2290, 23
  %v2292 = vor.u32 4788187, %v2291
  %v2293 = vand.u32 2147483647, %v2292
  %v2295 = vcvt.s32.f32 %v2288
  %v2296 = vmul.f32 %v2295, %v2293
  %v2297 = vxor.u32 %v2296, 2147483648
  %v2298 = vsel %vm2215, %v2297, %v2296
  %v2299 = vsub.s32 4, %v2275
  %v2300 = vsel %vm2215, %v2299, %v2275
  %v2301 = vsel %vm2214, %v133, %v2298
  %v2302 = vsel %vm2214, 0, %v2300
  %v2303 = vcosq.f32.pop %v2301
  %v2304 = vsinq.f32.pop %v2301
  %vm2305 = vweird.f32 %v133
  %v2306 = vadd.s32 %v2302, 3
  %v2307 = vand.u32 %v2306, 3
  %vm2308 = vcmp.lt.s32.totalorder %v2307, 2
  %vm2309 = vcmp.eq.s32.totalorder %v2307, 0
  %v2310 = vxor.u32 %v2304, 2147483648
  %v2311 = vsel %vm2309, %v2303, %v2310
  %vm2312 = vcmp.eq.s32.totalorder %v2307, 2
  %v2313 = vxor.u32 %v2303, 2147483648
  %v2314 = vsel %vm2312, %v2313, %v2304
  %v2315 = vsel %vm2308, %v2311, %v2314
  %v2316 = vsel %vm2305, nan, %v2315
  %v2317 = vand.u32 2147483647, %v134
  %vm2318 = vcmp.le.f32.partialorder %v2317, 0.7853982
  %vm2319 = vcmp.lt.s32.totalorder %v134, 0
  %v2320 = vand.u32 %v134, 2139095040
  %v2321 = vshrl.u32 %v2320, 23
  %v2322 = vsub.s32 %v2321, 127
  %v2323 = vand.u32 2147483647, %v134
  %v2324 = vand.u32 %v2323, 8388607
  %v2325 = vor.u32 %v2324, 8388608
  %v2326 = vsub.s32 0, %v2325
  %v2327 = vadd.s32 %v2322, 1
  %vm2328 = vcmp.gt.s32.totalorder %v2327, 0
  %v2329 = vsel %vm2328, %v2327, 0
  %v2330 = vshrl.u32 %v2329, 5
  %v2331 = vand.u32 %v2329, 31
  %v2332 = vsub.s32 32, %v2331
  %v2333 = vshrl.u32 683565275, %v2332
  %v2334 = vshll.u32 683565275, %v2331
  %v2335 = vshrl.u32 2475754826, %v2332
  %v2336 = vor.u32 %v2334, %v2335
  %v2337 = vshll.u32 2475754826, %v2331
  %v2338 = vshrl.u32 2131351028, %v2332
  %v2339 = vor.u32 %v2337, %v2338
  %v2340 = vshll.u32 2131351028, %v2331
  %v2341 = vshrl.u32 2102212464, %v2332
  %v2342 = vor.u32 %v2340, %v2341
  %v2343 = vshll.u32 2102212464, %v2331
  %v2344 = vshrl.u32 920167782, %v2332
  %v2345 = vor.u32 %v2343, %v2344
  %v2346 = vshll.u32 920167782, %v2331
  %v2347 = vshrl.u32 1326507024, %v2332
  %v2348 = vor.u32 %v2346, %v2347
  %vm2349 = vcmp.lt.s32.totalorder %v2330, 1
  %vm2350 = vcmp.lt.s32.totalorder %v2330, 2
  %vm2351 = vcmp.lt.s32.totalorder %v2330, 3
  %vm2352 = vcmp.lt.s32.totalorder %v2330, 4
  %v2353 = vsel %vm2349, %v2333, %v2336
  %v2354 = vsel %vm2352, %v2342, 2102212464
  %v2355 = vsel %vm2351, %v2339, %v2354
  %v2356 = vsel %vm2350, %v2353, %v2355
  %v2357 = vsel %vm2349, %v2336, %v2339
  %v2358 = vsel %vm2352, %v2345, 920167782
  %v2359 = vsel %vm2351, %v2342, %v2358
  %v2360 = vsel %vm2350, %v2357, %v2359
  %v2361 = vsel %vm2349, %v2339, %v2342
  %v2362 = vsel %vm2352, %v2348, 1326507024
  %v2363 = vsel %vm2351, %v2345, %v2362
  %v2364 = vsel %vm2350, %v2361, %v2363
  %v2365 = vshll.u32 %v2325, 8
  %v2366 = vmul.u32.u64.compose %v2365, %v2364
  %v2367 = vextract.low.u32 %v2366
  %v2368 = vextract.high.u32 %v2366
  %v2369 = vmul.u32.u64.compose %v2365, %v2360
  %v2370 = vextract.low.u32 %v2369
  %v2371 = vextract.high.u32 %v2369
  %v2372 = vmul.u32 %v2365, %v2356
  %v2373 = vadd.s32 %v2368, %v2370
  %vm2374 = vc.u32 %v2368, %v2370
  %v2375 = vadd.s32 %v2371, 1
  %v2376 = vsel %vm2374, %v2375, %v2371
  %v2377 = vadd.s32 %v2372, %v2376
  %v2378 = vadd.s32 %v2377, 536870912
  %v2379 = vshrl.u32 %v2378, 30
  %v2380 = vshll.u32 %v2379, 30
  %v2381 = vsub.s32 %v2377, %v2380
  %vm2382 = vcmp.lt.s32.totalorder %v2381, 0
  %v2383 = vsub.s32 0, %v2381
  %v2384 = vsel %vm2382, %v2383, %v2381
  %v2385 = vclz %v2384
  %v2386 = vsub.s32 %v2385, 2
  %vm2387 = vcmp.gt.s32.totalorder 0, %v2386
  %v2388 = vsel %vm2387, 0, %v2386
  %v2389 = vsub.s32 32, %v2388
  %v2390 = vshll.u32 %v2381, %v2388
  %v2391 = vshrl.u32 %v2373, %v2389
  %v2392 = vor.u32 %v2390, %v2391
  %v2393 = vsub.s32 4294967266, %v2388
  %v2394 = vadd.s32 %v2393, 127
  %v2395 = vshll.u32 %v2394, 23
  %v2396 = vor.u32 4788187, %v2395
  %v2397 = vand.u32 2147483647, %v2396
  %v2399 = vcvt.s32.f32 %v2392
  %v2400 = vmul.f32 %v2399, %v2397
  %v2401 = vxor.u32 %v2400, 2147483648
  %v2402 = vsel %vm2319, %v2401, %v2400
  %v2403 = vsub.s32 4, %v2379
  %v2404 = vsel %vm2319, %v2403, %v2379
  %v2405 = vsel %vm2318, %v134, %v2402
  %v2406 = vsel %vm2318, 0, %v2404
  %v2407 = vcosq.f32.pop %v2405
  %v2408 = vsinq.f32.pop %v2405
  %vm2409 = vweird.f32 %v134
  %v2410 = vadd.s32 %v2406, 3
  %v2411 = vand.u32 %v2410, 3
  %vm2412 = vcmp.lt.s32.totalorder %v2411, 2
  %vm2413 = vcmp.eq.s32.totalorder %v2411, 0
  %v2414 = vxor.u32 %v2408, 2147483648
  %v2415 = vsel %vm2413, %v2407, %v2414
  %vm2416 = vcmp.eq.s32.totalorder %v2411, 2
  %v2417 = vxor.u32 %v2407, 2147483648
  %v2418 = vsel %vm2416, %v2417, %v2408
  %v2419 = vsel %vm2412, %v2415, %v2418
  %v2420 = vsel %vm2409, nan, %v2419
  %v2421 = vand.u32 2147483647, %v135
  %vm2422 = vcmp.le.f32.partialorder %v2421, 0.7853982
  %vm2423 = vcmp.lt.s32.totalorder %v135, 0
  %v2424 = vand.u32 %v135, 2139095040
  %v2425 = vshrl.u32 %v2424, 23
  %v2426 = vsub.s32 %v2425, 127
  %v2427 = vand.u32 2147483647, %v135
  %v2428 = vand.u32 %v2427, 8388607
  %v2429 = vor.u32 %v2428, 8388608
  %v2430 = vsub.s32 0, %v2429
  %v2431 = vadd.s32 %v2426, 1
  %vm2432 = vcmp.gt.s32.totalorder %v2431, 0
  %v2433 = vsel %vm2432, %v2431, 0
  %v2434 = vshrl.u32 %v2433, 5
  %v2435 = vand.u32 %v2433, 31
  %v2436 = vsub.s32 32, %v2435
  %v2437 = vshrl.u32 683565275, %v2436
  %v2438 = vshll.u32 683565275, %v2435
  %v2439 = vshrl.u32 2475754826, %v2436
  %v2440 = vor.u32 %v2438, %v2439
  %v2441 = vshll.u32 2475754826, %v2435
  %v2442 = vshrl.u32 2131351028, %v2436
  %v2443 = vor.u32 %v2441, %v2442
  %v2444 = vshll.u32 2131351028, %v2435
  %v2445 = vshrl.u32 2102212464, %v2436
  %v2446 = vor.u32 %v2444, %v2445
  %v2447 = vshll.u32 2102212464, %v2435
  %v2448 = vshrl.u32 920167782, %v2436
  %v2449 = vor.u32 %v2447, %v2448
  %v2450 = vshll.u32 920167782, %v2435
  %v2451 = vshrl.u32 1326507024, %v2436
  %v2452 = vor.u32 %v2450, %v2451
  %vm2453 = vcmp.lt.s32.totalorder %v2434, 1
  %vm2454 = vcmp.lt.s32.totalorder %v2434, 2
  %vm2455 = vcmp.lt.s32.totalorder %v2434, 3
  %vm2456 = vcmp.lt.s32.totalorder %v2434, 4
  %v2457 = vsel %vm2453, %v2437, %v2440
  %v2458 = vsel %vm2456, %v2446, 2102212464
  %v2459 = vsel %vm2455, %v2443, %v2458
  %v2460 = vsel %vm2454, %v2457, %v2459
  %v2461 = vsel %vm2453, %v2440, %v2443
  %v2462 = vsel %vm2456, %v2449, 920167782
  %v2463 = vsel %vm2455, %v2446, %v2462
  %v2464 = vsel %vm2454, %v2461, %v2463
  %v2465 = vsel %vm2453, %v2443, %v2446
  %v2466 = vsel %vm2456, %v2452, 1326507024
  %v2467 = vsel %vm2455, %v2449, %v2466
  %v2468 = vsel %vm2454, %v2465, %v2467
  %v2469 = vshll.u32 %v2429, 8
  %v2470 = vmul.u32.u64.compose %v2469, %v2468
  %v2471 = vextract.low.u32 %v2470
  %v2472 = vextract.high.u32 %v2470
  %v2473 = vmul.u32.u64.compose %v2469, %v2464
  %v2474 = vextract.low.u32 %v2473
  %v2475 = vextract.high.u32 %v2473
  %v2476 = vmul.u32 %v2469, %v2460
  %v2477 = vadd.s32 %v2472, %v2474
  %vm2478 = vc.u32 %v2472, %v2474
  %v2479 = vadd.s32 %v2475, 1
  %v2480 = vsel %vm2478, %v2479, %v2475
  %v2481 = vadd.s32 %v2476, %v2480
  %v2482 = vadd.s32 %v2481, 536870912
  %v2483 = vshrl.u32 %v2482, 30
  %v2484 = vshll.u32 %v2483, 30
  %v2485 = vsub.s32 %v2481, %v2484
  %vm2486 = vcmp.lt.s32.totalorder %v2485, 0
  %v2487 = vsub.s32 0, %v2485
  %v2488 = vsel %vm2486, %v2487, %v2485
  %v2489 = vclz %v2488
  %v2490 = vsub.s32 %v2489, 2
  %vm2491 = vcmp.gt.s32.totalorder 0, %v2490
  %v2492 = vsel %vm2491, 0, %v2490
  %v2493 = vsub.s32 32, %v2492
  %v2494 = vshll.u32 %v2485, %v2492
  %v2495 = vshrl.u32 %v2477, %v2493
  %v2496 = vor.u32 %v2494, %v2495
  %v2497 = vsub.s32 4294967266, %v2492
  %v2498 = vadd.s32 %v2497, 127
  %v2499 = vshll.u32 %v2498, 23
  %v2500 = vor.u32 4788187, %v2499
  %v2501 = vand.u32 2147483647, %v2500
  %v2503 = vcvt.s32.f32 %v2496
  %v2504 = vmul.f32 %v2503, %v2501
  %v2505 = vxor.u32 %v2504, 2147483648
  %v2506 = vsel %vm2423, %v2505, %v2504
  %v2507 = vsub.s32 4, %v2483
  %v2508 = vsel %vm2423, %v2507, %v2483
  %v2509 = vsel %vm2422, %v135, %v2506
  %v2510 = vsel %vm2422, 0, %v2508
  %v2511 = vcosq.f32.pop %v2509
  %v2512 = vsinq.f32.pop %v2509
  %vm2513 = vweird.f32 %v135
  %v2514 = vadd.s32 %v2510, 3
  %v2515 = vand.u32 %v2514, 3
  %vm2516 = vcmp.lt.s32.totalorder %v2515, 2
  %vm2517 = vcmp.eq.s32.totalorder %v2515, 0
  %v2518 = vxor.u32 %v2512, 2147483648
  %v2519 = vsel %vm2517, %v2511, %v2518
  %vm2520 = vcmp.eq.s32.totalorder %v2515, 2
  %v2521 = vxor.u32 %v2511, 2147483648
  %v2522 = vsel %vm2520, %v2521, %v2512
  %v2523 = vsel %vm2516, %v2519, %v2522
  %v2524 = vsel %vm2513, nan, %v2523
  %v2525 = vand.u32 2147483647, %v136
  %vm2526 = vcmp.le.f32.partialorder %v2525, 0.7853982
  %vm2527 = vcmp.lt.s32.totalorder %v136, 0
  %v2528 = vand.u32 %v136, 2139095040
  %v2529 = vshrl.u32 %v2528, 23
  %v2530 = vsub.s32 %v2529, 127
  %v2531 = vand.u32 2147483647, %v136
  %v2532 = vand.u32 %v2531, 8388607
  %v2533 = vor.u32 %v2532, 8388608
  %v2534 = vsub.s32 0, %v2533
  %v2535 = vadd.s32 %v2530, 1
  %vm2536 = vcmp.gt.s32.totalorder %v2535, 0
  %v2537 = vsel %vm2536, %v2535, 0
  %v2538 = vshrl.u32 %v2537, 5
  %v2539 = vand.u32 %v2537, 31
  %v2540 = vsub.s32 32, %v2539
  %v2541 = vshrl.u32 683565275, %v2540
  %v2542 = vshll.u32 683565275, %v2539
  %v2543 = vshrl.u32 2475754826, %v2540
  %v2544 = vor.u32 %v2542, %v2543
  %v2545 = vshll.u32 2475754826, %v2539
  %v2546 = vshrl.u32 2131351028, %v2540
  %v2547 = vor.u32 %v2545, %v2546
  %v2548 = vshll.u32 2131351028, %v2539
  %v2549 = vshrl.u32 2102212464, %v2540
  %v2550 = vor.u32 %v2548, %v2549
  %v2551 = vshll.u32 2102212464, %v2539
  %v2552 = vshrl.u32 920167782, %v2540
  %v2553 = vor.u32 %v2551, %v2552
  %v2554 = vshll.u32 920167782, %v2539
  %v2555 = vshrl.u32 1326507024, %v2540
  %v2556 = vor.u32 %v2554, %v2555
  %vm2557 = vcmp.lt.s32.totalorder %v2538, 1
  %vm2558 = vcmp.lt.s32.totalorder %v2538, 2
  %vm2559 = vcmp.lt.s32.totalorder %v2538, 3
  %vm2560 = vcmp.lt.s32.totalorder %v2538, 4
  %v2561 = vsel %vm2557, %v2541, %v2544
  %v2562 = vsel %vm2560, %v2550, 2102212464
  %v2563 = vsel %vm2559, %v2547, %v2562
  %v2564 = vsel %vm2558, %v2561, %v2563
  %v2565 = vsel %vm2557, %v2544, %v2547
  %v2566 = vsel %vm2560, %v2553, 920167782
  %v2567 = vsel %vm2559, %v2550, %v2566
  %v2568 = vsel %vm2558, %v2565, %v2567
  %v2569 = vsel %vm2557, %v2547, %v2550
  %v2570 = vsel %vm2560, %v2556, 1326507024
  %v2571 = vsel %vm2559, %v2553, %v2570
  %v2572 = vsel %vm2558, %v2569, %v2571
  %v2573 = vshll.u32 %v2533, 8
  %v2574 = vmul.u32.u64.compose %v2573, %v2572
  %v2575 = vextract.low.u32 %v2574
  %v2576 = vextract.high.u32 %v2574
  %v2577 = vmul.u32.u64.compose %v2573, %v2568
  %v2578 = vextract.low.u32 %v2577
  %v2579 = vextract.high.u32 %v2577
  %v2580 = vmul.u32 %v2573, %v2564
  %v2581 = vadd.s32 %v2576, %v2578
  %vm2582 = vc.u32 %v2576, %v2578
  %v2583 = vadd.s32 %v2579, 1
  %v2584 = vsel %vm2582, %v2583, %v2579
  %v2585 = vadd.s32 %v2580, %v2584
  %v2586 = vadd.s32 %v2585, 536870912
  %v2587 = vshrl.u32 %v2586, 30
  %v2588 = vshll.u32 %v2587, 30
  %v2589 = vsub.s32 %v2585, %v2588
  %vm2590 = vcmp.lt.s32.totalorder %v2589, 0
  %v2591 = vsub.s32 0, %v2589
  %v2592 = vsel %vm2590, %v2591, %v2589
  %v2593 = vclz %v2592
  %v2594 = vsub.s32 %v2593, 2
  %vm2595 = vcmp.gt.s32.totalorder 0, %v2594
  %v2596 = vsel %vm2595, 0, %v2594
  %v2597 = vsub.s32 32, %v2596
  %v2598 = vshll.u32 %v2589, %v2596
  %v2599 = vshrl.u32 %v2581, %v2597
  %v2600 = vor.u32 %v2598, %v2599
  %v2601 = vsub.s32 4294967266, %v2596
  %v2602 = vadd.s32 %v2601, 127
  %v2603 = vshll.u32 %v2602, 23
  %v2604 = vor.u32 4788187, %v2603
  %v2605 = vand.u32 2147483647, %v2604
  %v2607 = vcvt.s32.f32 %v2600
  %v2608 = vmul.f32 %v2607, %v2605
  %v2609 = vxor.u32 %v2608, 2147483648
  %v2610 = vsel %vm2527, %v2609, %v2608
  %v2611 = vsub.s32 4, %v2587
  %v2612 = vsel %vm2527, %v2611, %v2587
  %v2613 = vsel %vm2526, %v136, %v2610
  %v2614 = vsel %vm2526, 0, %v2612
  %v2615 = vcosq.f32.pop %v2613
  %v2616 = vsinq.f32.pop %v2613
  %vm2617 = vweird.f32 %v136
  %v2618 = vadd.s32 %v2614, 3
  %v2619 = vand.u32 %v2618, 3
  %vm2620 = vcmp.lt.s32.totalorder %v2619, 2
  %vm2621 = vcmp.eq.s32.totalorder %v2619, 0
  %v2622 = vxor.u32 %v2616, 2147483648
  %v2623 = vsel %vm2621, %v2615, %v2622
  %vm2624 = vcmp.eq.s32.totalorder %v2619, 2
  %v2625 = vxor.u32 %v2615, 2147483648
  %v2626 = vsel %vm2624, %v2625, %v2616
  %v2627 = vsel %vm2620, %v2623, %v2626
  %v2628 = vsel %vm2617, nan, %v2627
  %v2629 = vand.u32 2147483647, %v137
  %vm2630 = vcmp.le.f32.partialorder %v2629, 0.7853982
  %vm2631 = vcmp.lt.s32.totalorder %v137, 0
  %v2632 = vand.u32 %v137, 2139095040
  %v2633 = vshrl.u32 %v2632, 23
  %v2634 = vsub.s32 %v2633, 127
  %v2635 = vand.u32 2147483647, %v137
  %v2636 = vand.u32 %v2635, 8388607
  %v2637 = vor.u32 %v2636, 8388608
  %v2638 = vsub.s32 0, %v2637
  %v2639 = vadd.s32 %v2634, 1
  %vm2640 = vcmp.gt.s32.totalorder %v2639, 0
  %v2641 = vsel %vm2640, %v2639, 0
  %v2642 = vshrl.u32 %v2641, 5
  %v2643 = vand.u32 %v2641, 31
  %v2644 = vsub.s32 32, %v2643
  %v2645 = vshrl.u32 683565275, %v2644
  %v2646 = vshll.u32 683565275, %v2643
  %v2647 = vshrl.u32 2475754826, %v2644
  %v2648 = vor.u32 %v2646, %v2647
  %v2649 = vshll.u32 2475754826, %v2643
  %v2650 = vshrl.u32 2131351028, %v2644
  %v2651 = vor.u32 %v2649, %v2650
  %v2652 = vshll.u32 2131351028, %v2643
  %v2653 = vshrl.u32 2102212464, %v2644
  %v2654 = vor.u32 %v2652, %v2653
  %v2655 = vshll.u32 2102212464, %v2643
  %v2656 = vshrl.u32 920167782, %v2644
  %v2657 = vor.u32 %v2655, %v2656
  %v2658 = vshll.u32 920167782, %v2643
  %v2659 = vshrl.u32 1326507024, %v2644
  %v2660 = vor.u32 %v2658, %v2659
  %vm2661 = vcmp.lt.s32.totalorder %v2642, 1
  %vm2662 = vcmp.lt.s32.totalorder %v2642, 2
  %vm2663 = vcmp.lt.s32.totalorder %v2642, 3
  %vm2664 = vcmp.lt.s32.totalorder %v2642, 4
  %v2665 = vsel %vm2661, %v2645, %v2648
  %v2666 = vsel %vm2664, %v2654, 2102212464
  %v2667 = vsel %vm2663, %v2651, %v2666
  %v2668 = vsel %vm2662, %v2665, %v2667
  %v2669 = vsel %vm2661, %v2648, %v2651
  %v2670 = vsel %vm2664, %v2657, 920167782
  %v2671 = vsel %vm2663, %v2654, %v2670
  %v2672 = vsel %vm2662, %v2669, %v2671
  %v2673 = vsel %vm2661, %v2651, %v2654
  %v2674 = vsel %vm2664, %v2660, 1326507024
  %v2675 = vsel %vm2663, %v2657, %v2674
  %v2676 = vsel %vm2662, %v2673, %v2675
  %v2677 = vshll.u32 %v2637, 8
  %v2678 = vmul.u32.u64.compose %v2677, %v2676
  %v2679 = vextract.low.u32 %v2678
  %v2680 = vextract.high.u32 %v2678
  %v2681 = vmul.u32.u64.compose %v2677, %v2672
  %v2682 = vextract.low.u32 %v2681
  %v2683 = vextract.high.u32 %v2681
  %v2684 = vmul.u32 %v2677, %v2668
  %v2685 = vadd.s32 %v2680, %v2682
  %vm2686 = vc.u32 %v2680, %v2682
  %v2687 = vadd.s32 %v2683, 1
  %v2688 = vsel %vm2686, %v2687, %v2683
  %v2689 = vadd.s32 %v2684, %v2688
  %v2690 = vadd.s32 %v2689, 536870912
  %v2691 = vshrl.u32 %v2690, 30
  %v2692 = vshll.u32 %v2691, 30
  %v2693 = vsub.s32 %v2689, %v2692
  %vm2694 = vcmp.lt.s32.totalorder %v2693, 0
  %v2695 = vsub.s32 0, %v2693
  %v2696 = vsel %vm2694, %v2695, %v2693
  %v2697 = vclz %v2696
  %v2698 = vsub.s32 %v2697, 2
  %vm2699 = vcmp.gt.s32.totalorder 0, %v2698
  %v2700 = vsel %vm2699, 0, %v2698
  %v2701 = vsub.s32 32, %v2700
  %v2702 = vshll.u32 %v2693, %v2700
  %v2703 = vshrl.u32 %v2685, %v2701
  %v2704 = vor.u32 %v2702, %v2703
  %v2705 = vsub.s32 4294967266, %v2700
  %v2706 = vadd.s32 %v2705, 127
  %v2707 = vshll.u32 %v2706, 23
  %v2708 = vor.u32 4788187, %v2707
  %v2709 = vand.u32 2147483647, %v2708
  %v2711 = vcvt.s32.f32 %v2704
  %v2712 = vmul.f32 %v2711, %v2709
  %v2713 = vxor.u32 %v2712, 2147483648
  %v2714 = vsel %vm2631, %v2713, %v2712
  %v2715 = vsub.s32 4, %v2691
  %v2716 = vsel %vm2631, %v2715, %v2691
  %v2717 = vsel %vm2630, %v137, %v2714
  %v2718 = vsel %vm2630, 0, %v2716
  %v2719 = vcosq.f32.pop %v2717
  %v2720 = vsinq.f32.pop %v2717
  %vm2721 = vweird.f32 %v137
  %v2722 = vadd.s32 %v2718, 3
  %v2723 = vand.u32 %v2722, 3
  %vm2724 = vcmp.lt.s32.totalorder %v2723, 2
  %vm2725 = vcmp.eq.s32.totalorder %v2723, 0
  %v2726 = vxor.u32 %v2720, 2147483648
  %v2727 = vsel %vm2725, %v2719, %v2726
  %vm2728 = vcmp.eq.s32.totalorder %v2723, 2
  %v2729 = vxor.u32 %v2719, 2147483648
  %v2730 = vsel %vm2728, %v2729, %v2720
  %v2731 = vsel %vm2724, %v2727, %v2730
  %v2732 = vsel %vm2721, nan, %v2731
  %v2733 = vand.u32 2147483647, %v138
  %vm2734 = vcmp.le.f32.partialorder %v2733, 0.7853982
  %vm2735 = vcmp.lt.s32.totalorder %v138, 0
  %v2736 = vand.u32 %v138, 2139095040
  %v2737 = vshrl.u32 %v2736, 23
  %v2738 = vsub.s32 %v2737, 127
  %v2739 = vand.u32 2147483647, %v138
  %v2740 = vand.u32 %v2739, 8388607
  %v2741 = vor.u32 %v2740, 8388608
  %v2742 = vsub.s32 0, %v2741
  %v2743 = vadd.s32 %v2738, 1
  %vm2744 = vcmp.gt.s32.totalorder %v2743, 0
  %v2745 = vsel %vm2744, %v2743, 0
  %v2746 = vshrl.u32 %v2745, 5
  %v2747 = vand.u32 %v2745, 31
  %v2748 = vsub.s32 32, %v2747
  %v2749 = vshrl.u32 683565275, %v2748
  %v2750 = vshll.u32 683565275, %v2747
  %v2751 = vshrl.u32 2475754826, %v2748
  %v2752 = vor.u32 %v2750, %v2751
  %v2753 = vshll.u32 2475754826, %v2747
  %v2754 = vshrl.u32 2131351028, %v2748
  %v2755 = vor.u32 %v2753, %v2754
  %v2756 = vshll.u32 2131351028, %v2747
  %v2757 = vshrl.u32 2102212464, %v2748
  %v2758 = vor.u32 %v2756, %v2757
  %v2759 = vshll.u32 2102212464, %v2747
  %v2760 = vshrl.u32 920167782, %v2748
  %v2761 = vor.u32 %v2759, %v2760
  %v2762 = vshll.u32 920167782, %v2747
  %v2763 = vshrl.u32 1326507024, %v2748
  %v2764 = vor.u32 %v2762, %v2763
  %vm2765 = vcmp.lt.s32.totalorder %v2746, 1
  %vm2766 = vcmp.lt.s32.totalorder %v2746, 2
  %vm2767 = vcmp.lt.s32.totalorder %v2746, 3
  %vm2768 = vcmp.lt.s32.totalorder %v2746, 4
  %v2769 = vsel %vm2765, %v2749, %v2752
  %v2770 = vsel %vm2768, %v2758, 2102212464
  %v2771 = vsel %vm2767, %v2755, %v2770
  %v2772 = vsel %vm2766, %v2769, %v2771
  %v2773 = vsel %vm2765, %v2752, %v2755
  %v2774 = vsel %vm2768, %v2761, 920167782
  %v2775 = vsel %vm2767, %v2758, %v2774
  %v2776 = vsel %vm2766, %v2773, %v2775
  %v2777 = vsel %vm2765, %v2755, %v2758
  %v2778 = vsel %vm2768, %v2764, 1326507024
  %v2779 = vsel %vm2767, %v2761, %v2778
  %v2780 = vsel %vm2766, %v2777, %v2779
  %v2781 = vshll.u32 %v2741, 8
  %v2782 = vmul.u32.u64.compose %v2781, %v2780
  %v2783 = vextract.low.u32 %v2782
  %v2784 = vextract.high.u32 %v2782
  %v2785 = vmul.u32.u64.compose %v2781, %v2776
  %v2786 = vextract.low.u32 %v2785
  %v2787 = vextract.high.u32 %v2785
  %v2788 = vmul.u32 %v2781, %v2772
  %v2789 = vadd.s32 %v2784, %v2786
  %vm2790 = vc.u32 %v2784, %v2786
  %v2791 = vadd.s32 %v2787, 1
  %v2792 = vsel %vm2790, %v2791, %v2787
  %v2793 = vadd.s32 %v2788, %v2792
  %v2794 = vadd.s32 %v2793, 536870912
  %v2795 = vshrl.u32 %v2794, 30
  %v2796 = vshll.u32 %v2795, 30
  %v2797 = vsub.s32 %v2793, %v2796
  %vm2798 = vcmp.lt.s32.totalorder %v2797, 0
  %v2799 = vsub.s32 0, %v2797
  %v2800 = vsel %vm2798, %v2799, %v2797
  %v2801 = vclz %v2800
  %v2802 = vsub.s32 %v2801, 2
  %vm2803 = vcmp.gt.s32.totalorder 0, %v2802
  %v2804 = vsel %vm2803, 0, %v2802
  %v2805 = vsub.s32 32, %v2804
  %v2806 = vshll.u32 %v2797, %v2804
  %v2807 = vshrl.u32 %v2789, %v2805
  %v2808 = vor.u32 %v2806, %v2807
  %v2809 = vsub.s32 4294967266, %v2804
  %v2810 = vadd.s32 %v2809, 127
  %v2811 = vshll.u32 %v2810, 23
  %v2812 = vor.u32 4788187, %v2811
  %v2813 = vand.u32 2147483647, %v2812
  %v2815 = vcvt.s32.f32 %v2808
  %v2816 = vmul.f32 %v2815, %v2813
  %v2817 = vxor.u32 %v2816, 2147483648
  %v2818 = vsel %vm2735, %v2817, %v2816
  %v2819 = vsub.s32 4, %v2795
  %v2820 = vsel %vm2735, %v2819, %v2795
  %v2821 = vsel %vm2734, %v138, %v2818
  %v2822 = vsel %vm2734, 0, %v2820
  %v2823 = vcosq.f32.pop %v2821
  %v2824 = vsinq.f32.pop %v2821
  %vm2825 = vweird.f32 %v138
  %v2826 = vadd.s32 %v2822, 3
  %v2827 = vand.u32 %v2826, 3
  %vm2828 = vcmp.lt.s32.totalorder %v2827, 2
  %vm2829 = vcmp.eq.s32.totalorder %v2827, 0
  %v2830 = vxor.u32 %v2824, 2147483648
  %v2831 = vsel %vm2829, %v2823, %v2830
  %vm2832 = vcmp.eq.s32.totalorder %v2827, 2
  %v2833 = vxor.u32 %v2823, 2147483648
  %v2834 = vsel %vm2832, %v2833, %v2824
  %v2835 = vsel %vm2828, %v2831, %v2834
  %v2836 = vsel %vm2825, nan, %v2835
  %v2837 = vand.u32 2147483647, %v139
  %vm2838 = vcmp.le.f32.partialorder %v2837, 0.7853982
  %vm2839 = vcmp.lt.s32.totalorder %v139, 0
  %v2840 = vand.u32 %v139, 2139095040
  %v2841 = vshrl.u32 %v2840, 23
  %v2842 = vsub.s32 %v2841, 127
  %v2843 = vand.u32 2147483647, %v139
  %v2844 = vand.u32 %v2843, 8388607
  %v2845 = vor.u32 %v2844, 8388608
  %v2846 = vsub.s32 0, %v2845
  %v2847 = vadd.s32 %v2842, 1
  %vm2848 = vcmp.gt.s32.totalorder %v2847, 0
  %v2849 = vsel %vm2848, %v2847, 0
  %v2850 = vshrl.u32 %v2849, 5
  %v2851 = vand.u32 %v2849, 31
  %v2852 = vsub.s32 32, %v2851
  %v2853 = vshrl.u32 683565275, %v2852
  %v2854 = vshll.u32 683565275, %v2851
  %v2855 = vshrl.u32 2475754826, %v2852
  %v2856 = vor.u32 %v2854, %v2855
  %v2857 = vshll.u32 2475754826, %v2851
  %v2858 = vshrl.u32 2131351028, %v2852
  %v2859 = vor.u32 %v2857, %v2858
  %v2860 = vshll.u32 2131351028, %v2851
  %v2861 = vshrl.u32 2102212464, %v2852
  %v2862 = vor.u32 %v2860, %v2861
  %v2863 = vshll.u32 2102212464, %v2851
  %v2864 = vshrl.u32 920167782, %v2852
  %v2865 = vor.u32 %v2863, %v2864
  %v2866 = vshll.u32 920167782, %v2851
  %v2867 = vshrl.u32 1326507024, %v2852
  %v2868 = vor.u32 %v2866, %v2867
  %vm2869 = vcmp.lt.s32.totalorder %v2850, 1
  %vm2870 = vcmp.lt.s32.totalorder %v2850, 2
  %vm2871 = vcmp.lt.s32.totalorder %v2850, 3
  %vm2872 = vcmp.lt.s32.totalorder %v2850, 4
  %v2873 = vsel %vm2869, %v2853, %v2856
  %v2874 = vsel %vm2872, %v2862, 2102212464
  %v2875 = vsel %vm2871, %v2859, %v2874
  %v2876 = vsel %vm2870, %v2873, %v2875
  %v2877 = vsel %vm2869, %v2856, %v2859
  %v2878 = vsel %vm2872, %v2865, 920167782
  %v2879 = vsel %vm2871, %v2862, %v2878
  %v2880 = vsel %vm2870, %v2877, %v2879
  %v2881 = vsel %vm2869, %v2859, %v2862
  %v2882 = vsel %vm2872, %v2868, 1326507024
  %v2883 = vsel %vm2871, %v2865, %v2882
  %v2884 = vsel %vm2870, %v2881, %v2883
  %v2885 = vshll.u32 %v2845, 8
  %v2886 = vmul.u32.u64.compose %v2885, %v2884
  %v2887 = vextract.low.u32 %v2886
  %v2888 = vextract.high.u32 %v2886
  %v2889 = vmul.u32.u64.compose %v2885, %v2880
  %v2890 = vextract.low.u32 %v2889
  %v2891 = vextract.high.u32 %v2889
  %v2892 = vmul.u32 %v2885, %v2876
  %v2893 = vadd.s32 %v2888, %v2890
  %vm2894 = vc.u32 %v2888, %v2890
  %v2895 = vadd.s32 %v2891, 1
  %v2896 = vsel %vm2894, %v2895, %v2891
  %v2897 = vadd.s32 %v2892, %v2896
  %v2898 = vadd.s32 %v2897, 536870912
  %v2899 = vshrl.u32 %v2898, 30
  %v2900 = vshll.u32 %v2899, 30
  %v2901 = vsub.s32 %v2897, %v2900
  %vm2902 = vcmp.lt.s32.totalorder %v2901, 0
  %v2903 = vsub.s32 0, %v2901
  %v2904 = vsel %vm2902, %v2903, %v2901
  %v2905 = vclz %v2904
  %v2906 = vsub.s32 %v2905, 2
  %vm2907 = vcmp.gt.s32.totalorder 0, %v2906
  %v2908 = vsel %vm2907, 0, %v2906
  %v2909 = vsub.s32 32, %v2908
  %v2910 = vshll.u32 %v2901, %v2908
  %v2911 = vshrl.u32 %v2893, %v2909
  %v2912 = vor.u32 %v2910, %v2911
  %v2913 = vsub.s32 4294967266, %v2908
  %v2914 = vadd.s32 %v2913, 127
  %v2915 = vshll.u32 %v2914, 23
  %v2916 = vor.u32 4788187, %v2915
  %v2917 = vand.u32 2147483647, %v2916
  %v2919 = vcvt.s32.f32 %v2912
  %v2920 = vmul.f32 %v2919, %v2917
  %v2921 = vxor.u32 %v2920, 2147483648
  %v2922 = vsel %vm2839, %v2921, %v2920
  %v2923 = vsub.s32 4, %v2899
  %v2924 = vsel %vm2839, %v2923, %v2899
  %v2925 = vsel %vm2838, %v139, %v2922
  %v2926 = vsel %vm2838, 0, %v2924
  %v2927 = vcosq.f32.pop %v2925
  %v2928 = vsinq.f32.pop %v2925
  %vm2929 = vweird.f32 %v139
  %v2930 = vadd.s32 %v2926, 3
  %v2931 = vand.u32 %v2930, 3
  %vm2932 = vcmp.lt.s32.totalorder %v2931, 2
  %vm2933 = vcmp.eq.s32.totalorder %v2931, 0
  %v2934 = vxor.u32 %v2928, 2147483648
  %v2935 = vsel %vm2933, %v2927, %v2934
  %vm2936 = vcmp.eq.s32.totalorder %v2931, 2
  %v2937 = vxor.u32 %v2927, 2147483648
  %v2938 = vsel %vm2936, %v2937, %v2928
  %v2939 = vsel %vm2932, %v2935, %v2938
  %v2940 = vsel %vm2929, nan, %v2939
  %v2941 = vand.u32 2147483647, %v140
  %vm2942 = vcmp.le.f32.partialorder %v2941, 0.7853982
  %vm2943 = vcmp.lt.s32.totalorder %v140, 0
  %v2944 = vand.u32 %v140, 2139095040
  %v2945 = vshrl.u32 %v2944, 23
  %v2946 = vsub.s32 %v2945, 127
  %v2947 = vand.u32 2147483647, %v140
  %v2948 = vand.u32 %v2947, 8388607
  %v2949 = vor.u32 %v2948, 8388608
  %v2950 = vsub.s32 0, %v2949
  %v2951 = vadd.s32 %v2946, 1
  %vm2952 = vcmp.gt.s32.totalorder %v2951, 0
  %v2953 = vsel %vm2952, %v2951, 0
  %v2954 = vshrl.u32 %v2953, 5
  %v2955 = vand.u32 %v2953, 31
  %v2956 = vsub.s32 32, %v2955
  %v2957 = vshrl.u32 683565275, %v2956
  %v2958 = vshll.u32 683565275, %v2955
  %v2959 = vshrl.u32 2475754826, %v2956
  %v2960 = vor.u32 %v2958, %v2959
  %v2961 = vshll.u32 2475754826, %v2955
  %v2962 = vshrl.u32 2131351028, %v2956
  %v2963 = vor.u32 %v2961, %v2962
  %v2964 = vshll.u32 2131351028, %v2955
  %v2965 = vshrl.u32 2102212464, %v2956
  %v2966 = vor.u32 %v2964, %v2965
  %v2967 = vshll.u32 2102212464, %v2955
  %v2968 = vshrl.u32 920167782, %v2956
  %v2969 = vor.u32 %v2967, %v2968
  %v2970 = vshll.u32 920167782, %v2955
  %v2971 = vshrl.u32 1326507024, %v2956
  %v2972 = vor.u32 %v2970, %v2971
  %vm2973 = vcmp.lt.s32.totalorder %v2954, 1
  %vm2974 = vcmp.lt.s32.totalorder %v2954, 2
  %vm2975 = vcmp.lt.s32.totalorder %v2954, 3
  %vm2976 = vcmp.lt.s32.totalorder %v2954, 4
  %v2977 = vsel %vm2973, %v2957, %v2960
  %v2978 = vsel %vm2976, %v2966, 2102212464
  %v2979 = vsel %vm2975, %v2963, %v2978
  %v2980 = vsel %vm2974, %v2977, %v2979
  %v2981 = vsel %vm2973, %v2960, %v2963
  %v2982 = vsel %vm2976, %v2969, 920167782
  %v2983 = vsel %vm2975, %v2966, %v2982
  %v2984 = vsel %vm2974, %v2981, %v2983
  %v2985 = vsel %vm2973, %v2963, %v2966
  %v2986 = vsel %vm2976, %v2972, 1326507024
  %v2987 = vsel %vm2975, %v2969, %v2986
  %v2988 = vsel %vm2974, %v2985, %v2987
  %v2989 = vshll.u32 %v2949, 8
  %v2990 = vmul.u32.u64.compose %v2989, %v2988
  %v2991 = vextract.low.u32 %v2990
  %v2992 = vextract.high.u32 %v2990
  %v2993 = vmul.u32.u64.compose %v2989, %v2984
  %v2994 = vextract.low.u32 %v2993
  %v2995 = vextract.high.u32 %v2993
  %v2996 = vmul.u32 %v2989, %v2980
  %v2997 = vadd.s32 %v2992, %v2994
  %vm2998 = vc.u32 %v2992, %v2994
  %v2999 = vadd.s32 %v2995, 1
  %v3000 = vsel %vm2998, %v2999, %v2995
  %v3001 = vadd.s32 %v2996, %v3000
  %v3002 = vadd.s32 %v3001, 536870912
  %v3003 = vshrl.u32 %v3002, 30
  %v3004 = vshll.u32 %v3003, 30
  %v3005 = vsub.s32 %v3001, %v3004
  %vm3006 = vcmp.lt.s32.totalorder %v3005, 0
  %v3007 = vsub.s32 0, %v3005
  %v3008 = vsel %vm3006, %v3007, %v3005
  %v3009 = vclz %v3008
  %v3010 = vsub.s32 %v3009, 2
  %vm3011 = vcmp.gt.s32.totalorder 0, %v3010
  %v3012 = vsel %vm3011, 0, %v3010
  %v3013 = vsub.s32 32, %v3012
  %v3014 = vshll.u32 %v3005, %v3012
  %v3015 = vshrl.u32 %v2997, %v3013
  %v3016 = vor.u32 %v3014, %v3015
  %v3017 = vsub.s32 4294967266, %v3012
  %v3018 = vadd.s32 %v3017, 127
  %v3019 = vshll.u32 %v3018, 23
  %v3020 = vor.u32 4788187, %v3019
  %v3021 = vand.u32 2147483647, %v3020
  %v3023 = vcvt.s32.f32 %v3016
  %v3024 = vmul.f32 %v3023, %v3021
  %v3025 = vxor.u32 %v3024, 2147483648
  %v3026 = vsel %vm2943, %v3025, %v3024
  %v3027 = vsub.s32 4, %v3003
  %v3028 = vsel %vm2943, %v3027, %v3003
  %v3029 = vsel %vm2942, %v140, %v3026
  %v3030 = vsel %vm2942, 0, %v3028
  %v3031 = vcosq.f32.pop %v3029
  %v3032 = vsinq.f32.pop %v3029
  %vm3033 = vweird.f32 %v140
  %v3034 = vadd.s32 %v3030, 3
  %v3035 = vand.u32 %v3034, 3
  %vm3036 = vcmp.lt.s32.totalorder %v3035, 2
  %vm3037 = vcmp.eq.s32.totalorder %v3035, 0
  %v3038 = vxor.u32 %v3032, 2147483648
  %v3039 = vsel %vm3037, %v3031, %v3038
  %vm3040 = vcmp.eq.s32.totalorder %v3035, 2
  %v3041 = vxor.u32 %v3031, 2147483648
  %v3042 = vsel %vm3040, %v3041, %v3032
  %v3043 = vsel %vm3036, %v3039, %v3042
  %v3044 = vsel %vm3033, nan, %v3043
  %v3045 = vand.u32 2147483647, %v141
  %vm3046 = vcmp.le.f32.partialorder %v3045, 0.7853982
  %vm3047 = vcmp.lt.s32.totalorder %v141, 0
  %v3048 = vand.u32 %v141, 2139095040
  %v3049 = vshrl.u32 %v3048, 23
  %v3050 = vsub.s32 %v3049, 127
  %v3051 = vand.u32 2147483647, %v141
  %v3052 = vand.u32 %v3051, 8388607
  %v3053 = vor.u32 %v3052, 8388608
  %v3054 = vsub.s32 0, %v3053
  %v3055 = vadd.s32 %v3050, 1
  %vm3056 = vcmp.gt.s32.totalorder %v3055, 0
  %v3057 = vsel %vm3056, %v3055, 0
  %v3058 = vshrl.u32 %v3057, 5
  %v3059 = vand.u32 %v3057, 31
  %v3060 = vsub.s32 32, %v3059
  %v3061 = vshrl.u32 683565275, %v3060
  %v3062 = vshll.u32 683565275, %v3059
  %v3063 = vshrl.u32 2475754826, %v3060
  %v3064 = vor.u32 %v3062, %v3063
  %v3065 = vshll.u32 2475754826, %v3059
  %v3066 = vshrl.u32 2131351028, %v3060
  %v3067 = vor.u32 %v3065, %v3066
  %v3068 = vshll.u32 2131351028, %v3059
  %v3069 = vshrl.u32 2102212464, %v3060
  %v3070 = vor.u32 %v3068, %v3069
  %v3071 = vshll.u32 2102212464, %v3059
  %v3072 = vshrl.u32 920167782, %v3060
  %v3073 = vor.u32 %v3071, %v3072
  %v3074 = vshll.u32 920167782, %v3059
  %v3075 = vshrl.u32 1326507024, %v3060
  %v3076 = vor.u32 %v3074, %v3075
  %vm3077 = vcmp.lt.s32.totalorder %v3058, 1
  %vm3078 = vcmp.lt.s32.totalorder %v3058, 2
  %vm3079 = vcmp.lt.s32.totalorder %v3058, 3
  %vm3080 = vcmp.lt.s32.totalorder %v3058, 4
  %v3081 = vsel %vm3077, %v3061, %v3064
  %v3082 = vsel %vm3080, %v3070, 2102212464
  %v3083 = vsel %vm3079, %v3067, %v3082
  %v3084 = vsel %vm3078, %v3081, %v3083
  %v3085 = vsel %vm3077, %v3064, %v3067
  %v3086 = vsel %vm3080, %v3073, 920167782
  %v3087 = vsel %vm3079, %v3070, %v3086
  %v3088 = vsel %vm3078, %v3085, %v3087
  %v3089 = vsel %vm3077, %v3067, %v3070
  %v3090 = vsel %vm3080, %v3076, 1326507024
  %v3091 = vsel %vm3079, %v3073, %v3090
  %v3092 = vsel %vm3078, %v3089, %v3091
  %v3093 = vshll.u32 %v3053, 8
  %v3094 = vmul.u32.u64.compose %v3093, %v3092
  %v3095 = vextract.low.u32 %v3094
  %v3096 = vextract.high.u32 %v3094
  %v3097 = vmul.u32.u64.compose %v3093, %v3088
  %v3098 = vextract.low.u32 %v3097
  %v3099 = vextract.high.u32 %v3097
  %v3100 = vmul.u32 %v3093, %v3084
  %v3101 = vadd.s32 %v3096, %v3098
  %vm3102 = vc.u32 %v3096, %v3098
  %v3103 = vadd.s32 %v3099, 1
  %v3104 = vsel %vm3102, %v3103, %v3099
  %v3105 = vadd.s32 %v3100, %v3104
  %v3106 = vadd.s32 %v3105, 536870912
  %v3107 = vshrl.u32 %v3106, 30
  %v3108 = vshll.u32 %v3107, 30
  %v3109 = vsub.s32 %v3105, %v3108
  %vm3110 = vcmp.lt.s32.totalorder %v3109, 0
  %v3111 = vsub.s32 0, %v3109
  %v3112 = vsel %vm3110, %v3111, %v3109
  %v3113 = vclz %v3112
  %v3114 = vsub.s32 %v3113, 2
  %vm3115 = vcmp.gt.s32.totalorder 0, %v3114
  %v3116 = vsel %vm3115, 0, %v3114
  %v3117 = vsub.s32 32, %v3116
  %v3118 = vshll.u32 %v3109, %v3116
  %v3119 = vshrl.u32 %v3101, %v3117
  %v3120 = vor.u32 %v3118, %v3119
  %v3121 = vsub.s32 4294967266, %v3116
  %v3122 = vadd.s32 %v3121, 127
  %v3123 = vshll.u32 %v3122, 23
  %v3124 = vor.u32 4788187, %v3123
  %v3125 = vand.u32 2147483647, %v3124
  %v3127 = vcvt.s32.f32 %v3120
  %v3128 = vmul.f32 %v3127, %v3125
  %v3129 = vxor.u32 %v3128, 2147483648
  %v3130 = vsel %vm3047, %v3129, %v3128
  %v3131 = vsub.s32 4, %v3107
  %v3132 = vsel %vm3047, %v3131, %v3107
  %v3133 = vsel %vm3046, %v141, %v3130
  %v3134 = vsel %vm3046, 0, %v3132
  %v3135 = vcosq.f32.pop %v3133
  %v3136 = vsinq.f32.pop %v3133
  %vm3137 = vweird.f32 %v141
  %v3138 = vadd.s32 %v3134, 3
  %v3139 = vand.u32 %v3138, 3
  %vm3140 = vcmp.lt.s32.totalorder %v3139, 2
  %vm3141 = vcmp.eq.s32.totalorder %v3139, 0
  %v3142 = vxor.u32 %v3136, 2147483648
  %v3143 = vsel %vm3141, %v3135, %v3142
  %vm3144 = vcmp.eq.s32.totalorder %v3139, 2
  %v3145 = vxor.u32 %v3135, 2147483648
  %v3146 = vsel %vm3144, %v3145, %v3136
  %v3147 = vsel %vm3140, %v3143, %v3146
  %v3148 = vsel %vm3137, nan, %v3147
  %v3149 = vand.u32 2147483647, %v142
  %vm3150 = vcmp.le.f32.partialorder %v3149, 0.7853982
  %vm3151 = vcmp.lt.s32.totalorder %v142, 0
  %v3152 = vand.u32 %v142, 2139095040
  %v3153 = vshrl.u32 %v3152, 23
  %v3154 = vsub.s32 %v3153, 127
  %v3155 = vand.u32 2147483647, %v142
  %v3156 = vand.u32 %v3155, 8388607
  %v3157 = vor.u32 %v3156, 8388608
  %v3158 = vsub.s32 0, %v3157
  %v3159 = vadd.s32 %v3154, 1
  %vm3160 = vcmp.gt.s32.totalorder %v3159, 0
  %v3161 = vsel %vm3160, %v3159, 0
  %v3162 = vshrl.u32 %v3161, 5
  %v3163 = vand.u32 %v3161, 31
  %v3164 = vsub.s32 32, %v3163
  %v3165 = vshrl.u32 683565275, %v3164
  %v3166 = vshll.u32 683565275, %v3163
  %v3167 = vshrl.u32 2475754826, %v3164
  %v3168 = vor.u32 %v3166, %v3167
  %v3169 = vshll.u32 2475754826, %v3163
  %v3170 = vshrl.u32 2131351028, %v3164
  %v3171 = vor.u32 %v3169, %v3170
  %v3172 = vshll.u32 2131351028, %v3163
  %v3173 = vshrl.u32 2102212464, %v3164
  %v3174 = vor.u32 %v3172, %v3173
  %v3175 = vshll.u32 2102212464, %v3163
  %v3176 = vshrl.u32 920167782, %v3164
  %v3177 = vor.u32 %v3175, %v3176
  %v3178 = vshll.u32 920167782, %v3163
  %v3179 = vshrl.u32 1326507024, %v3164
  %v3180 = vor.u32 %v3178, %v3179
  %vm3181 = vcmp.lt.s32.totalorder %v3162, 1
  %vm3182 = vcmp.lt.s32.totalorder %v3162, 2
  %vm3183 = vcmp.lt.s32.totalorder %v3162, 3
  %vm3184 = vcmp.lt.s32.totalorder %v3162, 4
  %v3185 = vsel %vm3181, %v3165, %v3168
  %v3186 = vsel %vm3184, %v3174, 2102212464
  %v3187 = vsel %vm3183, %v3171, %v3186
  %v3188 = vsel %vm3182, %v3185, %v3187
  %v3189 = vsel %vm3181, %v3168, %v3171
  %v3190 = vsel %vm3184, %v3177, 920167782
  %v3191 = vsel %vm3183, %v3174, %v3190
  %v3192 = vsel %vm3182, %v3189, %v3191
  %v3193 = vsel %vm3181, %v3171, %v3174
  %v3194 = vsel %vm3184, %v3180, 1326507024
  %v3195 = vsel %vm3183, %v3177, %v3194
  %v3196 = vsel %vm3182, %v3193, %v3195
  %v3197 = vshll.u32 %v3157, 8
  %v3198 = vmul.u32.u64.compose %v3197, %v3196
  %v3199 = vextract.low.u32 %v3198
  %v3200 = vextract.high.u32 %v3198
  %v3201 = vmul.u32.u64.compose %v3197, %v3192
  %v3202 = vextract.low.u32 %v3201
  %v3203 = vextract.high.u32 %v3201
  %v3204 = vmul.u32 %v3197, %v3188
  %v3205 = vadd.s32 %v3200, %v3202
  %vm3206 = vc.u32 %v3200, %v3202
  %v3207 = vadd.s32 %v3203, 1
  %v3208 = vsel %vm3206, %v3207, %v3203
  %v3209 = vadd.s32 %v3204, %v3208
  %v3210 = vadd.s32 %v3209, 536870912
  %v3211 = vshrl.u32 %v3210, 30
  %v3212 = vshll.u32 %v3211, 30
  %v3213 = vsub.s32 %v3209, %v3212
  %vm3214 = vcmp.lt.s32.totalorder %v3213, 0
  %v3215 = vsub.s32 0, %v3213
  %v3216 = vsel %vm3214, %v3215, %v3213
  %v3217 = vclz %v3216
  %v3218 = vsub.s32 %v3217, 2
  %vm3219 = vcmp.gt.s32.totalorder 0, %v3218
  %v3220 = vsel %vm3219, 0, %v3218
  %v3221 = vsub.s32 32, %v3220
  %v3222 = vshll.u32 %v3213, %v3220
  %v3223 = vshrl.u32 %v3205, %v3221
  %v3224 = vor.u32 %v3222, %v3223
  %v3225 = vsub.s32 4294967266, %v3220
  %v3226 = vadd.s32 %v3225, 127
  %v3227 = vshll.u32 %v3226, 23
  %v3228 = vor.u32 4788187, %v3227
  %v3229 = vand.u32 2147483647, %v3228
  %v3231 = vcvt.s32.f32 %v3224
  %v3232 = vmul.f32 %v3231, %v3229
  %v3233 = vxor.u32 %v3232, 2147483648
  %v3234 = vsel %vm3151, %v3233, %v3232
  %v3235 = vsub.s32 4, %v3211
  %v3236 = vsel %vm3151, %v3235, %v3211
  %v3237 = vsel %vm3150, %v142, %v3234
  %v3238 = vsel %vm3150, 0, %v3236
  %v3239 = vcosq.f32.pop %v3237
  %v3240 = vsinq.f32.pop %v3237
  %vm3241 = vweird.f32 %v142
  %v3242 = vadd.s32 %v3238, 3
  %v3243 = vand.u32 %v3242, 3
  %vm3244 = vcmp.lt.s32.totalorder %v3243, 2
  %vm3245 = vcmp.eq.s32.totalorder %v3243, 0
  %v3246 = vxor.u32 %v3240, 2147483648
  %v3247 = vsel %vm3245, %v3239, %v3246
  %vm3248 = vcmp.eq.s32.totalorder %v3243, 2
  %v3249 = vxor.u32 %v3239, 2147483648
  %v3250 = vsel %vm3248, %v3249, %v3240
  %v3251 = vsel %vm3244, %v3247, %v3250
  %v3252 = vsel %vm3241, nan, %v3251
  %v3253 = vand.u32 2147483647, %v143
  %vm3254 = vcmp.le.f32.partialorder %v3253, 0.7853982
  %vm3255 = vcmp.lt.s32.totalorder %v143, 0
  %v3256 = vand.u32 %v143, 2139095040
  %v3257 = vshrl.u32 %v3256, 23
  %v3258 = vsub.s32 %v3257, 127
  %v3259 = vand.u32 2147483647, %v143
  %v3260 = vand.u32 %v3259, 8388607
  %v3261 = vor.u32 %v3260, 8388608
  %v3262 = vsub.s32 0, %v3261
  %v3263 = vadd.s32 %v3258, 1
  %vm3264 = vcmp.gt.s32.totalorder %v3263, 0
  %v3265 = vsel %vm3264, %v3263, 0
  %v3266 = vshrl.u32 %v3265, 5
  %v3267 = vand.u32 %v3265, 31
  %v3268 = vsub.s32 32, %v3267
  %v3269 = vshrl.u32 683565275, %v3268
  %v3270 = vshll.u32 683565275, %v3267
  %v3271 = vshrl.u32 2475754826, %v3268
  %v3272 = vor.u32 %v3270, %v3271
  %v3273 = vshll.u32 2475754826, %v3267
  %v3274 = vshrl.u32 2131351028, %v3268
  %v3275 = vor.u32 %v3273, %v3274
  %v3276 = vshll.u32 2131351028, %v3267
  %v3277 = vshrl.u32 2102212464, %v3268
  %v3278 = vor.u32 %v3276, %v3277
  %v3279 = vshll.u32 2102212464, %v3267
  %v3280 = vshrl.u32 920167782, %v3268
  %v3281 = vor.u32 %v3279, %v3280
  %v3282 = vshll.u32 920167782, %v3267
  %v3283 = vshrl.u32 1326507024, %v3268
  %v3284 = vor.u32 %v3282, %v3283
  %vm3285 = vcmp.lt.s32.totalorder %v3266, 1
  %vm3286 = vcmp.lt.s32.totalorder %v3266, 2
  %vm3287 = vcmp.lt.s32.totalorder %v3266, 3
  %vm3288 = vcmp.lt.s32.totalorder %v3266, 4
  %v3289 = vsel %vm3285, %v3269, %v3272
  %v3290 = vsel %vm3288, %v3278, 2102212464
  %v3291 = vsel %vm3287, %v3275, %v3290
  %v3292 = vsel %vm3286, %v3289, %v3291
  %v3293 = vsel %vm3285, %v3272, %v3275
  %v3294 = vsel %vm3288, %v3281, 920167782
  %v3295 = vsel %vm3287, %v3278, %v3294
  %v3296 = vsel %vm3286, %v3293, %v3295
  %v3297 = vsel %vm3285, %v3275, %v3278
  %v3298 = vsel %vm3288, %v3284, 1326507024
  %v3299 = vsel %vm3287, %v3281, %v3298
  %v3300 = vsel %vm3286, %v3297, %v3299
  %v3301 = vshll.u32 %v3261, 8
  %v3302 = vmul.u32.u64.compose %v3301, %v3300
  %v3303 = vextract.low.u32 %v3302
  %v3304 = vextract.high.u32 %v3302
  %v3305 = vmul.u32.u64.compose %v3301, %v3296
  %v3306 = vextract.low.u32 %v3305
  %v3307 = vextract.high.u32 %v3305
  %v3308 = vmul.u32 %v3301, %v3292
  %v3309 = vadd.s32 %v3304, %v3306
  %vm3310 = vc.u32 %v3304, %v3306
  %v3311 = vadd.s32 %v3307, 1
  %v3312 = vsel %vm3310, %v3311, %v3307
  %v3313 = vadd.s32 %v3308, %v3312
  %v3314 = vadd.s32 %v3313, 536870912
  %v3315 = vshrl.u32 %v3314, 30
  %v3316 = vshll.u32 %v3315, 30
  %v3317 = vsub.s32 %v3313, %v3316
  %vm3318 = vcmp.lt.s32.totalorder %v3317, 0
  %v3319 = vsub.s32 0, %v3317
  %v3320 = vsel %vm3318, %v3319, %v3317
  %v3321 = vclz %v3320
  %v3322 = vsub.s32 %v3321, 2
  %vm3323 = vcmp.gt.s32.totalorder 0, %v3322
  %v3324 = vsel %vm3323, 0, %v3322
  %v3325 = vsub.s32 32, %v3324
  %v3326 = vshll.u32 %v3317, %v3324
  %v3327 = vshrl.u32 %v3309, %v3325
  %v3328 = vor.u32 %v3326, %v3327
  %v3329 = vsub.s32 4294967266, %v3324
  %v3330 = vadd.s32 %v3329, 127
  %v3331 = vshll.u32 %v3330, 23
  %v3332 = vor.u32 4788187, %v3331
  %v3333 = vand.u32 2147483647, %v3332
  %v3335 = vcvt.s32.f32 %v3328
  %v3336 = vmul.f32 %v3335, %v3333
  %v3337 = vxor.u32 %v3336, 2147483648
  %v3338 = vsel %vm3255, %v3337, %v3336
  %v3339 = vsub.s32 4, %v3315
  %v3340 = vsel %vm3255, %v3339, %v3315
  %v3341 = vsel %vm3254, %v143, %v3338
  %v3342 = vsel %vm3254, 0, %v3340
  %v3343 = vcosq.f32.pop %v3341
  %v3344 = vsinq.f32.pop %v3341
  %vm3345 = vweird.f32 %v143
  %v3346 = vadd.s32 %v3342, 3
  %v3347 = vand.u32 %v3346, 3
  %vm3348 = vcmp.lt.s32.totalorder %v3347, 2
  %vm3349 = vcmp.eq.s32.totalorder %v3347, 0
  %v3350 = vxor.u32 %v3344, 2147483648
  %v3351 = vsel %vm3349, %v3343, %v3350
  %vm3352 = vcmp.eq.s32.totalorder %v3347, 2
  %v3353 = vxor.u32 %v3343, 2147483648
  %v3354 = vsel %vm3352, %v3353, %v3344
  %v3355 = vsel %vm3348, %v3351, %v3354
  %v3356 = vsel %vm3345, nan, %v3355
  %v3357 = vand.u32 2147483647, %v144
  %vm3358 = vcmp.le.f32.partialorder %v3357, 0.7853982
  %vm3359 = vcmp.lt.s32.totalorder %v144, 0
  %v3360 = vand.u32 %v144, 2139095040
  %v3361 = vshrl.u32 %v3360, 23
  %v3362 = vsub.s32 %v3361, 127
  %v3363 = vand.u32 2147483647, %v144
  %v3364 = vand.u32 %v3363, 8388607
  %v3365 = vor.u32 %v3364, 8388608
  %v3366 = vsub.s32 0, %v3365
  %v3367 = vadd.s32 %v3362, 1
  %vm3368 = vcmp.gt.s32.totalorder %v3367, 0
  %v3369 = vsel %vm3368, %v3367, 0
  %v3370 = vshrl.u32 %v3369, 5
  %v3371 = vand.u32 %v3369, 31
  %v3372 = vsub.s32 32, %v3371
  %v3373 = vshrl.u32 683565275, %v3372
  %v3374 = vshll.u32 683565275, %v3371
  %v3375 = vshrl.u32 2475754826, %v3372
  %v3376 = vor.u32 %v3374, %v3375
  %v3377 = vshll.u32 2475754826, %v3371
  %v3378 = vshrl.u32 2131351028, %v3372
  %v3379 = vor.u32 %v3377, %v3378
  %v3380 = vshll.u32 2131351028, %v3371
  %v3381 = vshrl.u32 2102212464, %v3372
  %v3382 = vor.u32 %v3380, %v3381
  %v3383 = vshll.u32 2102212464, %v3371
  %v3384 = vshrl.u32 920167782, %v3372
  %v3385 = vor.u32 %v3383, %v3384
  %v3386 = vshll.u32 920167782, %v3371
  %v3387 = vshrl.u32 1326507024, %v3372
  %v3388 = vor.u32 %v3386, %v3387
  %vm3389 = vcmp.lt.s32.totalorder %v3370, 1
  %vm3390 = vcmp.lt.s32.totalorder %v3370, 2
  %vm3391 = vcmp.lt.s32.totalorder %v3370, 3
  %vm3392 = vcmp.lt.s32.totalorder %v3370, 4
  %v3393 = vsel %vm3389, %v3373, %v3376
  %v3394 = vsel %vm3392, %v3382, 2102212464
  %v3395 = vsel %vm3391, %v3379, %v3394
  %v3396 = vsel %vm3390, %v3393, %v3395
  %v3397 = vsel %vm3389, %v3376, %v3379
  %v3398 = vsel %vm3392, %v3385, 920167782
  %v3399 = vsel %vm3391, %v3382, %v3398
  %v3400 = vsel %vm3390, %v3397, %v3399
  %v3401 = vsel %vm3389, %v3379, %v3382
  %v3402 = vsel %vm3392, %v3388, 1326507024
  %v3403 = vsel %vm3391, %v3385, %v3402
  %v3404 = vsel %vm3390, %v3401, %v3403
  %v3405 = vshll.u32 %v3365, 8
  %v3406 = vmul.u32.u64.compose %v3405, %v3404
  %v3407 = vextract.low.u32 %v3406
  %v3408 = vextract.high.u32 %v3406
  %v3409 = vmul.u32.u64.compose %v3405, %v3400
  %v3410 = vextract.low.u32 %v3409
  %v3411 = vextract.high.u32 %v3409
  %v3412 = vmul.u32 %v3405, %v3396
  %v3413 = vadd.s32 %v3408, %v3410
  %vm3414 = vc.u32 %v3408, %v3410
  %v3415 = vadd.s32 %v3411, 1
  %v3416 = vsel %vm3414, %v3415, %v3411
  %v3417 = vadd.s32 %v3412, %v3416
  %v3418 = vadd.s32 %v3417, 536870912
  %v3419 = vshrl.u32 %v3418, 30
  %v3420 = vshll.u32 %v3419, 30
  %v3421 = vsub.s32 %v3417, %v3420
  %vm3422 = vcmp.lt.s32.totalorder %v3421, 0
  %v3423 = vsub.s32 0, %v3421
  %v3424 = vsel %vm3422, %v3423, %v3421
  %v3425 = vclz %v3424
  %v3426 = vsub.s32 %v3425, 2
  %vm3427 = vcmp.gt.s32.totalorder 0, %v3426
  %v3428 = vsel %vm3427, 0, %v3426
  %v3429 = vsub.s32 32, %v3428
  %v3430 = vshll.u32 %v3421, %v3428
  %v3431 = vshrl.u32 %v3413, %v3429
  %v3432 = vor.u32 %v3430, %v3431
  %v3433 = vsub.s32 4294967266, %v3428
  %v3434 = vadd.s32 %v3433, 127
  %v3435 = vshll.u32 %v3434, 23
  %v3436 = vor.u32 4788187, %v3435
  %v3437 = vand.u32 2147483647, %v3436
  %v3439 = vcvt.s32.f32 %v3432
  %v3440 = vmul.f32 %v3439, %v3437
  %v3441 = vxor.u32 %v3440, 2147483648
  %v3442 = vsel %vm3359, %v3441, %v3440
  %v3443 = vsub.s32 4, %v3419
  %v3444 = vsel %vm3359, %v3443, %v3419
  %v3445 = vsel %vm3358, %v144, %v3442
  %v3446 = vsel %vm3358, 0, %v3444
  %v3447 = vcosq.f32.pop %v3445
  %v3448 = vsinq.f32.pop %v3445
  %vm3449 = vweird.f32 %v144
  %v3450 = vadd.s32 %v3446, 3
  %v3451 = vand.u32 %v3450, 3
  %vm3452 = vcmp.lt.s32.totalorder %v3451, 2
  %vm3453 = vcmp.eq.s32.totalorder %v3451, 0
  %v3454 = vxor.u32 %v3448, 2147483648
  %v3455 = vsel %vm3453, %v3447, %v3454
  %vm3456 = vcmp.eq.s32.totalorder %v3451, 2
  %v3457 = vxor.u32 %v3447, 2147483648
  %v3458 = vsel %vm3456, %v3457, %v3448
  %v3459 = vsel %vm3452, %v3455, %v3458
  %v3460 = vsel %vm3449, nan, %v3459
  %v3461 = vld [vmem:[%s3] sm:$0xff]
  %v3462 = vld [vmem:[%s3 + $0x8] sm:$0xff]
  %v3463 = vld [vmem:[%s3 + $0x10] sm:$0xff]
  %v3464 = vld [vmem:[%s3 + $0x18] sm:$0xff]
  %3465 = vmatprep.subr.mxu0 0.0
  %3466 = vmatpush1.msra.mxu0 %v1900
  %3467 = vmatprep.subr.mxu0 0.0
  %3468 = vmatpush1.msra.mxu0 %v2004
  %3469 = vmatprep.subr.mxu0 0.0
  %3470 = vmatpush1.msra.mxu0 %v2108
  %3471 = vmatprep.subr.mxu0 0.0
  %3472 = vmatpush1.msra.mxu0 %v2212
  %3473 = vmatprep.subr.mxu0 0.0
  %3474 = vmatpush1.msra.mxu0 %v2316
  %3475 = vmatprep.subr.mxu0 0.0
  %3476 = vmatpush1.msra.mxu0 %v2420
  %3477 = vmatprep.subr.mxu0 0.0
  %3478 = vmatpush1.msra.mxu0 %v2524
  %3479 = vmatprep.subr.mxu0 0.0
  %3480 = vmatpush1.msra.mxu0 %v2628
  %3481 = vmatprep.subr.mxu0 0.0
  %3482 = vmatpush1.msra.mxu0 %v2732
  %3483 = vmatprep.subr.mxu0 0.0
  %3484 = vmatpush1.msra.mxu0 %v2836
  %3485 = vmatprep.subr.mxu0 0.0
  %3486 = vmatpush1.msra.mxu0 %v2940
  %3487 = vmatprep.subr.mxu0 0.0
  %3488 = vmatpush1.msra.mxu0 %v3044
  %3489 = vmatprep.subr.mxu0 0.0
  %3490 = vmatpush1.msra.mxu0 %v3148
  %3491 = vmatprep.subr.mxu0 0.0
  %3492 = vmatpush1.msra.mxu0 %v3252
  %3493 = vmatprep.subr.mxu0 0.0
  %3494 = vmatpush1.msra.mxu0 %v3356
  %3495 = vmatprep.subr.mxu0 0.0
  %3496 = vmatpush1.msra.mxu0 %v3460
  %3497 = vmatprep.subr.mxu0 0.0
  %3498 = vmatpush1.msra.mxu0 0.0
  %3499 = vmatprep.subr.mxu0 0.0
  %3500 = vmatpush1.msra.mxu0 0.0
  %3501 = vmatprep.subr.mxu0 0.0
  %3502 = vmatpush1.msra.mxu0 0.0
  %3503 = vmatprep.subr.mxu0 0.0
  %3504 = vmatpush1.msra.mxu0 0.0
  %3505 = vmatprep.subr.mxu0 0.0
  %3506 = vmatpush1.msra.mxu0 0.0
  %3507 = vmatprep.subr.mxu0 0.0
  %3508 = vmatpush1.msra.mxu0 0.0
  %3509 = vmatprep.subr.mxu0 0.0
  %3510 = vmatpush1.msra.mxu0 0.0
  %3511 = vmatprep.subr.mxu0 0.0
  %3512 = vmatpush1.msra.mxu0 0.0
  %3513 = vmatprep.subr.mxu0 0.0
  %3514 = vmatpush1.msra.mxu0 0.0
  %3515 = vmatprep.subr.mxu0 0.0
  %3516 = vmatpush1.msra.mxu0 0.0
  %3517 = vmatprep.subr.mxu0 0.0
  %3518 = vmatpush1.msra.mxu0 0.0
  %3519 = vmatprep.subr.mxu0 0.0
  %3520 = vmatpush1.msra.mxu0 0.0
  %3521 = vmatprep.subr.mxu0 0.0
  %3522 = vmatpush1.msra.mxu0 0.0
  %3523 = vmatprep.subr.mxu0 0.0
  %3524 = vmatpush1.msra.mxu0 0.0
  %3525 = vmatprep.subr.mxu0 0.0
  %3526 = vmatpush1.msra.mxu0 0.0
  %3527 = vmatprep.subr.mxu0 0.0
  %3528 = vmatpush1.msra.mxu0 0.0
  %3529 = vmatprep.mubr.f32.mxu0 0.0
  %3530 = vmatmul.mubr.f32.gmra.mrb[0].mxu0 %v3461
  %v3531 = vpop.f32.mrb[0].mxu0
  %v3532 = vadd.f32 0.0, %v3531
  %v3533 = vpop.f32.mrb[0].mxu0
  %3534 = vmatprep.mubr.f32.mxu0 0.0
  %3535 = vmatmul.mubr.f32.gmra.mrb[0].mxu0 %v3462
  %v3536 = vpop.f32.mrb[0].mxu0
  %v3537 = vadd.f32 0.0, %v3536
  %v3538 = vpop.f32.mrb[0].mxu0
  %3539 = vmatprep.mubr.f32.mxu0 0.0
  %3540 = vmatmul.mubr.f32.gmra.mrb[0].mxu0 %v3463
  %v3541 = vpop.f32.mrb[0].mxu0
  %v3542 = vadd.f32 0.0, %v3541
  %v3543 = vpop.f32.mrb[0].mxu0
  %3544 = vmatprep.mubr.f32.mxu0 0.0
  %3545 = vmatmul.mubr.f32.gmra.mrb[0].mxu0 %v3464
  %v3546 = vpop.f32.mrb[0].mxu0
  %v3547 = vadd.f32 0.0, %v3546
  %v3548 = vpop.f32.mrb[0].mxu0
  %3549 = vdwg.mxu0
  %3550 = vmatprep.subr.mxu0 0.0
  %3551 = vmatpush1.msra.mxu0 %v247
  %3552 = vmatprep.subr.mxu0 0.0
  %3553 = vmatpush1.msra.mxu0 %v350
  %3554 = vmatprep.subr.mxu0 0.0
  %3555 = vmatpush1.msra.mxu0 %v453
  %3556 = vmatprep.subr.mxu0 0.0
  %3557 = vmatpush1.msra.mxu0 %v556
  %3558 = vmatprep.subr.mxu0 0.0
  %3559 = vmatpush1.msra.mxu0 %v659
  %3560 = vmatprep.subr.mxu0 0.0
  %3561 = vmatpush1.msra.mxu0 %v762
  %3562 = vmatprep.subr.mxu0 0.0
  %3563 = vmatpush1.msra.mxu0 %v865
  %3564 = vmatprep.subr.mxu0 0.0
  %3565 = vmatpush1.msra.mxu0 %v968
  %3566 = vmatprep.subr.mxu0 0.0
  %3567 = vmatpush1.msra.mxu0 %v1071
  %3568 = vmatprep.subr.mxu0 0.0
  %3569 = vmatpush1.msra.mxu0 %v1174
  %3570 = vmatprep.subr.mxu0 0.0
  %3571 = vmatpush1.msra.mxu0 %v1277
  %3572 = vmatprep.subr.mxu0 0.0
  %3573 = vmatpush1.msra.mxu0 %v1380
  %3574 = vmatprep.subr.mxu0 0.0
  %3575 = vmatpush1.msra.mxu0 %v1483
  %3576 = vmatprep.subr.mxu0 0.0
  %3577 = vmatpush1.msra.mxu0 %v1586
  %3578 = vmatprep.subr.mxu0 0.0
  %3579 = vmatpush1.msra.mxu0 %v1689
  %3580 = vmatprep.subr.mxu0 0.0
  %3581 = vmatpush1.msra.mxu0 %v1792
  %3582 = vmatprep.subr.mxu0 0.0
  %3583 = vmatpush1.msra.mxu0 0.0
  %3584 = vmatprep.subr.mxu0 0.0
  %3585 = vmatpush1.msra.mxu0 0.0
  %3586 = vmatprep.subr.mxu0 0.0
  %3587 = vmatpush1.msra.mxu0 0.0
  %3588 = vmatprep.subr.mxu0 0.0
  %3589 = vmatpush1.msra.mxu0 0.0
  %3590 = vmatprep.subr.mxu0 0.0
  %3591 = vmatpush1.msra.mxu0 0.0
  %3592 = vmatprep.subr.mxu0 0.0
  %3593 = vmatpush1.msra.mxu0 0.0
  %3594 = vmatprep.subr.mxu0 0.0
  %3595 = vmatpush1.msra.mxu0 0.0
  %3596 = vmatprep.subr.mxu0 0.0
  %3597 = vmatpush1.msra.mxu0 0.0
  %3598 = vmatprep.subr.mxu0 0.0
  %3599 = vmatpush1.msra.mxu0 0.0
  %3600 = vmatprep.subr.mxu0 0.0
  %3601 = vmatpush1.msra.mxu0 0.0
  %3602 = vmatprep.subr.mxu0 0.0
  %3603 = vmatpush1.msra.mxu0 0.0
  %3604 = vmatprep.subr.mxu0 0.0
  %3605 = vmatpush1.msra.mxu0 0.0
  %3606 = vmatprep.subr.mxu0 0.0
  %3607 = vmatpush1.msra.mxu0 0.0
  %3608 = vmatprep.subr.mxu0 0.0
  %3609 = vmatpush1.msra.mxu0 0.0
  %3610 = vmatprep.subr.mxu0 0.0
  %3611 = vmatpush1.msra.mxu0 0.0
  %3612 = vmatprep.subr.mxu0 0.0
  %3613 = vmatpush1.msra.mxu0 0.0
  %3614 = vmatprep.mubr.f32.mxu0 0.0
  %3615 = vmatmul.mubr.f32.gmra.mrb[0].mxu0 %v1793
  %v3616 = vpop.f32.mrb[0].mxu0
  %v3617 = vadd.f32 %v3532, %v3616
  %v3618 = vpop.f32.mrb[0].mxu0
  %3619 = vmatprep.mubr.f32.mxu0 0.0
  %3620 = vmatmul.mubr.f32.gmra.mrb[0].mxu0 %v1794
  %v3621 = vpop.f32.mrb[0].mxu0
  %v3622 = vadd.f32 %v3537, %v3621
  %v3623 = vpop.f32.mrb[0].mxu0
  %3624 = vmatprep.mubr.f32.mxu0 0.0
  %3625 = vmatmul.mubr.f32.gmra.mrb[0].mxu0 %v1795
  %v3626 = vpop.f32.mrb[0].mxu0
  %v3627 = vadd.f32 %v3542, %v3626
  %v3628 = vpop.f32.mrb[0].mxu0
  %3629 = vmatprep.mubr.f32.mxu0 0.0
  %3630 = vmatmul.mubr.f32.gmra.mrb[0].mxu0 %v1796
  %v3631 = vpop.f32.mrb[0].mxu0
  %v3632 = vadd.f32 %v3547, %v3631
  %v3633 = vpop.f32.mrb[0].mxu0
  %3634 = vdwg.mxu0
  %v3635 = vld [vmem:[%s4] sm:$0xff]
  %v3636 = vld [vmem:[%s4 + $0x8] sm:$0xff]
  %v3637 = vld [vmem:[%s4 + $0x10] sm:$0xff]
  %v3638 = vld [vmem:[%s4 + $0x18] sm:$0xff]
  %3640 = vset.pattern.permute.xlu0 0
  %3641 = vperm.xlu0 %3640, %v3635
  %v3642 = vpop.permute.xlu0 %3641
  %3645 = vset.pattern.permute.xlu0 0
  %3646 = vperm.xlu0 %3645, %v3636
  %v3647 = vpop.permute.xlu0 %3646
  %3650 = vset.pattern.permute.xlu0 0
  %3651 = vperm.xlu0 %3650, %v3637
  %v3652 = vpop.permute.xlu0 %3651
  %3655 = vset.pattern.permute.xlu0 0
  %3656 = vperm.xlu0 %3655, %v3638
  %v3657 = vpop.permute.xlu0 %3656
  %v3659 = vadd.f32 %v3617, %v3642
  %v3660 = vadd.f32 %v3622, %v3647
  %v3661 = vadd.f32 %v3627, %v3652
  %v3662 = vadd.f32 %v3632, %v3657
  %v3663 = vxor.u32 %v3659, 2147483648
  %v3664 = vxor.u32 %v3660, 2147483648
  %v3665 = vxor.u32 %v3661, 2147483648
  %v3666 = vxor.u32 %v3662, 2147483648
  %v3667 = vmul.f32 %v3663, 1.442695
  %v3668 = vpow.pop %v3667
  %v3669 = vmul.f32 %v3664, 1.442695
  %v3670 = vpow.pop %v3669
  %v3671 = vmul.f32 %v3665, 1.442695
  %v3672 = vpow.pop %v3671
  %v3673 = vmul.f32 %v3666, 1.442695
  %v3674 = vpow.pop %v3673
  %v3675 = vadd.f32 %v3668, 1.0
  %v3676 = vadd.f32 %v3670, 1.0
  %v3677 = vadd.f32 %v3672, 1.0
  %v3678 = vadd.f32 %v3674, 1.0
  %v3679 = vrcp.pop %v3675
  %v3680 = vmul.f32 1.0, %v3679
  %v3681 = vrcp.pop %v3676
  %v3682 = vmul.f32 1.0, %v3681
  %v3683 = vrcp.pop %v3677
  %v3684 = vmul.f32 1.0, %v3683
  %v3685 = vrcp.pop %v3678
  %v3686 = vmul.f32 1.0, %v3685
  %v3687 = vmul.f32 %v3659, %v3680
  %v3688 = vmul.f32 %v3660, %v3682
  %v3689 = vmul.f32 %v3661, %v3684
  %v3690 = vmul.f32 %v3662, %v3686
  %v3691 = vld [vmem:[%s5] sm:$0xff]
  %v3692 = vld [vmem:[%s5 + $0x8] sm:$0xff]
  %v3693 = vld [vmem:[%s5 + $0x10] sm:$0xff]
  %v3694 = vld [vmem:[%s5 + $0x18] sm:$0xff]
  %v3695 = vld [vmem:[%s6] sm:$0xff]
  %v3696 = vld [vmem:[%s6 + $0x8] sm:$0xff]
  %v3697 = vld [vmem:[%s6 + $0x10] sm:$0xff]
  %v3698 = vld [vmem:[%s6 + $0x18] sm:$0xff]
  %3700 = vset.pattern.permute.xlu0 0
  %3701 = vperm.xlu0 %3700, %v3695
  %v3702 = vpop.permute.xlu0 %3701
  %3705 = vset.pattern.permute.xlu0 0
  %3706 = vperm.xlu0 %3705, %v3696
  %v3707 = vpop.permute.xlu0 %3706
  %3710 = vset.pattern.permute.xlu0 0
  %3711 = vperm.xlu0 %3710, %v3697
  %v3712 = vpop.permute.xlu0 %3711
  %3715 = vset.pattern.permute.xlu0 0
  %3716 = vperm.xlu0 %3715, %v3698
  %v3717 = vpop.permute.xlu0 %3716
  %vm3719 = vcmask 261120
  %v3721 = vsel %vm3719, %v3691, 0
  %v3724 = vsel %vm3719, %v3692, 0
  %v3727 = vsel %vm3719, %v3693, 0
  %v3730 = vsel %vm3719, %v3694, 0
  %3732 = vmatprep.subr.mxu0 0.0
  %3733 = vmatpush1.msra.mxu0 %v3687
  %3734 = vmatprep.subr.mxu0 0.0
  %3735 = vmatpush1.msra.mxu0 %v3688
  %3736 = vmatprep.subr.mxu0 0.0
  %3737 = vmatpush1.msra.mxu0 %v3689
  %3738 = vmatprep.subr.mxu0 0.0
  %3739 = vmatpush1.msra.mxu0 %v3690
  %3740 = vmatprep.subr.mxu0 0.0
  %3741 = vmatpush1.msra.mxu0 0.0
  %3742 = vmatprep.subr.mxu0 0.0
  %3743 = vmatpush1.msra.mxu0 0.0
  %3744 = vmatprep.subr.mxu0 0.0
  %3745 = vmatpush1.msra.mxu0 0.0
  %3746 = vmatprep.subr.mxu0 0.0
  %3747 = vmatpush1.msra.mxu0 0.0
  %3748 = vmatprep.subr.mxu0 0.0
  %3749 = vmatpush1.msra.mxu0 0.0
  %3750 = vmatprep.subr.mxu0 0.0
  %3751 = vmatpush1.msra.mxu0 0.0
  %3752 = vmatprep.subr.mxu0 0.0
  %3753 = vmatpush1.msra.mxu0 0.0
  %3754 = vmatprep.subr.mxu0 0.0
  %3755 = vmatpush1.msra.mxu0 0.0
  %3756 = vmatprep.subr.mxu0 0.0
  %3757 = vmatpush1.msra.mxu0 0.0
  %3758 = vmatprep.subr.mxu0 0.0
  %3759 = vmatpush1.msra.mxu0 0.0
  %3760 = vmatprep.subr.mxu0 0.0
  %3761 = vmatpush1.msra.mxu0 0.0
  %3762 = vmatprep.subr.mxu0 0.0
  %3763 = vmatpush1.msra.mxu0 0.0
  %3764 = vmatprep.subr.mxu0 0.0
  %3765 = vmatpush1.msra.mxu0 0.0
  %3766 = vmatprep.subr.mxu0 0.0
  %3767 = vmatpush1.msra.mxu0 0.0
  %3768 = vmatprep.subr.mxu0 0.0
  %3769 = vmatpush1.msra.mxu0 0.0
  %3770 = vmatprep.subr.mxu0 0.0
  %3771 = vmatpush1.msra.mxu0 0.0
  %3772 = vmatprep.subr.mxu0 0.0
  %3773 = vmatpush1.msra.mxu0 0.0
  %3774 = vmatprep.subr.mxu0 0.0
  %3775 = vmatpush1.msra.mxu0 0.0
  %3776 = vmatprep.subr.mxu0 0.0
  %3777 = vmatpush1.msra.mxu0 0.0
  %3778 = vmatprep.subr.mxu0 0.0
  %3779 = vmatpush1.msra.mxu0 0.0
  %3780 = vmatprep.subr.mxu0 0.0
  %3781 = vmatpush1.msra.mxu0 0.0
  %3782 = vmatprep.subr.mxu0 0.0
  %3783 = vmatpush1.msra.mxu0 0.0
  %3784 = vmatprep.subr.mxu0 0.0
  %3785 = vmatpush1.msra.mxu0 0.0
  %3786 = vmatprep.subr.mxu0 0.0
  %3787 = vmatpush1.msra.mxu0 0.0
  %3788 = vmatprep.subr.mxu0 0.0
  %3789 = vmatpush1.msra.mxu0 0.0
  %3790 = vmatprep.subr.mxu0 0.0
  %3791 = vmatpush1.msra.mxu0 0.0
  %3792 = vmatprep.subr.mxu0 0.0
  %3793 = vmatpush1.msra.mxu0 0.0
  %3794 = vmatprep.subr.mxu0 0.0
  %3795 = vmatpush1.msra.mxu0 0.0
  %3796 = vmatprep.mubr.f32.mxu0 0.0
  %3797 = vmatmul.mubr.f32.gmra.mrb[0].mxu0 %v3721
  %v3798 = vpop.f32.mrb[0].mxu0
  %v3799 = vadd.f32 %v3702, %v3798
  %v3800 = vpop.f32.mrb[0].mxu0
  %3801 = vmatprep.mubr.f32.mxu0 0.0
  %3802 = vmatmul.mubr.f32.gmra.mrb[0].mxu0 %v3724
  %v3803 = vpop.f32.mrb[0].mxu0
  %v3804 = vadd.f32 %v3707, %v3803
  %v3805 = vpop.f32.mrb[0].mxu0
  %3806 = vmatprep.mubr.f32.mxu0 0.0
  %3807 = vmatmul.mubr.f32.gmra.mrb[0].mxu0 %v3727
  %v3808 = vpop.f32.mrb[0].mxu0
  %v3809 = vadd.f32 %v3712, %v3808
  %v3810 = vpop.f32.mrb[0].mxu0
  %3811 = vmatprep.mubr.f32.mxu0 0.0
  %3812 = vmatmul.mubr.f32.gmra.mrb[0].mxu0 %v3730
  %v3813 = vpop.f32.mrb[0].mxu0
  %v3814 = vadd.f32 %v3717, %v3813
  %v3815 = vpop.f32.mrb[0].mxu0
  %3816 = vdwg.mxu0
  %3817 = vst [vmem:[%s7] sm:$0xff] %v3799
  %3818 = vst [vmem:[%s7 + $0x8] sm:$0xff] %v3804
  %3819 = vst [vmem:[%s7 + $0x10] sm:$0xff] %v3809
  %3820 = vst [vmem:[%s7 + $0x18] sm:$0xff] %v3814
  // Predicated region
  $region30: #{timestep_embedder.1} parent=0 // pred_check
    _
  $region31: #{timestep_embedder.1} parent=0 // pred_check_branch
    %3822 = sbr.rel (0) target = $region33
  $region32: #{timestep_embedder.1} parent=0 // pred_region
    _
  $region33: #{timestep_embedder.1} parent=0 // pred_fallthru
    _
  // Predicated region
  $region34: #{timestep_embedder.1} parent=0 // pred_check
    _
  $region35: #{timestep_embedder.1} parent=0 // pred_check_branch
    %3824 = sbr.rel (0) target = $region37
  $region36: #{timestep_embedder.1} parent=0 // pred_region
    _
  $region37: #{timestep_embedder.1} parent=0 // pred_fallthru
    _

</llo_original>
